<compile_context>
chip_gen: v5e
topology: v5e:2x2
jax: 0.10.0
libtpu: 0.0.40
codegen_flags: <defaults>
</compile_context>

<pallas_src>
import numpy as np
import jax
import jax.numpy as jnp
from jax.experimental import pallas as pl
from jax.experimental.pallas import tpu as pltpu


# ----------------------------------------------------------------------------
# Small synthetic hparams (the PyTorch module reads these from a global).
# up_filters[i] == in_channels so residual cells satisfy output_ratio == 1.
# ----------------------------------------------------------------------------
class hparams:
    channels = 4
    input_conv_filters = 16
    input_kernel_size = 3
    up_strides = (2, 2)
    up_n_blocks_per_res = (1, 1)
    up_n_blocks = (2, 2)            # only affects last-conv init scaler
    up_n_layers = (1, 1)
    up_filters = (16, 16)
    up_mid_filters_ratio = (0.5, 0.5)
    up_kernel_size = (3, 3)
    up_skip_filters = (8, 8)
    use_1x1_conv = True


# ----------------------------------------------------------------------------
# Host-side weight packing: every conv becomes matmuls on the (H, W*C) layout.
# ----------------------------------------------------------------------------
def _shift_matrix(H, d):
    """(H, H) left-matmul matrix: out[h] = x[h + d] (zero outside [0, H))."""
    S = np.zeros((H, H), np.float32)
    for h in range(H):
        if 0 <= h + d < H:
            S[h, h + d] = 1.0
    return jnp.asarray(S)


def _pack_conv(w, b, H, W, stride=1):
    """SAME conv (kh,kw,Cin,Cout) -> packed operands for the (H, W*Cin) layout.

    out = bias + sum_ky (row_shift[ky] @ x) @ mats[ky]
    mats[ky]: (W*Cin, Wo*Cout) encodes column taps, the Cin->Cout contraction
    and (for stride>1, 1x1 kernels only) the column subsampling."""
    w = np.asarray(w, np.float32)
    b = np.asarray(b, np.float32)
    kh, kw, cin, cout = w.shape
    if stride > 1:
        assert kh == 1 and kw == 1, "strided convs are 1x1 (use_1x1_conv=True)"
    pw = (kw - 1) // 2 if stride == 1 else 0
    ph = (kh - 1) // 2 if stride == 1 else 0
    Wo = W // stride
    mats = []
    for ky in range(kh):
        A = np.zeros((W * cin, Wo * cout), np.float32)
        for wo in range(Wo):
            for kx in range(kw):
                wi = stride * wo + kx - pw
                if 0 <= wi < W:
                    A[wi * cin:(wi + 1) * cin,
                      wo * cout:(wo + 1) * cout] = w[ky, kx]
        mats.append(jnp.asarray(A))
    entry = {"mats": mats,
             "bias": jnp.asarray(np.tile(b, Wo)[None, :])}
    if kh > 1:
        entry["row_shift"] = [None if ky == ph else _shift_matrix(H, ky - ph)
                              for ky in range(kh)]
    return entry


def _pool_col_matrix(W, C, s):
    """(W*C, (W//s)*C): average groups of s adjacent columns, per channel."""
    P = np.zeros((W * C, (W // s) * C), np.float32)
    for j in range(W // s):
        for t in range(s):
            for c in range(C):
                P[(s * j + t) * C + c, j * C + c] = 1.0 / s
    return jnp.asarray(P)


def _pool_row_matrix(H, s):
    """(H//s, H): average groups of s adjacent rows (applied on the left)."""
    P = np.zeros((H // s, H), np.float32)
    for i in range(H // s):
        P[i, s * i:s * i + s] = 1.0 / s
    return jnp.asarray(P)


def _sel_row_matrix(H, s):
    """(H//s, H): pick every s-th row (left-matmul) == stride-s row subsample."""
    S = np.zeros((H // s, H), np.float32)
    for i in range(H // s):
        S[i, s * i] = 1.0
    return jnp.asarray(S)


def preprocess_params(params, H, W):
    """Expand raw conv params into the packed operands used inside the kernel."""
    proc = {"input_conv": _pack_conv(*params["input_conv"], H=H, W=W)}
    Hc, Wc = H, W
    levels_up, levels_down = [], []
    for i, stride in enumerate(hparams.up_strides):
        blocks = [{"convs": [_pack_conv(w, b, Hc, Wc) for (w, b) in blk["cell"]]}
                  for blk in params["levels_up"][i]]
        levels_up.append(blocks)

        ds_raw = params["levels_up_downsample"][i]
        convs = ds_raw["cell"]
        packed = [_pack_conv(w, b, Hc, Wc) for (w, b) in convs[:-1]]
        packed.append(_pack_conv(convs[-1][0], convs[-1][1], Hc, Wc, stride=stride))
        cin = int(convs[0][0].shape[2])          # residual-branch channel count
        entry = {"convs": packed,
                 "skip": _pack_conv(*ds_raw["skip"],
                                    H=Hc // stride, W=Wc // stride)}
        if stride > 1:
            entry["pool_col"] = _pool_col_matrix(Wc, cin, stride)
            entry["pool_row"] = _pool_row_matrix(Hc, stride)
            entry["sel_row"] = _sel_row_matrix(Hc, stride)
        levels_down.append(entry)
        Hc //= stride
        Wc //= stride
    proc["levels_up"] = levels_up
    proc["levels_up_downsample"] = levels_down
    return proc


# ----------------------------------------------------------------------------
# In-kernel helpers (values are always 2-D (H, W*C) f32; only dot/silu/add).
# ----------------------------------------------------------------------------
def _silu(x):
    return x * jax.nn.sigmoid(x)


def _apply_conv(x2, conv_ref):
    """SAME conv as packed matmuls on the (H, W*Cin) layout."""
    mats = conv_ref["mats"]
    shifts = conv_ref.get("row_shift", [None] * len(mats))
    y = conv_ref["bias"][...]                       # (1, Wo*Cout), broadcasts
    for ky, m_ref in enumerate(mats):
        s_ref = shifts[ky]
        t = x2 if s_ref is None else jnp.dot(
            s_ref[...], x2, preferred_element_type=jnp.float32)
        y = y + jnp.dot(t, m_ref[...], preferred_element_type=jnp.float32)
    return y


def _residual_cell(a, cell_ref, stride, ds_ref=None):
    """ResidualConvCell: SiLU->1x1 -> [SiLU->kxk]*n -> SiLU->1x1(strided),
    plus residual add.  For stride>1 the residual branch is 2x2 avg-pooled
    (row & column matmuls) and the strided 1x1 conv subsamples rows/columns."""
    convs = cell_ref["convs"]
    h = _silu(a)
    h = _apply_conv(h, convs[0])
    for c in convs[1:-1]:
        h = _silu(h)
        h = _apply_conv(h, c)
    h = _silu(h)
    if stride > 1:
        h = jnp.dot(ds_ref["sel_row"][...], h,
                    preferred_element_type=jnp.float32)          # row stride
        y = _apply_conv(h, convs[-1])                            # col stride in mat
        res = jnp.dot(ds_ref["pool_row"][...],
                      jnp.dot(a, ds_ref["pool_col"][...],
                              preferred_element_type=jnp.float32),
                      preferred_element_type=jnp.float32)        # 2x2 avg pool
        return y + res
    return a + _apply_conv(h, convs[-1])


def _make_kernel(w_treedef, n_w, n_levels):
    def kernel(*refs):
        x_ref = refs[0]
        w_leaves = refs[1:1 + n_w]
        out_refs = refs[1 + n_w:]
        P = jax.tree_util.tree_unflatten(w_treedef, list(w_leaves))

        a = x_ref[0].astype(jnp.float32)             # (H, W*Cin), lane-major
        a = _apply_conv(a, P["input_conv"])
        for i in range(n_levels):
            stride = hparams.up_strides[i]
            for blk in P["levels_up"][i]:
                a = _residual_cell(a, blk, 1)
            ds = P["levels_up_downsample"][i]
            a = _residual_cell(a, ds, stride, ds)
            out_refs[i][0] = _apply_conv(a, ds["skip"])   # (H_i, W_i*Cskip)
    return kernel


# ----------------------------------------------------------------------------
# Public forward: NCHW in, list of NCHW skip tensors out (deepest first).
# ----------------------------------------------------------------------------
def bottom_up_forward(x_nchw, params):
    N, Cin, H, W = x_nchw.shape
    x2 = jnp.transpose(x_nchw, (0, 2, 3, 1)).astype(jnp.float32)
    x2 = x2.reshape(N, H, W * Cin)

    proc = preprocess_params(params, H, W)
    w_leaves, w_treedef = jax.tree_util.tree_flatten(proc)
    n_w = len(w_leaves)
    n_levels = len(hparams.up_strides)

    out_shapes, out_hw = [], []
    Hc, Wc = H, W
    for i, stride in enumerate(hparams.up_strides):
        Hc //= stride
        Wc //= stride
        cs = hparams.up_skip_filters[i]
        out_hw.append((Hc, Wc, cs))
        out_shapes.append(jax.ShapeDtypeStruct((N, Hc, Wc * cs), jnp.float32))

    in_specs = [pl.BlockSpec((1, H, W * Cin), lambda n: (n, 0, 0))]
    for leaf in w_leaves:
        in_specs.append(
            pl.BlockSpec(leaf.shape, lambda n, _nd=leaf.ndim: (0,) * _nd))
    out_specs = tuple(pl.BlockSpec((1,) + s.shape[1:], lambda n: (n, 0, 0))
                      for s in out_shapes)

    outs = pl.pallas_call(
        _make_kernel(w_treedef, n_w, n_levels),
        out_shape=tuple(out_shapes),
        grid=(N,),                                    # batch -> both TCs on v7x
        in_specs=in_specs,
        out_specs=out_specs,
        compiler_params=pltpu.CompilerParams(dimension_semantics=("parallel",)),
    )(x2, *w_leaves)

    skips = []
    for i, (Hs, Ws, Cs) in enumerate(out_hw):
        s = outs[i].reshape(N, Hs, Ws, Cs)
        skips.append(jnp.transpose(s, (0, 3, 1, 2)))  # back to NCHW
    return skips[::-1]


# ----------------------------------------------------------------------------
# Parameter construction (deterministic, synthetic) -- same as reference.
# ----------------------------------------------------------------------------
def _init_conv(key, kh, kw, cin, cout, scale=1.0):
    wk, bk = jax.random.split(key)
    w = jax.random.normal(wk, (kh, kw, cin, cout), jnp.float32) / np.sqrt(kh * kw * cin)
    b = 0.01 * jax.random.normal(bk, (cout,), jnp.float32)
    return w * scale, b


def _init_residual_cell(key, level, in_f):
    out_f = hparams.up_filters[level]
    mid_f = int(in_f * hparams.up_mid_filters_ratio[level])
    ks = hparams.up_kernel_size[level]
    k_edge = 1 if hparams.use_1x1_conv else ks
    n_layers = hparams.up_n_layers[level]
    init_scaler = float(np.sqrt(1.0 / hparams.up_n_blocks[level]))
    keys = jax.random.split(key, n_layers + 2)
    convs = [_init_conv(keys[0], k_edge, k_edge, in_f, mid_f)]
    for l in range(n_layers):
        convs.append(_init_conv(keys[1 + l], ks, ks, mid_f, mid_f))
    convs.append(_init_conv(keys[-1], k_edge, k_edge, mid_f, out_f, scale=init_scaler))
    return convs


def build_params(key):
    params = {}
    key, k_in = jax.random.split(key)
    k_sz = hparams.input_kernel_size
    params["input_conv"] = _init_conv(k_in, k_sz, k_sz,
                                      hparams.channels, hparams.input_conv_filters)
    in_channels_up = [hparams.input_conv_filters] + list(hparams.up_filters[:-1])
    levels_up, levels_down = [], []
    for i, _stride in enumerate(hparams.up_strides):
        blocks = []
        for _ in range(hparams.up_n_blocks_per_res[i]):
            key, k = jax.random.split(key)
            blocks.append({"cell": _init_residual_cell(k, i, in_channels_up[i])})
        levels_up.append(blocks)
        key, k1, k2 = jax.random.split(key, 3)
        levels_down.append({
            "cell": _init_residual_cell(k1, i, in_channels_up[i]),
            "skip": _init_conv(k2, 1, 1, hparams.up_filters[i],
                               hparams.up_skip_filters[i]),
        })
    params["levels_up"] = levels_up
    params["levels_up_downsample"] = levels_down
    return params


# ----------------------------------------------------------------------------
if __name__ == "__main__":
    key = jax.random.PRNGKey(0)
    k_x, k_p = jax.random.split(key)
    x = jax.random.normal(k_x, (2, hparams.channels, 16, 16), jnp.float32)
    params = build_params(k_p)

    skips = bottom_up_forward(x, params)
    skips = [jax.block_until_ready(s) for s in skips]

    # skip_list is reversed: deepest resolution first.
    assert skips[0].shape == (2, hparams.up_skip_filters[1], 4, 4), skips[0].shape
    assert skips[1].shape == (2, hparams.up_skip_filters[0], 8, 8), skips[1].shape
    assert all(bool(jnp.all(jnp.isfinite(s))) for s in skips)
    print("KERNEL_OK")
</pallas_src>

<mosaic_0001>
module attributes {stable_mosaic.version = 11 : i64} {
  func.func @kernel(%arg0: i32, %arg1: memref<1x16x64xf32, #tpu.memory_space<vmem>>, %arg2: memref<1x256xf32, #tpu.memory_space<vmem>>, %arg3: memref<64x256xf32, #tpu.memory_space<vmem>>, %arg4: memref<64x256xf32, #tpu.memory_space<vmem>>, %arg5: memref<64x256xf32, #tpu.memory_space<vmem>>, %arg6: memref<16x16xf32, #tpu.memory_space<vmem>>, %arg7: memref<16x16xf32, #tpu.memory_space<vmem>>, %arg8: memref<1x128xf32, #tpu.memory_space<vmem>>, %arg9: memref<256x128xf32, #tpu.memory_space<vmem>>, %arg10: memref<1x128xf32, #tpu.memory_space<vmem>>, %arg11: memref<128x128xf32, #tpu.memory_space<vmem>>, %arg12: memref<128x128xf32, #tpu.memory_space<vmem>>, %arg13: memref<128x128xf32, #tpu.memory_space<vmem>>, %arg14: memref<16x16xf32, #tpu.memory_space<vmem>>, %arg15: memref<16x16xf32, #tpu.memory_space<vmem>>, %arg16: memref<1x256xf32, #tpu.memory_space<vmem>>, %arg17: memref<128x256xf32, #tpu.memory_space<vmem>>, %arg18: memref<1x64xf32, #tpu.memory_space<vmem>>, %arg19: memref<128x64xf32, #tpu.memory_space<vmem>>, %arg20: memref<1x64xf32, #tpu.memory_space<vmem>>, %arg21: memref<64x64xf32, #tpu.memory_space<vmem>>, %arg22: memref<64x64xf32, #tpu.memory_space<vmem>>, %arg23: memref<64x64xf32, #tpu.memory_space<vmem>>, %arg24: memref<8x8xf32, #tpu.memory_space<vmem>>, %arg25: memref<8x8xf32, #tpu.memory_space<vmem>>, %arg26: memref<1x128xf32, #tpu.memory_space<vmem>>, %arg27: memref<64x128xf32, #tpu.memory_space<vmem>>, %arg28: memref<1x128xf32, #tpu.memory_space<vmem>>, %arg29: memref<256x128xf32, #tpu.memory_space<vmem>>, %arg30: memref<1x128xf32, #tpu.memory_space<vmem>>, %arg31: memref<128x128xf32, #tpu.memory_space<vmem>>, %arg32: memref<128x128xf32, #tpu.memory_space<vmem>>, %arg33: memref<128x128xf32, #tpu.memory_space<vmem>>, %arg34: memref<16x16xf32, #tpu.memory_space<vmem>>, %arg35: memref<16x16xf32, #tpu.memory_space<vmem>>, %arg36: memref<1x128xf32, #tpu.memory_space<vmem>>, %arg37: memref<128x128xf32, #tpu.memory_space<vmem>>, %arg38: memref<256x128xf32, #tpu.memory_space<vmem>>, %arg39: memref<8x16xf32, #tpu.memory_space<vmem>>, %arg40: memref<8x16xf32, #tpu.memory_space<vmem>>, %arg41: memref<1x64xf32, #tpu.memory_space<vmem>>, %arg42: memref<128x64xf32, #tpu.memory_space<vmem>>, %arg43: memref<1x64xf32, #tpu.memory_space<vmem>>, %arg44: memref<128x64xf32, #tpu.memory_space<vmem>>, %arg45: memref<1x64xf32, #tpu.memory_space<vmem>>, %arg46: memref<64x64xf32, #tpu.memory_space<vmem>>, %arg47: memref<64x64xf32, #tpu.memory_space<vmem>>, %arg48: memref<64x64xf32, #tpu.memory_space<vmem>>, %arg49: memref<8x8xf32, #tpu.memory_space<vmem>>, %arg50: memref<8x8xf32, #tpu.memory_space<vmem>>, %arg51: memref<1x64xf32, #tpu.memory_space<vmem>>, %arg52: memref<64x64xf32, #tpu.memory_space<vmem>>, %arg53: memref<128x64xf32, #tpu.memory_space<vmem>>, %arg54: memref<4x8xf32, #tpu.memory_space<vmem>>, %arg55: memref<4x8xf32, #tpu.memory_space<vmem>>, %arg56: memref<1x32xf32, #tpu.memory_space<vmem>>, %arg57: memref<64x32xf32, #tpu.memory_space<vmem>>, %arg58: memref<1x8x64xf32, #tpu.memory_space<vmem>>, %arg59: memref<1x4x32xf32, #tpu.memory_space<vmem>>) attributes {dimension_semantics = [#tpu.dimension_semantics<parallel>], iteration_bounds = array<i64: 2>, scalar_prefetch = 0 : i64, scratch_operands = 0 : i64, tpu.core_type = #tpu.core_type<tc>, window_params = [{transform_indices = @transform_0, window_bounds = array<i64: 1, 16, 64>}, {pipeline_mode = #tpu.pipeline_mode<synchronous>, transform_indices = @transform_1, window_bounds = array<i64: 1, 256>}, {pipeline_mode = #tpu.pipeline_mode<synchronous>, transform_indices = @transform_2, window_bounds = array<i64: 64, 256>}, {pipeline_mode = #tpu.pipeline_mode<synchronous>, transform_indices = @transform_3, window_bounds = array<i64: 64, 256>}, {pipeline_mode = #tpu.pipeline_mode<synchronous>, transform_indices = @transform_4, window_bounds = array<i64: 64, 256>}, {pipeline_mode = #tpu.pipeline_mode<synchronous>, transform_indices = @transform_5, window_bounds = array<i64: 16, 16>}, {pipeline_mode = #tpu.pipeline_mode<synchronous>, transform_indices = @transform_6, window_bounds = array<i64: 16, 16>}, {pipeline_mode = #tpu.pipeline_mode<synchronous>, transform_indices = @transform_7, window_bounds = array<i64: 1, 128>}, {pipeline_mode = #tpu.pipeline_mode<synchronous>, transform_indices = @transform_8, window_bounds = array<i64: 256, 128>}, {pipeline_mode = #tpu.pipeline_mode<synchronous>, transform_indices = @transform_9, window_bounds = array<i64: 1, 128>}, {pipeline_mode = #tpu.pipeline_mode<synchronous>, transform_indices = @transform_10, window_bounds = array<i64: 128, 128>}, {pipeline_mode = #tpu.pipeline_mode<synchronous>, transform_indices = @transform_11, window_bounds = array<i64: 128, 128>}, {pipeline_mode = #tpu.pipeline_mode<synchronous>, transform_indices = @transform_12, window_bounds = array<i64: 128, 128>}, {pipeline_mode = #tpu.pipeline_mode<synchronous>, transform_indices = @transform_13, window_bounds = array<i64: 16, 16>}, {pipeline_mode = #tpu.pipeline_mode<synchronous>, transform_indices = @transform_14, window_bounds = array<i64: 16, 16>}, {pipeline_mode = #tpu.pipeline_mode<synchronous>, transform_indices = @transform_15, window_bounds = array<i64: 1, 256>}, {pipeline_mode = #tpu.pipeline_mode<synchronous>, transform_indices = @transform_16, window_bounds = array<i64: 128, 256>}, {pipeline_mode = #tpu.pipeline_mode<synchronous>, transform_indices = @transform_17, window_bounds = array<i64: 1, 64>}, {pipeline_mode = #tpu.pipeline_mode<synchronous>, transform_indices = @transform_18, window_bounds = array<i64: 128, 64>}, {pipeline_mode = #tpu.pipeline_mode<synchronous>, transform_indices = @transform_19, window_bounds = array<i64: 1, 64>}, {pipeline_mode = #tpu.pipeline_mode<synchronous>, transform_indices = @transform_20, window_bounds = array<i64: 64, 64>}, {pipeline_mode = #tpu.pipeline_mode<synchronous>, transform_indices = @transform_21, window_bounds = array<i64: 64, 64>}, {pipeline_mode = #tpu.pipeline_mode<synchronous>, transform_indices = @transform_22, window_bounds = array<i64: 64, 64>}, {pipeline_mode = #tpu.pipeline_mode<synchronous>, transform_indices = @transform_23, window_bounds = array<i64: 8, 8>}, {pipeline_mode = #tpu.pipeline_mode<synchronous>, transform_indices = @transform_24, window_bounds = array<i64: 8, 8>}, {pipeline_mode = #tpu.pipeline_mode<synchronous>, transform_indices = @transform_25, window_bounds = array<i64: 1, 128>}, {pipeline_mode = #tpu.pipeline_mode<synchronous>, transform_indices = @transform_26, window_bounds = array<i64: 64, 128>}, {pipeline_mode = #tpu.pipeline_mode<synchronous>, transform_indices = @transform_27, window_bounds = array<i64: 1, 128>}, {pipeline_mode = #tpu.pipeline_mode<synchronous>, transform_indices = @transform_28, window_bounds = array<i64: 256, 128>}, {pipeline_mode = #tpu.pipeline_mode<synchronous>, transform_indices = @transform_29, window_bounds = array<i64: 1, 128>}, {pipeline_mode = #tpu.pipeline_mode<synchronous>, transform_indices = @transform_30, window_bounds = array<i64: 128, 128>}, {pipeline_mode = #tpu.pipeline_mode<synchronous>, transform_indices = @transform_31, window_bounds = array<i64: 128, 128>}, {pipeline_mode = #tpu.pipeline_mode<synchronous>, transform_indices = @transform_32, window_bounds = array<i64: 128, 128>}, {pipeline_mode = #tpu.pipeline_mode<synchronous>, transform_indices = @transform_33, window_bounds = array<i64: 16, 16>}, {pipeline_mode = #tpu.pipeline_mode<synchronous>, transform_indices = @transform_34, window_bounds = array<i64: 16, 16>}, {pipeline_mode = #tpu.pipeline_mode<synchronous>, transform_indices = @transform_35, window_bounds = array<i64: 1, 128>}, {pipeline_mode = #tpu.pipeline_mode<synchronous>, transform_indices = @transform_36, window_bounds = array<i64: 128, 128>}, {pipeline_mode = #tpu.pipeline_mode<synchronous>, transform_indices = @transform_37, window_bounds = array<i64: 256, 128>}, {pipeline_mode = #tpu.pipeline_mode<synchronous>, transform_indices = @transform_38, window_bounds = array<i64: 8, 16>}, {pipeline_mode = #tpu.pipeline_mode<synchronous>, transform_indices = @transform_39, window_bounds = array<i64: 8, 16>}, {pipeline_mode = #tpu.pipeline_mode<synchronous>, transform_indices = @transform_40, window_bounds = array<i64: 1, 64>}, {pipeline_mode = #tpu.pipeline_mode<synchronous>, transform_indices = @transform_41, window_bounds = array<i64: 128, 64>}, {pipeline_mode = #tpu.pipeline_mode<synchronous>, transform_indices = @transform_42, window_bounds = array<i64: 1, 64>}, {pipeline_mode = #tpu.pipeline_mode<synchronous>, transform_indices = @transform_43, window_bounds = array<i64: 128, 64>}, {pipeline_mode = #tpu.pipeline_mode<synchronous>, transform_indices = @transform_44, window_bounds = array<i64: 1, 64>}, {pipeline_mode = #tpu.pipeline_mode<synchronous>, transform_indices = @transform_45, window_bounds = array<i64: 64, 64>}, {pipeline_mode = #tpu.pipeline_mode<synchronous>, transform_indices = @transform_46, window_bounds = array<i64: 64, 64>}, {pipeline_mode = #tpu.pipeline_mode<synchronous>, transform_indices = @transform_47, window_bounds = array<i64: 64, 64>}, {pipeline_mode = #tpu.pipeline_mode<synchronous>, transform_indices = @transform_48, window_bounds = array<i64: 8, 8>}, {pipeline_mode = #tpu.pipeline_mode<synchronous>, transform_indices = @transform_49, window_bounds = array<i64: 8, 8>}, {pipeline_mode = #tpu.pipeline_mode<synchronous>, transform_indices = @transform_50, window_bounds = array<i64: 1, 64>}, {pipeline_mode = #tpu.pipeline_mode<synchronous>, transform_indices = @transform_51, window_bounds = array<i64: 64, 64>}, {pipeline_mode = #tpu.pipeline_mode<synchronous>, transform_indices = @transform_52, window_bounds = array<i64: 128, 64>}, {pipeline_mode = #tpu.pipeline_mode<synchronous>, transform_indices = @transform_53, window_bounds = array<i64: 4, 8>}, {pipeline_mode = #tpu.pipeline_mode<synchronous>, transform_indices = @transform_54, window_bounds = array<i64: 4, 8>}, {pipeline_mode = #tpu.pipeline_mode<synchronous>, transform_indices = @transform_55, window_bounds = array<i64: 1, 32>}, {pipeline_mode = #tpu.pipeline_mode<synchronous>, transform_indices = @transform_56, window_bounds = array<i64: 64, 32>}, {transform_indices = @transform_57, window_bounds = array<i64: 1, 8, 64>}, {transform_indices = @transform_58, window_bounds = array<i64: 1, 4, 32>}]} {
    %c0 = arith.constant 0 : index
    %c0_0 = arith.constant 0 : index
    %c0_1 = arith.constant 0 : index
    %0 = vector.load %arg1[%c0, %c0_0, %c0_1] : memref<1x16x64xf32, #tpu.memory_space<vmem>>, vector<1x16x64xf32>
    %1 = vector.shape_cast %0 : vector<1x16x64xf32> to vector<16x64xf32>
    %c0_2 = arith.constant 0 : index
    %c0_3 = arith.constant 0 : index
    %2 = vector.load %arg2[%c0_2, %c0_3] : memref<1x256xf32, #tpu.memory_space<vmem>>, vector<1x256xf32>
    %c0_4 = arith.constant 0 : index
    %c0_5 = arith.constant 0 : index
    %3 = vector.load %arg6[%c0_4, %c0_5] : memref<16x16xf32, #tpu.memory_space<vmem>>, vector<16x16xf32>
    %cst = arith.constant dense<0.000000e+00> : vector<16x64xf32>
    %4 = tpu.matmul %3, %1, %cst {dimension_numbers = #tpu.dot_dimension_numbers<[1], [0], [0], [1], [0, 0, 1, 1], [], []>} : vector<16x16xf32>, vector<16x64xf32>, vector<16x64xf32> -> vector<16x64xf32>
    %c0_6 = arith.constant 0 : index
    %c0_7 = arith.constant 0 : index
    %5 = vector.load %arg3[%c0_6, %c0_7] : memref<64x256xf32, #tpu.memory_space<vmem>>, vector<64x256xf32>
    %cst_8 = arith.constant dense<0.000000e+00> : vector<16x256xf32>
    %6 = tpu.matmul %4, %5, %cst_8 {dimension_numbers = #tpu.dot_dimension_numbers<[1], [0], [0], [1], [0, 0, 1, 1], [], []>} : vector<16x64xf32>, vector<64x256xf32>, vector<16x256xf32> -> vector<16x256xf32>
    %7 = vector.broadcast %2 : vector<1x256xf32> to vector<16x256xf32>
    %8 = arith.addf %7, %6 : vector<16x256xf32>
    %c0_9 = arith.constant 0 : index
    %c0_10 = arith.constant 0 : index
    %9 = vector.load %arg4[%c0_9, %c0_10] : memref<64x256xf32, #tpu.memory_space<vmem>>, vector<64x256xf32>
    %cst_11 = arith.constant dense<0.000000e+00> : vector<16x256xf32>
    %10 = tpu.matmul %1, %9, %cst_11 {dimension_numbers = #tpu.dot_dimension_numbers<[1], [0], [0], [1], [0, 0, 1, 1], [], []>} : vector<16x64xf32>, vector<64x256xf32>, vector<16x256xf32> -> vector<16x256xf32>
    %11 = arith.addf %8, %10 : vector<16x256xf32>
    %c0_12 = arith.constant 0 : index
    %c0_13 = arith.constant 0 : index
    %12 = vector.load %arg7[%c0_12, %c0_13] : memref<16x16xf32, #tpu.memory_space<vmem>>, vector<16x16xf32>
    %cst_14 = arith.constant dense<0.000000e+00> : vector<16x64xf32>
    %13 = tpu.matmul %12, %1, %cst_14 {dimension_numbers = #tpu.dot_dimension_numbers<[1], [0], [0], [1], [0, 0, 1, 1], [], []>} : vector<16x16xf32>, vector<16x64xf32>, vector<16x64xf32> -> vector<16x64xf32>
    %c0_15 = arith.constant 0 : index
    %c0_16 = arith.constant 0 : index
    %14 = vector.load %arg5[%c0_15, %c0_16] : memref<64x256xf32, #tpu.memory_space<vmem>>, vector<64x256xf32>
    %cst_17 = arith.constant dense<0.000000e+00> : vector<16x256xf32>
    %15 = tpu.matmul %13, %14, %cst_17 {dimension_numbers = #tpu.dot_dimension_numbers<[1], [0], [0], [1], [0, 0, 1, 1], [], []>} : vector<16x64xf32>, vector<64x256xf32>, vector<16x256xf32> -> vector<16x256xf32>
    %16 = arith.addf %11, %15 : vector<16x256xf32>
    %17 = arith.negf %16 : vector<16x256xf32>
    %18 = math.exp %17 : vector<16x256xf32>
    %cst_18 = arith.constant 1.000000e+00 : f32
    %19 = vector.broadcast %cst_18 : f32 to vector<16x256xf32>
    %20 = arith.addf %19, %18 : vector<16x256xf32>
    %21 = arith.divf %19, %20 : vector<16x256xf32>
    %22 = arith.mulf %16, %21 : vector<16x256xf32>
    %c0_19 = arith.constant 0 : index
    %c0_20 = arith.constant 0 : index
    %23 = vector.load %arg8[%c0_19, %c0_20] : memref<1x128xf32, #tpu.memory_space<vmem>>, vector<1x128xf32>
    %c0_21 = arith.constant 0 : index
    %c0_22 = arith.constant 0 : index
    %24 = vector.load %arg9[%c0_21, %c0_22] : memref<256x128xf32, #tpu.memory_space<vmem>>, vector<256x128xf32>
    %cst_23 = arith.constant dense<0.000000e+00> : vector<16x128xf32>
    %25 = tpu.matmul %22, %24, %cst_23 {dimension_numbers = #tpu.dot_dimension_numbers<[1], [0], [0], [1], [0, 0, 1, 1], [], []>} : vector<16x256xf32>, vector<256x128xf32>, vector<16x128xf32> -> vector<16x128xf32>
    %26 = vector.broadcast %23 : vector<1x128xf32> to vector<16x128xf32>
    %27 = arith.addf %26, %25 : vector<16x128xf32>
    %28 = arith.negf %27 : vector<16x128xf32>
    %29 = math.exp %28 : vector<16x128xf32>
    %cst_24 = arith.constant 1.000000e+00 : f32
    %30 = vector.broadcast %cst_24 : f32 to vector<16x128xf32>
    %31 = arith.addf %30, %29 : vector<16x128xf32>
    %32 = arith.divf %30, %31 : vector<16x128xf32>
    %33 = arith.mulf %27, %32 : vector<16x128xf32>
    %c0_25 = arith.constant 0 : index
    %c0_26 = arith.constant 0 : index
    %34 = vector.load %arg10[%c0_25, %c0_26] : memref<1x128xf32, #tpu.memory_space<vmem>>, vector<1x128xf32>
    %c0_27 = arith.constant 0 : index
    %c0_28 = arith.constant 0 : index
    %35 = vector.load %arg14[%c0_27, %c0_28] : memref<16x16xf32, #tpu.memory_space<vmem>>, vector<16x16xf32>
    %cst_29 = arith.constant dense<0.000000e+00> : vector<16x128xf32>
    %36 = tpu.matmul %35, %33, %cst_29 {dimension_numbers = #tpu.dot_dimension_numbers<[1], [0], [0], [1], [0, 0, 1, 1], [], []>} : vector<16x16xf32>, vector<16x128xf32>, vector<16x128xf32> -> vector<16x128xf32>
    %c0_30 = arith.constant 0 : index
    %c0_31 = arith.constant 0 : index
    %37 = vector.load %arg11[%c0_30, %c0_31] : memref<128x128xf32, #tpu.memory_space<vmem>>, vector<128x128xf32>
    %cst_32 = arith.constant dense<0.000000e+00> : vector<16x128xf32>
    %38 = tpu.matmul %36, %37, %cst_32 {dimension_numbers = #tpu.dot_dimension_numbers<[1], [0], [0], [1], [0, 0, 1, 1], [], []>} : vector<16x128xf32>, vector<128x128xf32>, vector<16x128xf32> -> vector<16x128xf32>
    %39 = vector.broadcast %34 : vector<1x128xf32> to vector<16x128xf32>
    %40 = arith.addf %39, %38 : vector<16x128xf32>
    %c0_33 = arith.constant 0 : index
    %c0_34 = arith.constant 0 : index
    %41 = vector.load %arg12[%c0_33, %c0_34] : memref<128x128xf32, #tpu.memory_space<vmem>>, vector<128x128xf32>
    %cst_35 = arith.constant dense<0.000000e+00> : vector<16x128xf32>
    %42 = tpu.matmul %33, %41, %cst_35 {dimension_numbers = #tpu.dot_dimension_numbers<[1], [0], [0], [1], [0, 0, 1, 1], [], []>} : vector<16x128xf32>, vector<128x128xf32>, vector<16x128xf32> -> vector<16x128xf32>
    %43 = arith.addf %40, %42 : vector<16x128xf32>
    %c0_36 = arith.constant 0 : index
    %c0_37 = arith.constant 0 : index
    %44 = vector.load %arg15[%c0_36, %c0_37] : memref<16x16xf32, #tpu.memory_space<vmem>>, vector<16x16xf32>
    %cst_38 = arith.constant dense<0.000000e+00> : vector<16x128xf32>
    %45 = tpu.matmul %44, %33, %cst_38 {dimension_numbers = #tpu.dot_dimension_numbers<[1], [0], [0], [1], [0, 0, 1, 1], [], []>} : vector<16x16xf32>, vector<16x128xf32>, vector<16x128xf32> -> vector<16x128xf32>
    %c0_39 = arith.constant 0 : index
    %c0_40 = arith.constant 0 : index
    %46 = vector.load %arg13[%c0_39, %c0_40] : memref<128x128xf32, #tpu.memory_space<vmem>>, vector<128x128xf32>
    %cst_41 = arith.constant dense<0.000000e+00> : vector<16x128xf32>
    %47 = tpu.matmul %45, %46, %cst_41 {dimension_numbers = #tpu.dot_dimension_numbers<[1], [0], [0], [1], [0, 0, 1, 1], [], []>} : vector<16x128xf32>, vector<128x128xf32>, vector<16x128xf32> -> vector<16x128xf32>
    %48 = arith.addf %43, %47 : vector<16x128xf32>
    %49 = arith.negf %48 : vector<16x128xf32>
    %50 = math.exp %49 : vector<16x128xf32>
    %cst_42 = arith.constant 1.000000e+00 : f32
    %51 = vector.broadcast %cst_42 : f32 to vector<16x128xf32>
    %52 = arith.addf %51, %50 : vector<16x128xf32>
    %53 = arith.divf %51, %52 : vector<16x128xf32>
    %54 = arith.mulf %48, %53 : vector<16x128xf32>
    %c0_43 = arith.constant 0 : index
    %c0_44 = arith.constant 0 : index
    %55 = vector.load %arg16[%c0_43, %c0_44] : memref<1x256xf32, #tpu.memory_space<vmem>>, vector<1x256xf32>
    %c0_45 = arith.constant 0 : index
    %c0_46 = arith.constant 0 : index
    %56 = vector.load %arg17[%c0_45, %c0_46] : memref<128x256xf32, #tpu.memory_space<vmem>>, vector<128x256xf32>
    %cst_47 = arith.constant dense<0.000000e+00> : vector<16x256xf32>
    %57 = tpu.matmul %54, %56, %cst_47 {dimension_numbers = #tpu.dot_dimension_numbers<[1], [0], [0], [1], [0, 0, 1, 1], [], []>} : vector<16x128xf32>, vector<128x256xf32>, vector<16x256xf32> -> vector<16x256xf32>
    %58 = vector.broadcast %55 : vector<1x256xf32> to vector<16x256xf32>
    %59 = arith.addf %58, %57 : vector<16x256xf32>
    %60 = arith.addf %16, %59 : vector<16x256xf32>
    %61 = arith.negf %60 : vector<16x256xf32>
    %62 = math.exp %61 : vector<16x256xf32>
    %cst_48 = arith.constant 1.000000e+00 : f32
    %63 = vector.broadcast %cst_48 : f32 to vector<16x256xf32>
    %64 = arith.addf %63, %62 : vector<16x256xf32>
    %65 = arith.divf %63, %64 : vector<16x256xf32>
    %66 = arith.mulf %60, %65 : vector<16x256xf32>
    %c0_49 = arith.constant 0 : index
    %c0_50 = arith.constant 0 : index
    %67 = vector.load %arg28[%c0_49, %c0_50] : memref<1x128xf32, #tpu.memory_space<vmem>>, vector<1x128xf32>
    %c0_51 = arith.constant 0 : index
    %c0_52 = arith.constant 0 : index
    %68 = vector.load %arg29[%c0_51, %c0_52] : memref<256x128xf32, #tpu.memory_space<vmem>>, vector<256x128xf32>
    %cst_53 = arith.constant dense<0.000000e+00> : vector<16x128xf32>
    %69 = tpu.matmul %66, %68, %cst_53 {dimension_numbers = #tpu.dot_dimension_numbers<[1], [0], [0], [1], [0, 0, 1, 1], [], []>} : vector<16x256xf32>, vector<256x128xf32>, vector<16x128xf32> -> vector<16x128xf32>
    %70 = vector.broadcast %67 : vector<1x128xf32> to vector<16x128xf32>
    %71 = arith.addf %70, %69 : vector<16x128xf32>
    %72 = arith.negf %71 : vector<16x128xf32>
    %73 = math.exp %72 : vector<16x128xf32>
    %cst_54 = arith.constant 1.000000e+00 : f32
    %74 = vector.broadcast %cst_54 : f32 to vector<16x128xf32>
    %75 = arith.addf %74, %73 : vector<16x128xf32>
    %76 = arith.divf %74, %75 : vector<16x128xf32>
    %77 = arith.mulf %71, %76 : vector<16x128xf32>
    %c0_55 = arith.constant 0 : index
    %c0_56 = arith.constant 0 : index
    %78 = vector.load %arg30[%c0_55, %c0_56] : memref<1x128xf32, #tpu.memory_space<vmem>>, vector<1x128xf32>
    %c0_57 = arith.constant 0 : index
    %c0_58 = arith.constant 0 : index
    %79 = vector.load %arg34[%c0_57, %c0_58] : memref<16x16xf32, #tpu.memory_space<vmem>>, vector<16x16xf32>
    %cst_59 = arith.constant dense<0.000000e+00> : vector<16x128xf32>
    %80 = tpu.matmul %79, %77, %cst_59 {dimension_numbers = #tpu.dot_dimension_numbers<[1], [0], [0], [1], [0, 0, 1, 1], [], []>} : vector<16x16xf32>, vector<16x128xf32>, vector<16x128xf32> -> vector<16x128xf32>
    %c0_60 = arith.constant 0 : index
    %c0_61 = arith.constant 0 : index
    %81 = vector.load %arg31[%c0_60, %c0_61] : memref<128x128xf32, #tpu.memory_space<vmem>>, vector<128x128xf32>
    %cst_62 = arith.constant dense<0.000000e+00> : vector<16x128xf32>
    %82 = tpu.matmul %80, %81, %cst_62 {dimension_numbers = #tpu.dot_dimension_numbers<[1], [0], [0], [1], [0, 0, 1, 1], [], []>} : vector<16x128xf32>, vector<128x128xf32>, vector<16x128xf32> -> vector<16x128xf32>
    %83 = vector.broadcast %78 : vector<1x128xf32> to vector<16x128xf32>
    %84 = arith.addf %83, %82 : vector<16x128xf32>
    %c0_63 = arith.constant 0 : index
    %c0_64 = arith.constant 0 : index
    %85 = vector.load %arg32[%c0_63, %c0_64] : memref<128x128xf32, #tpu.memory_space<vmem>>, vector<128x128xf32>
    %cst_65 = arith.constant dense<0.000000e+00> : vector<16x128xf32>
    %86 = tpu.matmul %77, %85, %cst_65 {dimension_numbers = #tpu.dot_dimension_numbers<[1], [0], [0], [1], [0, 0, 1, 1], [], []>} : vector<16x128xf32>, vector<128x128xf32>, vector<16x128xf32> -> vector<16x128xf32>
    %87 = arith.addf %84, %86 : vector<16x128xf32>
    %c0_66 = arith.constant 0 : index
    %c0_67 = arith.constant 0 : index
    %88 = vector.load %arg35[%c0_66, %c0_67] : memref<16x16xf32, #tpu.memory_space<vmem>>, vector<16x16xf32>
    %cst_68 = arith.constant dense<0.000000e+00> : vector<16x128xf32>
    %89 = tpu.matmul %88, %77, %cst_68 {dimension_numbers = #tpu.dot_dimension_numbers<[1], [0], [0], [1], [0, 0, 1, 1], [], []>} : vector<16x16xf32>, vector<16x128xf32>, vector<16x128xf32> -> vector<16x128xf32>
    %c0_69 = arith.constant 0 : index
    %c0_70 = arith.constant 0 : index
    %90 = vector.load %arg33[%c0_69, %c0_70] : memref<128x128xf32, #tpu.memory_space<vmem>>, vector<128x128xf32>
    %cst_71 = arith.constant dense<0.000000e+00> : vector<16x128xf32>
    %91 = tpu.matmul %89, %90, %cst_71 {dimension_numbers = #tpu.dot_dimension_numbers<[1], [0], [0], [1], [0, 0, 1, 1], [], []>} : vector<16x128xf32>, vector<128x128xf32>, vector<16x128xf32> -> vector<16x128xf32>
    %92 = arith.addf %87, %91 : vector<16x128xf32>
    %93 = arith.negf %92 : vector<16x128xf32>
    %94 = math.exp %93 : vector<16x128xf32>
    %cst_72 = arith.constant 1.000000e+00 : f32
    %95 = vector.broadcast %cst_72 : f32 to vector<16x128xf32>
    %96 = arith.addf %95, %94 : vector<16x128xf32>
    %97 = arith.divf %95, %96 : vector<16x128xf32>
    %98 = arith.mulf %92, %97 : vector<16x128xf32>
    %c0_73 = arith.constant 0 : index
    %c0_74 = arith.constant 0 : index
    %99 = vector.load %arg40[%c0_73, %c0_74] : memref<8x16xf32, #tpu.memory_space<vmem>>, vector<8x16xf32>
    %cst_75 = arith.constant dense<0.000000e+00> : vector<8x128xf32>
    %100 = tpu.matmul %99, %98, %cst_75 {dimension_numbers = #tpu.dot_dimension_numbers<[1], [0], [0], [1], [0, 0, 1, 1], [], []>} : vector<8x16xf32>, vector<16x128xf32>, vector<8x128xf32> -> vector<8x128xf32>
    %c0_76 = arith.constant 0 : index
    %c0_77 = arith.constant 0 : index
    %101 = vector.load %arg36[%c0_76, %c0_77] : memref<1x128xf32, #tpu.memory_space<vmem>>, vector<1x128xf32>
    %c0_78 = arith.constant 0 : index
    %c0_79 = arith.constant 0 : index
    %102 = vector.load %arg37[%c0_78, %c0_79] : memref<128x128xf32, #tpu.memory_space<vmem>>, vector<128x128xf32>
    %cst_80 = arith.constant dense<0.000000e+00> : vector<8x128xf32>
    %103 = tpu.matmul %100, %102, %cst_80 {dimension_numbers = #tpu.dot_dimension_numbers<[1], [0], [0], [1], [0, 0, 1, 1], [], []>} : vector<8x128xf32>, vector<128x128xf32>, vector<8x128xf32> -> vector<8x128xf32>
    %104 = vector.broadcast %101 : vector<1x128xf32> to vector<8x128xf32>
    %105 = arith.addf %104, %103 : vector<8x128xf32>
    %c0_81 = arith.constant 0 : index
    %c0_82 = arith.constant 0 : index
    %106 = vector.load %arg39[%c0_81, %c0_82] : memref<8x16xf32, #tpu.memory_space<vmem>>, vector<8x16xf32>
    %c0_83 = arith.constant 0 : index
    %c0_84 = arith.constant 0 : index
    %107 = vector.load %arg38[%c0_83, %c0_84] : memref<256x128xf32, #tpu.memory_space<vmem>>, vector<256x128xf32>
    %cst_85 = arith.constant dense<0.000000e+00> : vector<16x128xf32>
    %108 = tpu.matmul %60, %107, %cst_85 {dimension_numbers = #tpu.dot_dimension_numbers<[1], [0], [0], [1], [0, 0, 1, 1], [], []>} : vector<16x256xf32>, vector<256x128xf32>, vector<16x128xf32> -> vector<16x128xf32>
    %cst_86 = arith.constant dense<0.000000e+00> : vector<8x128xf32>
    %109 = tpu.matmul %106, %108, %cst_86 {dimension_numbers = #tpu.dot_dimension_numbers<[1], [0], [0], [1], [0, 0, 1, 1], [], []>} : vector<8x16xf32>, vector<16x128xf32>, vector<8x128xf32> -> vector<8x128xf32>
    %110 = arith.addf %105, %109 : vector<8x128xf32>
    %c0_87 = arith.constant 0 : index
    %c0_88 = arith.constant 0 : index
    %111 = vector.load %arg41[%c0_87, %c0_88] : memref<1x64xf32, #tpu.memory_space<vmem>>, vector<1x64xf32>
    %c0_89 = arith.constant 0 : index
    %c0_90 = arith.constant 0 : index
    %112 = vector.load %arg42[%c0_89, %c0_90] : memref<128x64xf32, #tpu.memory_space<vmem>>, vector<128x64xf32>
    %cst_91 = arith.constant dense<0.000000e+00> : vector<8x64xf32>
    %113 = tpu.matmul %110, %112, %cst_91 {dimension_numbers = #tpu.dot_dimension_numbers<[1], [0], [0], [1], [0, 0, 1, 1], [], []>} : vector<8x128xf32>, vector<128x64xf32>, vector<8x64xf32> -> vector<8x64xf32>
    %114 = vector.broadcast %111 : vector<1x64xf32> to vector<8x64xf32>
    %115 = arith.addf %114, %113 : vector<8x64xf32>
    %c0_92 = arith.constant 0 : index
    %c0_93 = arith.constant 0 : index
    %c0_94 = arith.constant 0 : index
    %116 = vector.load %arg58[%c0_92, %c0_93, %c0_94] : memref<1x8x64xf32, #tpu.memory_space<vmem>>, vector<1x8x64xf32>
    %117 = vector.shape_cast %116 : vector<1x8x64xf32> to vector<8x64xf32>
    %118 = vector.shape_cast %115 : vector<8x64xf32> to vector<1x8x64xf32>
    tpu.vector_store %arg58[%c0_92, %c0_93, %c0_94], %118 {strides = array<i32>} : memref<1x8x64xf32, #tpu.memory_space<vmem>>, vector<1x8x64xf32>,
    %119 = arith.negf %110 : vector<8x128xf32>
    %120 = math.exp %119 : vector<8x128xf32>
    %cst_95 = arith.constant 1.000000e+00 : f32
    %121 = vector.broadcast %cst_95 : f32 to vector<8x128xf32>
    %122 = arith.addf %121, %120 : vector<8x128xf32>
    %123 = arith.divf %121, %122 : vector<8x128xf32>
    %124 = arith.mulf %110, %123 : vector<8x128xf32>
    %c0_96 = arith.constant 0 : index
    %c0_97 = arith.constant 0 : index
    %125 = vector.load %arg18[%c0_96, %c0_97] : memref<1x64xf32, #tpu.memory_space<vmem>>, vector<1x64xf32>
    %c0_98 = arith.constant 0 : index
    %c0_99 = arith.constant 0 : index
    %126 = vector.load %arg19[%c0_98, %c0_99] : memref<128x64xf32, #tpu.memory_space<vmem>>, vector<128x64xf32>
    %cst_100 = arith.constant dense<0.000000e+00> : vector<8x64xf32>
    %127 = tpu.matmul %124, %126, %cst_100 {dimension_numbers = #tpu.dot_dimension_numbers<[1], [0], [0], [1], [0, 0, 1, 1], [], []>} : vector<8x128xf32>, vector<128x64xf32>, vector<8x64xf32> -> vector<8x64xf32>
    %128 = vector.broadcast %125 : vector<1x64xf32> to vector<8x64xf32>
    %129 = arith.addf %128, %127 : vector<8x64xf32>
    %130 = arith.negf %129 : vector<8x64xf32>
    %131 = math.exp %130 : vector<8x64xf32>
    %cst_101 = arith.constant 1.000000e+00 : f32
    %132 = vector.broadcast %cst_101 : f32 to vector<8x64xf32>
    %133 = arith.addf %132, %131 : vector<8x64xf32>
    %134 = arith.divf %132, %133 : vector<8x64xf32>
    %135 = arith.mulf %129, %134 : vector<8x64xf32>
    %c0_102 = arith.constant 0 : index
    %c0_103 = arith.constant 0 : index
    %136 = vector.load %arg20[%c0_102, %c0_103] : memref<1x64xf32, #tpu.memory_space<vmem>>, vector<1x64xf32>
    %c0_104 = arith.constant 0 : index
    %c0_105 = arith.constant 0 : index
    %137 = vector.load %arg24[%c0_104, %c0_105] : memref<8x8xf32, #tpu.memory_space<vmem>>, vector<8x8xf32>
    %cst_106 = arith.constant dense<0.000000e+00> : vector<8x64xf32>
    %138 = tpu.matmul %137, %135, %cst_106 {dimension_numbers = #tpu.dot_dimension_numbers<[1], [0], [0], [1], [0, 0, 1, 1], [], []>} : vector<8x8xf32>, vector<8x64xf32>, vector<8x64xf32> -> vector<8x64xf32>
    %c0_107 = arith.constant 0 : index
    %c0_108 = arith.constant 0 : index
    %139 = vector.load %arg21[%c0_107, %c0_108] : memref<64x64xf32, #tpu.memory_space<vmem>>, vector<64x64xf32>
    %cst_109 = arith.constant dense<0.000000e+00> : vector<8x64xf32>
    %140 = tpu.matmul %138, %139, %cst_109 {dimension_numbers = #tpu.dot_dimension_numbers<[1], [0], [0], [1], [0, 0, 1, 1], [], []>} : vector<8x64xf32>, vector<64x64xf32>, vector<8x64xf32> -> vector<8x64xf32>
    %141 = vector.broadcast %136 : vector<1x64xf32> to vector<8x64xf32>
    %142 = arith.addf %141, %140 : vector<8x64xf32>
    %c0_110 = arith.constant 0 : index
    %c0_111 = arith.constant 0 : index
    %143 = vector.load %arg22[%c0_110, %c0_111] : memref<64x64xf32, #tpu.memory_space<vmem>>, vector<64x64xf32>
    %cst_112 = arith.constant dense<0.000000e+00> : vector<8x64xf32>
    %144 = tpu.matmul %135, %143, %cst_112 {dimension_numbers = #tpu.dot_dimension_numbers<[1], [0], [0], [1], [0, 0, 1, 1], [], []>} : vector<8x64xf32>, vector<64x64xf32>, vector<8x64xf32> -> vector<8x64xf32>
    %145 = arith.addf %142, %144 : vector<8x64xf32>
    %c0_113 = arith.constant 0 : index
    %c0_114 = arith.constant 0 : index
    %146 = vector.load %arg25[%c0_113, %c0_114] : memref<8x8xf32, #tpu.memory_space<vmem>>, vector<8x8xf32>
    %cst_115 = arith.constant dense<0.000000e+00> : vector<8x64xf32>
    %147 = tpu.matmul %146, %135, %cst_115 {dimension_numbers = #tpu.dot_dimension_numbers<[1], [0], [0], [1], [0, 0, 1, 1], [], []>} : vector<8x8xf32>, vector<8x64xf32>, vector<8x64xf32> -> vector<8x64xf32>
    %c0_116 = arith.constant 0 : index
    %c0_117 = arith.constant 0 : index
    %148 = vector.load %arg23[%c0_116, %c0_117] : memref<64x64xf32, #tpu.memory_space<vmem>>, vector<64x64xf32>
    %cst_118 = arith.constant dense<0.000000e+00> : vector<8x64xf32>
    %149 = tpu.matmul %147, %148, %cst_118 {dimension_numbers = #tpu.dot_dimension_numbers<[1], [0], [0], [1], [0, 0, 1, 1], [], []>} : vector<8x64xf32>, vector<64x64xf32>, vector<8x64xf32> -> vector<8x64xf32>
    %150 = arith.addf %145, %149 : vector<8x64xf32>
    %151 = arith.negf %150 : vector<8x64xf32>
    %152 = math.exp %151 : vector<8x64xf32>
    %cst_119 = arith.constant 1.000000e+00 : f32
    %153 = vector.broadcast %cst_119 : f32 to vector<8x64xf32>
    %154 = arith.addf %153, %152 : vector<8x64xf32>
    %155 = arith.divf %153, %154 : vector<8x64xf32>
    %156 = arith.mulf %150, %155 : vector<8x64xf32>
    %c0_120 = arith.constant 0 : index
    %c0_121 = arith.constant 0 : index
    %157 = vector.load %arg26[%c0_120, %c0_121] : memref<1x128xf32, #tpu.memory_space<vmem>>, vector<1x128xf32>
    %c0_122 = arith.constant 0 : index
    %c0_123 = arith.constant 0 : index
    %158 = vector.load %arg27[%c0_122, %c0_123] : memref<64x128xf32, #tpu.memory_space<vmem>>, vector<64x128xf32>
    %cst_124 = arith.constant dense<0.000000e+00> : vector<8x128xf32>
    %159 = tpu.matmul %156, %158, %cst_124 {dimension_numbers = #tpu.dot_dimension_numbers<[1], [0], [0], [1], [0, 0, 1, 1], [], []>} : vector<8x64xf32>, vector<64x128xf32>, vector<8x128xf32> -> vector<8x128xf32>
    %160 = vector.broadcast %157 : vector<1x128xf32> to vector<8x128xf32>
    %161 = arith.addf %160, %159 : vector<8x128xf32>
    %162 = arith.addf %110, %161 : vector<8x128xf32>
    %163 = arith.negf %162 : vector<8x128xf32>
    %164 = math.exp %163 : vector<8x128xf32>
    %cst_125 = arith.constant 1.000000e+00 : f32
    %165 = vector.broadcast %cst_125 : f32 to vector<8x128xf32>
    %166 = arith.addf %165, %164 : vector<8x128xf32>
    %167 = arith.divf %165, %166 : vector<8x128xf32>
    %168 = arith.mulf %162, %167 : vector<8x128xf32>
    %c0_126 = arith.constant 0 : index
    %c0_127 = arith.constant 0 : index
    %169 = vector.load %arg43[%c0_126, %c0_127] : memref<1x64xf32, #tpu.memory_space<vmem>>, vector<1x64xf32>
    %c0_128 = arith.constant 0 : index
    %c0_129 = arith.constant 0 : index
    %170 = vector.load %arg44[%c0_128, %c0_129] : memref<128x64xf32, #tpu.memory_space<vmem>>, vector<128x64xf32>
    %cst_130 = arith.constant dense<0.000000e+00> : vector<8x64xf32>
    %171 = tpu.matmul %168, %170, %cst_130 {dimension_numbers = #tpu.dot_dimension_numbers<[1], [0], [0], [1], [0, 0, 1, 1], [], []>} : vector<8x128xf32>, vector<128x64xf32>, vector<8x64xf32> -> vector<8x64xf32>
    %172 = vector.broadcast %169 : vector<1x64xf32> to vector<8x64xf32>
    %173 = arith.addf %172, %171 : vector<8x64xf32>
    %174 = arith.negf %173 : vector<8x64xf32>
    %175 = math.exp %174 : vector<8x64xf32>
    %cst_131 = arith.constant 1.000000e+00 : f32
    %176 = vector.broadcast %cst_131 : f32 to vector<8x64xf32>
    %177 = arith.addf %176, %175 : vector<8x64xf32>
    %178 = arith.divf %176, %177 : vector<8x64xf32>
    %179 = arith.mulf %173, %178 : vector<8x64xf32>
    %c0_132 = arith.constant 0 : index
    %c0_133 = arith.constant 0 : index
    %180 = vector.load %arg45[%c0_132, %c0_133] : memref<1x64xf32, #tpu.memory_space<vmem>>, vector<1x64xf32>
    %c0_134 = arith.constant 0 : index
    %c0_135 = arith.constant 0 : index
    %181 = vector.load %arg49[%c0_134, %c0_135] : memref<8x8xf32, #tpu.memory_space<vmem>>, vector<8x8xf32>
    %cst_136 = arith.constant dense<0.000000e+00> : vector<8x64xf32>
    %182 = tpu.matmul %181, %179, %cst_136 {dimension_numbers = #tpu.dot_dimension_numbers<[1], [0], [0], [1], [0, 0, 1, 1], [], []>} : vector<8x8xf32>, vector<8x64xf32>, vector<8x64xf32> -> vector<8x64xf32>
    %c0_137 = arith.constant 0 : index
    %c0_138 = arith.constant 0 : index
    %183 = vector.load %arg46[%c0_137, %c0_138] : memref<64x64xf32, #tpu.memory_space<vmem>>, vector<64x64xf32>
    %cst_139 = arith.constant dense<0.000000e+00> : vector<8x64xf32>
    %184 = tpu.matmul %182, %183, %cst_139 {dimension_numbers = #tpu.dot_dimension_numbers<[1], [0], [0], [1], [0, 0, 1, 1], [], []>} : vector<8x64xf32>, vector<64x64xf32>, vector<8x64xf32> -> vector<8x64xf32>
    %185 = vector.broadcast %180 : vector<1x64xf32> to vector<8x64xf32>
    %186 = arith.addf %185, %184 : vector<8x64xf32>
    %c0_140 = arith.constant 0 : index
    %c0_141 = arith.constant 0 : index
    %187 = vector.load %arg47[%c0_140, %c0_141] : memref<64x64xf32, #tpu.memory_space<vmem>>, vector<64x64xf32>
    %cst_142 = arith.constant dense<0.000000e+00> : vector<8x64xf32>
    %188 = tpu.matmul %179, %187, %cst_142 {dimension_numbers = #tpu.dot_dimension_numbers<[1], [0], [0], [1], [0, 0, 1, 1], [], []>} : vector<8x64xf32>, vector<64x64xf32>, vector<8x64xf32> -> vector<8x64xf32>
    %189 = arith.addf %186, %188 : vector<8x64xf32>
    %c0_143 = arith.constant 0 : index
    %c0_144 = arith.constant 0 : index
    %190 = vector.load %arg50[%c0_143, %c0_144] : memref<8x8xf32, #tpu.memory_space<vmem>>, vector<8x8xf32>
    %cst_145 = arith.constant dense<0.000000e+00> : vector<8x64xf32>
    %191 = tpu.matmul %190, %179, %cst_145 {dimension_numbers = #tpu.dot_dimension_numbers<[1], [0], [0], [1], [0, 0, 1, 1], [], []>} : vector<8x8xf32>, vector<8x64xf32>, vector<8x64xf32> -> vector<8x64xf32>
    %c0_146 = arith.constant 0 : index
    %c0_147 = arith.constant 0 : index
    %192 = vector.load %arg48[%c0_146, %c0_147] : memref<64x64xf32, #tpu.memory_space<vmem>>, vector<64x64xf32>
    %cst_148 = arith.constant dense<0.000000e+00> : vector<8x64xf32>
    %193 = tpu.matmul %191, %192, %cst_148 {dimension_numbers = #tpu.dot_dimension_numbers<[1], [0], [0], [1], [0, 0, 1, 1], [], []>} : vector<8x64xf32>, vector<64x64xf32>, vector<8x64xf32> -> vector<8x64xf32>
    %194 = arith.addf %189, %193 : vector<8x64xf32>
    %195 = arith.negf %194 : vector<8x64xf32>
    %196 = math.exp %195 : vector<8x64xf32>
    %cst_149 = arith.constant 1.000000e+00 : f32
    %197 = vector.broadcast %cst_149 : f32 to vector<8x64xf32>
    %198 = arith.addf %197, %196 : vector<8x64xf32>
    %199 = arith.divf %197, %198 : vector<8x64xf32>
    %200 = arith.mulf %194, %199 : vector<8x64xf32>
    %c0_150 = arith.constant 0 : index
    %c0_151 = arith.constant 0 : index
    %201 = vector.load %arg55[%c0_150, %c0_151] : memref<4x8xf32, #tpu.memory_space<vmem>>, vector<4x8xf32>
    %cst_152 = arith.constant dense<0.000000e+00> : vector<4x64xf32>
    %202 = tpu.matmul %201, %200, %cst_152 {dimension_numbers = #tpu.dot_dimension_numbers<[1], [0], [0], [1], [0, 0, 1, 1], [], []>} : vector<4x8xf32>, vector<8x64xf32>, vector<4x64xf32> -> vector<4x64xf32>
    %c0_153 = arith.constant 0 : index
    %c0_154 = arith.constant 0 : index
    %203 = vector.load %arg51[%c0_153, %c0_154] : memref<1x64xf32, #tpu.memory_space<vmem>>, vector<1x64xf32>
    %c0_155 = arith.constant 0 : index
    %c0_156 = arith.constant 0 : index
    %204 = vector.load %arg52[%c0_155, %c0_156] : memref<64x64xf32, #tpu.memory_space<vmem>>, vector<64x64xf32>
    %cst_157 = arith.constant dense<0.000000e+00> : vector<4x64xf32>
    %205 = tpu.matmul %202, %204, %cst_157 {dimension_numbers = #tpu.dot_dimension_numbers<[1], [0], [0], [1], [0, 0, 1, 1], [], []>} : vector<4x64xf32>, vector<64x64xf32>, vector<4x64xf32> -> vector<4x64xf32>
    %206 = vector.broadcast %203 : vector<1x64xf32> to vector<4x64xf32>
    %207 = arith.addf %206, %205 : vector<4x64xf32>
    %c0_158 = arith.constant 0 : index
    %c0_159 = arith.constant 0 : index
    %208 = vector.load %arg54[%c0_158, %c0_159] : memref<4x8xf32, #tpu.memory_space<vmem>>, vector<4x8xf32>
    %c0_160 = arith.constant 0 : index
    %c0_161 = arith.constant 0 : index
    %209 = vector.load %arg53[%c0_160, %c0_161] : memref<128x64xf32, #tpu.memory_space<vmem>>, vector<128x64xf32>
    %cst_162 = arith.constant dense<0.000000e+00> : vector<8x64xf32>
    %210 = tpu.matmul %162, %209, %cst_162 {dimension_numbers = #tpu.dot_dimension_numbers<[1], [0], [0], [1], [0, 0, 1, 1], [], []>} : vector<8x128xf32>, vector<128x64xf32>, vector<8x64xf32> -> vector<8x64xf32>
    %cst_163 = arith.constant dense<0.000000e+00> : vector<4x64xf32>
    %211 = tpu.matmul %208, %210, %cst_163 {dimension_numbers = #tpu.dot_dimension_numbers<[1], [0], [0], [1], [0, 0, 1, 1], [], []>} : vector<4x8xf32>, vector<8x64xf32>, vector<4x64xf32> -> vector<4x64xf32>
    %212 = arith.addf %207, %211 : vector<4x64xf32>
    %c0_164 = arith.constant 0 : index
    %c0_165 = arith.constant 0 : index
    %213 = vector.load %arg56[%c0_164, %c0_165] : memref<1x32xf32, #tpu.memory_space<vmem>>, vector<1x32xf32>
    %c0_166 = arith.constant 0 : index
    %c0_167 = arith.constant 0 : index
    %214 = vector.load %arg57[%c0_166, %c0_167] : memref<64x32xf32, #tpu.memory_space<vmem>>, vector<64x32xf32>
    %cst_168 = arith.constant dense<0.000000e+00> : vector<4x32xf32>
    %215 = tpu.matmul %212, %214, %cst_168 {dimension_numbers = #tpu.dot_dimension_numbers<[1], [0], [0], [1], [0, 0, 1, 1], [], []>} : vector<4x64xf32>, vector<64x32xf32>, vector<4x32xf32> -> vector<4x32xf32>
    %216 = vector.broadcast %213 : vector<1x32xf32> to vector<4x32xf32>
    %217 = arith.addf %216, %215 : vector<4x32xf32>
    %c0_169 = arith.constant 0 : index
    %c0_170 = arith.constant 0 : index
    %c0_171 = arith.constant 0 : index
    %218 = vector.load %arg59[%c0_169, %c0_170, %c0_171] : memref<1x4x32xf32, #tpu.memory_space<vmem>>, vector<1x4x32xf32>
    %219 = vector.shape_cast %218 : vector<1x4x32xf32> to vector<4x32xf32>
    %220 = vector.shape_cast %217 : vector<4x32xf32> to vector<1x4x32xf32>
    tpu.vector_store %arg59[%c0_169, %c0_170, %c0_171], %220 {strides = array<i32>} : memref<1x4x32xf32, #tpu.memory_space<vmem>>, vector<1x4x32xf32>,
    return
  }
  func.func @transform_0(%arg0: i32) -> (i32, i32, i32) {
    %c0_i32 = arith.constant 0 : i32
    %c0_i32_0 = arith.constant 0 : i32
    %c0_i32_1 = arith.constant 0 : i32
    return %arg0, %c0_i32, %c0_i32_0 : i32, i32, i32
  }
  func.func @transform_1(%arg0: i32) -> (i32, i32) {
    %c0_i32 = arith.constant 0 : i32
    %c0_i32_0 = arith.constant 0 : i32
    %c0_i32_1 = arith.constant 0 : i32
    return %c0_i32, %c0_i32_0 : i32, i32
  }
  func.func @transform_2(%arg0: i32) -> (i32, i32) {
    %c0_i32 = arith.constant 0 : i32
    %c0_i32_0 = arith.constant 0 : i32
    %c0_i32_1 = arith.constant 0 : i32
    return %c0_i32, %c0_i32_0 : i32, i32
  }
  func.func @transform_3(%arg0: i32) -> (i32, i32) {
    %c0_i32 = arith.constant 0 : i32
    %c0_i32_0 = arith.constant 0 : i32
    %c0_i32_1 = arith.constant 0 : i32
    return %c0_i32, %c0_i32_0 : i32, i32
  }
  func.func @transform_4(%arg0: i32) -> (i32, i32) {
    %c0_i32 = arith.constant 0 : i32
    %c0_i32_0 = arith.constant 0 : i32
    %c0_i32_1 = arith.constant 0 : i32
    return %c0_i32, %c0_i32_0 : i32, i32
  }
  func.func @transform_5(%arg0: i32) -> (i32, i32) {
    %c0_i32 = arith.constant 0 : i32
    %c0_i32_0 = arith.constant 0 : i32
    %c0_i32_1 = arith.constant 0 : i32
    return %c0_i32, %c0_i32_0 : i32, i32
  }
  func.func @transform_6(%arg0: i32) -> (i32, i32) {
    %c0_i32 = arith.constant 0 : i32
    %c0_i32_0 = arith.constant 0 : i32
    %c0_i32_1 = arith.constant 0 : i32
    return %c0_i32, %c0_i32_0 : i32, i32
  }
  func.func @transform_7(%arg0: i32) -> (i32, i32) {
    %c0_i32 = arith.constant 0 : i32
    %c0_i32_0 = arith.constant 0 : i32
    %c0_i32_1 = arith.constant 0 : i32
    return %c0_i32, %c0_i32_0 : i32, i32
  }
  func.func @transform_8(%arg0: i32) -> (i32, i32) {
    %c0_i32 = arith.constant 0 : i32
    %c0_i32_0 = arith.constant 0 : i32
    %c0_i32_1 = arith.constant 0 : i32
    return %c0_i32, %c0_i32_0 : i32, i32
  }
  func.func @transform_9(%arg0: i32) -> (i32, i32) {
    %c0_i32 = arith.constant 0 : i32
    %c0_i32_0 = arith.constant 0 : i32
    %c0_i32_1 = arith.constant 0 : i32
    return %c0_i32, %c0_i32_0 : i32, i32
  }
  func.func @transform_10(%arg0: i32) -> (i32, i32) {
    %c0_i32 = arith.constant 0 : i32
    %c0_i32_0 = arith.constant 0 : i32
    %c0_i32_1 = arith.constant 0 : i32
    return %c0_i32, %c0_i32_0 : i32, i32
  }
  func.func @transform_11(%arg0: i32) -> (i32, i32) {
    %c0_i32 = arith.constant 0 : i32
    %c0_i32_0 = arith.constant 0 : i32
    %c0_i32_1 = arith.constant 0 : i32
    return %c0_i32, %c0_i32_0 : i32, i32
  }
  func.func @transform_12(%arg0: i32) -> (i32, i32) {
    %c0_i32 = arith.constant 0 : i32
    %c0_i32_0 = arith.constant 0 : i32
    %c0_i32_1 = arith.constant 0 : i32
    return %c0_i32, %c0_i32_0 : i32, i32
  }
  func.func @transform_13(%arg0: i32) -> (i32, i32) {
    %c0_i32 = arith.constant 0 : i32
    %c0_i32_0 = arith.constant 0 : i32
    %c0_i32_1 = arith.constant 0 : i32
    return %c0_i32, %c0_i32_0 : i32, i32
  }
  func.func @transform_14(%arg0: i32) -> (i32, i32) {
    %c0_i32 = arith.constant 0 : i32
    %c0_i32_0 = arith.constant 0 : i32
    %c0_i32_1 = arith.constant 0 : i32
    return %c0_i32, %c0_i32_0 : i32, i32
  }
  func.func @transform_15(%arg0: i32) -> (i32, i32) {
    %c0_i32 = arith.constant 0 : i32
    %c0_i32_0 = arith.constant 0 : i32
    %c0_i32_1 = arith.constant 0 : i32
    return %c0_i32, %c0_i32_0 : i32, i32
  }
  func.func @transform_16(%arg0: i32) -> (i32, i32) {
    %c0_i32 = arith.constant 0 : i32
    %c0_i32_0 = arith.constant 0 : i32
    %c0_i32_1 = arith.constant 0 : i32
    return %c0_i32, %c0_i32_0 : i32, i32
  }
  func.func @transform_17(%arg0: i32) -> (i32, i32) {
    %c0_i32 = arith.constant 0 : i32
    %c0_i32_0 = arith.constant 0 : i32
    %c0_i32_1 = arith.constant 0 : i32
    return %c0_i32, %c0_i32_0 : i32, i32
  }
  func.func @transform_18(%arg0: i32) -> (i32, i32) {
    %c0_i32 = arith.constant 0 : i32
    %c0_i32_0 = arith.constant 0 : i32
    %c0_i32_1 = arith.constant 0 : i32
    return %c0_i32, %c0_i32_0 : i32, i32
  }
  func.func @transform_19(%arg0: i32) -> (i32, i32) {
    %c0_i32 = arith.constant 0 : i32
    %c0_i32_0 = arith.constant 0 : i32
    %c0_i32_1 = arith.constant 0 : i32
    return %c0_i32, %c0_i32_0 : i32, i32
  }
  func.func @transform_20(%arg0: i32) -> (i32, i32) {
    %c0_i32 = arith.constant 0 : i32
    %c0_i32_0 = arith.constant 0 : i32
    %c0_i32_1 = arith.constant 0 : i32
    return %c0_i32, %c0_i32_0 : i32, i32
  }
  func.func @transform_21(%arg0: i32) -> (i32, i32) {
    %c0_i32 = arith.constant 0 : i32
    %c0_i32_0 = arith.constant 0 : i32
    %c0_i32_1 = arith.constant 0 : i32
    return %c0_i32, %c0_i32_0 : i32, i32
  }
  func.func @transform_22(%arg0: i32) -> (i32, i32) {
    %c0_i32 = arith.constant 0 : i32
    %c0_i32_0 = arith.constant 0 : i32
    %c0_i32_1 = arith.constant 0 : i32
    return %c0_i32, %c0_i32_0 : i32, i32
  }
  func.func @transform_23(%arg0: i32) -> (i32, i32) {
    %c0_i32 = arith.constant 0 : i32
    %c0_i32_0 = arith.constant 0 : i32
    %c0_i32_1 = arith.constant 0 : i32
    return %c0_i32, %c0_i32_0 : i32, i32
  }
  func.func @transform_24(%arg0: i32) -> (i32, i32) {
    %c0_i32 = arith.constant 0 : i32
    %c0_i32_0 = arith.constant 0 : i32
    %c0_i32_1 = arith.constant 0 : i32
    return %c0_i32, %c0_i32_0 : i32, i32
  }
  func.func @transform_25(%arg0: i32) -> (i32, i32) {
    %c0_i32 = arith.constant 0 : i32
    %c0_i32_0 = arith.constant 0 : i32
    %c0_i32_1 = arith.constant 0 : i32
    return %c0_i32, %c0_i32_0 : i32, i32
  }
  func.func @transform_26(%arg0: i32) -> (i32, i32) {
    %c0_i32 = arith.constant 0 : i32
    %c0_i32_0 = arith.constant 0 : i32
    %c0_i32_1 = arith.constant 0 : i32
    return %c0_i32, %c0_i32_0 : i32, i32
  }
  func.func @transform_27(%arg0: i32) -> (i32, i32) {
    %c0_i32 = arith.constant 0 : i32
    %c0_i32_0 = arith.constant 0 : i32
    %c0_i32_1 = arith.constant 0 : i32
    return %c0_i32, %c0_i32_0 : i32, i32
  }
  func.func @transform_28(%arg0: i32) -> (i32, i32) {
    %c0_i32 = arith.constant 0 : i32
    %c0_i32_0 = arith.constant 0 : i32
    %c0_i32_1 = arith.constant 0 : i32
    return %c0_i32, %c0_i32_0 : i32, i32
  }
  func.func @transform_29(%arg0: i32) -> (i32, i32) {
    %c0_i32 = arith.constant 0 : i32
    %c0_i32_0 = arith.constant 0 : i32
    %c0_i32_1 = arith.constant 0 : i32
    return %c0_i32, %c0_i32_0 : i32, i32
  }
  func.func @transform_30(%arg0: i32) -> (i32, i32) {
    %c0_i32 = arith.constant 0 : i32
    %c0_i32_0 = arith.constant 0 : i32
    %c0_i32_1 = arith.constant 0 : i32
    return %c0_i32, %c0_i32_0 : i32, i32
  }
  func.func @transform_31(%arg0: i32) -> (i32, i32) {
    %c0_i32 = arith.constant 0 : i32
    %c0_i32_0 = arith.constant 0 : i32
    %c0_i32_1 = arith.constant 0 : i32
    return %c0_i32, %c0_i32_0 : i32, i32
  }
  func.func @transform_32(%arg0: i32) -> (i32, i32) {
    %c0_i32 = arith.constant 0 : i32
    %c0_i32_0 = arith.constant 0 : i32
    %c0_i32_1 = arith.constant 0 : i32
    return %c0_i32, %c0_i32_0 : i32, i32
  }
  func.func @transform_33(%arg0: i32) -> (i32, i32) {
    %c0_i32 = arith.constant 0 : i32
    %c0_i32_0 = arith.constant 0 : i32
    %c0_i32_1 = arith.constant 0 : i32
    return %c0_i32, %c0_i32_0 : i32, i32
  }
  func.func @transform_34(%arg0: i32) -> (i32, i32) {
    %c0_i32 = arith.constant 0 : i32
    %c0_i32_0 = arith.constant 0 : i32
    %c0_i32_1 = arith.constant 0 : i32
    return %c0_i32, %c0_i32_0 : i32, i32
  }
  func.func @transform_35(%arg0: i32) -> (i32, i32) {
    %c0_i32 = arith.constant 0 : i32
    %c0_i32_0 = arith.constant 0 : i32
    %c0_i32_1 = arith.constant 0 : i32
    return %c0_i32, %c0_i32_0 : i32, i32
  }
  func.func @transform_36(%arg0: i32) -> (i32, i32) {
    %c0_i32 = arith.constant 0 : i32
    %c0_i32_0 = arith.constant 0 : i32
    %c0_i32_1 = arith.constant 0 : i32
    return %c0_i32, %c0_i32_0 : i32, i32
  }
  func.func @transform_37(%arg0: i32) -> (i32, i32) {
    %c0_i32 = arith.constant 0 : i32
    %c0_i32_0 = arith.constant 0 : i32
    %c0_i32_1 = arith.constant 0 : i32
    return %c0_i32, %c0_i32_0 : i32, i32
  }
  func.func @transform_38(%arg0: i32) -> (i32, i32) {
    %c0_i32 = arith.constant 0 : i32
    %c0_i32_0 = arith.constant 0 : i32
    %c0_i32_1 = arith.constant 0 : i32
    return %c0_i32, %c0_i32_0 : i32, i32
  }
  func.func @transform_39(%arg0: i32) -> (i32, i32) {
    %c0_i32 = arith.constant 0 : i32
    %c0_i32_0 = arith.constant 0 : i32
    %c0_i32_1 = arith.constant 0 : i32
    return %c0_i32, %c0_i32_0 : i32, i32
  }
  func.func @transform_40(%arg0: i32) -> (i32, i32) {
    %c0_i32 = arith.constant 0 : i32
    %c0_i32_0 = arith.constant 0 : i32
    %c0_i32_1 = arith.constant 0 : i32
    return %c0_i32, %c0_i32_0 : i32, i32
  }
  func.func @transform_41(%arg0: i32) -> (i32, i32) {
    %c0_i32 = arith.constant 0 : i32
    %c0_i32_0 = arith.constant 0 : i32
    %c0_i32_1 = arith.constant 0 : i32
    return %c0_i32, %c0_i32_0 : i32, i32
  }
  func.func @transform_42(%arg0: i32) -> (i32, i32) {
    %c0_i32 = arith.constant 0 : i32
    %c0_i32_0 = arith.constant 0 : i32
    %c0_i32_1 = arith.constant 0 : i32
    return %c0_i32, %c0_i32_0 : i32, i32
  }
  func.func @transform_43(%arg0: i32) -> (i32, i32) {
    %c0_i32 = arith.constant 0 : i32
    %c0_i32_0 = arith.constant 0 : i32
    %c0_i32_1 = arith.constant 0 : i32
    return %c0_i32, %c0_i32_0 : i32, i32
  }
  func.func @transform_44(%arg0: i32) -> (i32, i32) {
    %c0_i32 = arith.constant 0 : i32
    %c0_i32_0 = arith.constant 0 : i32
    %c0_i32_1 = arith.constant 0 : i32
    return %c0_i32, %c0_i32_0 : i32, i32
  }
  func.func @transform_45(%arg0: i32) -> (i32, i32) {
    %c0_i32 = arith.constant 0 : i32
    %c0_i32_0 = arith.constant 0 : i32
    %c0_i32_1 = arith.constant 0 : i32
    return %c0_i32, %c0_i32_0 : i32, i32
  }
  func.func @transform_46(%arg0: i32) -> (i32, i32) {
    %c0_i32 = arith.constant 0 : i32
    %c0_i32_0 = arith.constant 0 : i32
    %c0_i32_1 = arith.constant 0 : i32
    return %c0_i32, %c0_i32_0 : i32, i32
  }
  func.func @transform_47(%arg0: i32) -> (i32, i32) {
    %c0_i32 = arith.constant 0 : i32
    %c0_i32_0 = arith.constant 0 : i32
    %c0_i32_1 = arith.constant 0 : i32
    return %c0_i32, %c0_i32_0 : i32, i32
  }
  func.func @transform_48(%arg0: i32) -> (i32, i32) {
    %c0_i32 = arith.constant 0 : i32
    %c0_i32_0 = arith.constant 0 : i32
    %c0_i32_1 = arith.constant 0 : i32
    return %c0_i32, %c0_i32_0 : i32, i32
  }
  func.func @transform_49(%arg0: i32) -> (i32, i32) {
    %c0_i32 = arith.constant 0 : i32
    %c0_i32_0 = arith.constant 0 : i32
    %c0_i32_1 = arith.constant 0 : i32
    return %c0_i32, %c0_i32_0 : i32, i32
  }
  func.func @transform_50(%arg0: i32) -> (i32, i32) {
    %c0_i32 = arith.constant 0 : i32
    %c0_i32_0 = arith.constant 0 : i32
    %c0_i32_1 = arith.constant 0 : i32
    return %c0_i32, %c0_i32_0 : i32, i32
  }
  func.func @transform_51(%arg0: i32) -> (i32, i32) {
    %c0_i32 = arith.constant 0 : i32
    %c0_i32_0 = arith.constant 0 : i32
    %c0_i32_1 = arith.constant 0 : i32
    return %c0_i32, %c0_i32_0 : i32, i32
  }
  func.func @transform_52(%arg0: i32) -> (i32, i32) {
    %c0_i32 = arith.constant 0 : i32
    %c0_i32_0 = arith.constant 0 : i32
    %c0_i32_1 = arith.constant 0 : i32
    return %c0_i32, %c0_i32_0 : i32, i32
  }
  func.func @transform_53(%arg0: i32) -> (i32, i32) {
    %c0_i32 = arith.constant 0 : i32
    %c0_i32_0 = arith.constant 0 : i32
    %c0_i32_1 = arith.constant 0 : i32
    return %c0_i32, %c0_i32_0 : i32, i32
  }
  func.func @transform_54(%arg0: i32) -> (i32, i32) {
    %c0_i32 = arith.constant 0 : i32
    %c0_i32_0 = arith.constant 0 : i32
    %c0_i32_1 = arith.constant 0 : i32
    return %c0_i32, %c0_i32_0 : i32, i32
  }
  func.func @transform_55(%arg0: i32) -> (i32, i32) {
    %c0_i32 = arith.constant 0 : i32
    %c0_i32_0 = arith.constant 0 : i32
    %c0_i32_1 = arith.constant 0 : i32
    return %c0_i32, %c0_i32_0 : i32, i32
  }
  func.func @transform_56(%arg0: i32) -> (i32, i32) {
    %c0_i32 = arith.constant 0 : i32
    %c0_i32_0 = arith.constant 0 : i32
    %c0_i32_1 = arith.constant 0 : i32
    return %c0_i32, %c0_i32_0 : i32, i32
  }
  func.func @transform_57(%arg0: i32) -> (i32, i32, i32) {
    %c0_i32 = arith.constant 0 : i32
    %c0_i32_0 = arith.constant 0 : i32
    %c0_i32_1 = arith.constant 0 : i32
    return %arg0, %c0_i32, %c0_i32_0 : i32, i32, i32
  }
  func.func @transform_58(%arg0: i32) -> (i32, i32, i32) {
    %c0_i32 = arith.constant 0 : i32
    %c0_i32_0 = arith.constant 0 : i32
    %c0_i32_1 = arith.constant 0 : i32
    return %arg0, %c0_i32, %c0_i32_0 : i32, i32, i32
  }
}

</mosaic_0001>

<llo_original>
// kernel: tpu_custom_call.1
$region0: #{tpu_custom_call.1}
  #allocation0 [shape = 'u32[]', space=smem, size = 0x4, offset = 0x4, fixed_abs, tag = 'smem constant byte address 0x4 - core index']
  #allocation1 [shape = 'u32[72,128]{1,0:T(1,128)}', space=vmem, size = 0x9000, scoped, tag = 'internal scratch']
  %s0 = inlined_call_operand.smem [shape: u32[59], index: -1, kind: input, shape index: {}]
  %s1 = sld [smem:[%s0]]
  %s2 = scalar_lea.smem %s0, 1
  %s3 = sld [smem:[%s2]]
  %s4 = scalar_lea.smem %s0, 2
  %s5 = sld [smem:[%s4]]
  %s6 = scalar_lea.smem %s0, 3
  %s7 = sld [smem:[%s6]]
  %s8 = scalar_lea.smem %s0, 4
  %s9 = sld [smem:[%s8]]
  %s10 = scalar_lea.smem %s0, 5
  %s11 = sld [smem:[%s10]]
  %s12 = scalar_lea.smem %s0, 6
  %s13 = sld [smem:[%s12]]
  %s14 = scalar_lea.smem %s0, 7
  %s15 = sld [smem:[%s14]]
  %s16 = scalar_lea.smem %s0, 8
  %s17 = sld [smem:[%s16]]
  %s18 = scalar_lea.smem %s0, 9
  %s19 = sld [smem:[%s18]]
  %s20 = scalar_lea.smem %s0, 10
  %s21 = sld [smem:[%s20]]
  %s22 = scalar_lea.smem %s0, 11
  %s23 = sld [smem:[%s22]]
  %s24 = scalar_lea.smem %s0, 12
  %s25 = sld [smem:[%s24]]
  %s26 = scalar_lea.smem %s0, 13
  %s27 = sld [smem:[%s26]]
  %s28 = scalar_lea.smem %s0, 14
  %s29 = sld [smem:[%s28]]
  %s30 = scalar_lea.smem %s0, 15
  %s31 = sld [smem:[%s30]]
  %s32 = scalar_lea.smem %s0, 16
  %s33 = sld [smem:[%s32]]
  %s34 = scalar_lea.smem %s0, 17
  %s35 = sld [smem:[%s34]]
  %s36 = scalar_lea.smem %s0, 18
  %s37 = sld [smem:[%s36]]
  %s38 = scalar_lea.smem %s0, 19
  %s39 = sld [smem:[%s38]]
  %s40 = scalar_lea.smem %s0, 20
  %s41 = sld [smem:[%s40]]
  %s42 = scalar_lea.smem %s0, 21
  %s43 = sld [smem:[%s42]]
  %s44 = scalar_lea.smem %s0, 22
  %s45 = sld [smem:[%s44]]
  %s46 = scalar_lea.smem %s0, 23
  %s47 = sld [smem:[%s46]]
  %s48 = scalar_lea.smem %s0, 24
  %s49 = sld [smem:[%s48]]
  %s50 = scalar_lea.smem %s0, 25
  %s51 = sld [smem:[%s50]]
  %s52 = scalar_lea.smem %s0, 26
  %s53 = sld [smem:[%s52]]
  %s54 = scalar_lea.smem %s0, 27
  %s55 = sld [smem:[%s54]]
  %s56 = scalar_lea.smem %s0, 28
  %s57 = sld [smem:[%s56]]
  %s58 = scalar_lea.smem %s0, 29
  %s59 = sld [smem:[%s58]]
  %s60 = scalar_lea.smem %s0, 30
  %s61 = sld [smem:[%s60]]
  %s62 = scalar_lea.smem %s0, 31
  %s63 = sld [smem:[%s62]]
  %s64 = scalar_lea.smem %s0, 32
  %s65 = sld [smem:[%s64]]
  %s66 = scalar_lea.smem %s0, 33
  %s67 = sld [smem:[%s66]]
  %s68 = scalar_lea.smem %s0, 34
  %s69 = sld [smem:[%s68]]
  %s70 = scalar_lea.smem %s0, 35
  %s71 = sld [smem:[%s70]]
  %s72 = scalar_lea.smem %s0, 36
  %s73 = sld [smem:[%s72]]
  %s74 = scalar_lea.smem %s0, 37
  %s75 = sld [smem:[%s74]]
  %s76 = scalar_lea.smem %s0, 38
  %s77 = sld [smem:[%s76]]
  %s78 = scalar_lea.smem %s0, 39
  %s79 = sld [smem:[%s78]]
  %s80 = scalar_lea.smem %s0, 40
  %s81 = sld [smem:[%s80]]
  %s82 = scalar_lea.smem %s0, 41
  %s83 = sld [smem:[%s82]]
  %s84 = scalar_lea.smem %s0, 42
  %s85 = sld [smem:[%s84]]
  %s86 = scalar_lea.smem %s0, 43
  %s87 = sld [smem:[%s86]]
  %s88 = scalar_lea.smem %s0, 44
  %s89 = sld [smem:[%s88]]
  %s90 = scalar_lea.smem %s0, 45
  %s91 = sld [smem:[%s90]]
  %s92 = scalar_lea.smem %s0, 46
  %s93 = sld [smem:[%s92]]
  %s94 = scalar_lea.smem %s0, 47
  %s95 = sld [smem:[%s94]]
  %s96 = scalar_lea.smem %s0, 48
  %s97 = sld [smem:[%s96]]
  %s98 = scalar_lea.smem %s0, 49
  %s99 = sld [smem:[%s98]]
  %s100 = scalar_lea.smem %s0, 50
  %s101 = sld [smem:[%s100]]
  %s102 = scalar_lea.smem %s0, 51
  %s103 = sld [smem:[%s102]]
  %s104 = scalar_lea.smem %s0, 52
  %s105 = sld [smem:[%s104]]
  %s106 = scalar_lea.smem %s0, 53
  %s107 = sld [smem:[%s106]]
  %s108 = scalar_lea.smem %s0, 54
  %s109 = sld [smem:[%s108]]
  %s110 = scalar_lea.smem %s0, 55
  %s111 = sld [smem:[%s110]]
  %s112 = scalar_lea.smem %s0, 56
  %s113 = sld [smem:[%s112]]
  %s114 = scalar_lea.smem %s0, 57
  %s115 = sld [smem:[%s114]]
  %s116 = scalar_lea.smem %s0, 58
  %s117 = sld [smem:[%s116]]
  %118 = xla_tuple %s115, %s117
  %s119 = sld [smem:[#allocation0]]
  $region445: #{tpu_custom_call.1} parent=0
    _
  %s121 = ssub.s32 1, %s119
  %s122 = scalar_select 0, %s121, %s119
  $region1: #{tpu_custom_call.1} parent=0
    #allocation2 [shape = 'u8[1024]{0}', space=vmem, size = 0x400, scoped, tag = 'input window, operand 1, single buffered']
    #allocation3 [shape = 's32[2]{0}', space=sflag, size = 0x8, scoped, tag = 'scoped memory for tpu_custom_call.1']
    #allocation4 [shape = 's32[2]{0}', space=sflag, size = 0x8, scoped, tag = 'scoped memory for tpu_custom_call.1']
    #allocation5 [shape = 'u8[65536]{0}', space=vmem, size = 0x10000, scoped, tag = 'input window, operand 4, single buffered']
    #allocation6 [shape = 's32[1]{0}', space=sflag, size = 0x4, scoped, tag = 'scoped memory for tpu_custom_call.1']
    #allocation7 [shape = 'u8[8192]{0}', space=vmem, size = 0x2000, scoped, tag = 'input window, operand 6, single buffered']
    #allocation8 [shape = 'u8[512]{0}', space=vmem, size = 0x400, scoped, tag = 'input window, operand 9, single buffered']
    #allocation9 [shape = 's32[1]{0}', space=sflag, size = 0x4, scoped, tag = 'scoped memory for tpu_custom_call.1']
    #allocation10 [shape = 'u8[65536]{0}', space=vmem, size = 0x10000, scoped, tag = 'input window, operand 10, single buffered']
    #allocation11 [shape = 'u8[65536]{0}', space=vmem, size = 0x10000, scoped, tag = 'input window, operand 11, single buffered']
    #allocation12 [shape = 's32[1]{0}', space=sflag, size = 0x4, scoped, tag = 'scoped memory for tpu_custom_call.1']
    #allocation13 [shape = 'u8[65536]{0}', space=vmem, size = 0x10000, scoped, tag = 'input window, operand 12, single buffered']
    #allocation14 [shape = 'u8[8192]{0}', space=vmem, size = 0x2000, scoped, tag = 'input window, operand 13, single buffered']
    #allocation15 [shape = 's32[1]{0}', space=sflag, size = 0x4, scoped, tag = 'scoped memory for tpu_custom_call.1']
    #allocation16 [shape = 'u8[8192]{0}', space=vmem, size = 0x2000, scoped, tag = 'input window, operand 14, single buffered']
    #allocation17 [shape = 'u8[1024]{0}', space=vmem, size = 0x400, scoped, tag = 'input window, operand 15, single buffered']
    #allocation18 [shape = 's32[1]{0}', space=sflag, size = 0x4, scoped, tag = 'scoped memory for tpu_custom_call.1']
    #allocation19 [shape = 'u8[131072]{0}', space=vmem, size = 0x20000, scoped, tag = 'input window, operand 16, single buffered']
    #allocation20 [shape = 'u8[512]{0}', space=vmem, size = 0x400, scoped, tag = 'input window, operand 17, single buffered']
    #allocation21 [shape = 's32[1]{0}', space=sflag, size = 0x4, scoped, tag = 'scoped memory for tpu_custom_call.1']
    #allocation22 [shape = 'u8[512]{0}', space=vmem, size = 0x400, scoped, tag = 'input window, operand 19, single buffered']
    #allocation23 [shape = 'u8[32768]{0}', space=vmem, size = 0x8000, scoped, tag = 'input window, operand 21, single buffered']
    #allocation24 [shape = 's32[1]{0}', space=sflag, size = 0x4, scoped, tag = 'scoped memory for tpu_custom_call.1']
    #allocation25 [shape = 'u8[32768]{0}', space=vmem, size = 0x8000, scoped, tag = 'input window, operand 22, single buffered']
    #allocation26 [shape = 'u8[4096]{0}', space=vmem, size = 0x1000, scoped, tag = 'input window, operand 23, single buffered']
    #allocation27 [shape = 's32[1]{0}', space=sflag, size = 0x4, scoped, tag = 'scoped memory for tpu_custom_call.1']
    #allocation28 [shape = 'u8[4096]{0}', space=vmem, size = 0x1000, scoped, tag = 'input window, operand 24, single buffered']
    #allocation29 [shape = 'u8[512]{0}', space=vmem, size = 0x400, scoped, tag = 'input window, operand 25, single buffered']
    #allocation30 [shape = 's32[1]{0}', space=sflag, size = 0x4, scoped, tag = 'scoped memory for tpu_custom_call.1']
    #allocation31 [shape = 'u8[32768]{0}', space=vmem, size = 0x8000, scoped, tag = 'input window, operand 26, single buffered']
    #allocation32 [shape = 'u8[512]{0}', space=vmem, size = 0x400, scoped, tag = 'input window, operand 27, single buffered']
    #allocation33 [shape = 's32[1]{0}', space=sflag, size = 0x4, scoped, tag = 'scoped memory for tpu_custom_call.1']
    #allocation34 [shape = 'u8[131072]{0}', space=vmem, size = 0x20000, scoped, tag = 'input window, operand 28, single buffered']
    #allocation35 [shape = 'u8[512]{0}', space=vmem, size = 0x400, scoped, tag = 'input window, operand 29, single buffered']
    #allocation36 [shape = 's32[1]{0}', space=sflag, size = 0x4, scoped, tag = 'scoped memory for tpu_custom_call.1']
    #allocation37 [shape = 'u8[65536]{0}', space=vmem, size = 0x10000, scoped, tag = 'input window, operand 30, single buffered']
    #allocation38 [shape = 'u8[65536]{0}', space=vmem, size = 0x10000, scoped, tag = 'input window, operand 31, single buffered']
    #allocation39 [shape = 's32[1]{0}', space=sflag, size = 0x4, scoped, tag = 'scoped memory for tpu_custom_call.1']
    #allocation40 [shape = 'u8[65536]{0}', space=vmem, size = 0x10000, scoped, tag = 'input window, operand 32, single buffered']
    #allocation41 [shape = 'u8[8192]{0}', space=vmem, size = 0x2000, scoped, tag = 'input window, operand 33, single buffered']
    #allocation42 [shape = 's32[1]{0}', space=sflag, size = 0x4, scoped, tag = 'scoped memory for tpu_custom_call.1']
    #allocation43 [shape = 'u8[8192]{0}', space=vmem, size = 0x2000, scoped, tag = 'input window, operand 34, single buffered']
    #allocation44 [shape = 'u8[512]{0}', space=vmem, size = 0x400, scoped, tag = 'input window, operand 35, single buffered']
    #allocation45 [shape = 's32[1]{0}', space=sflag, size = 0x4, scoped, tag = 'scoped memory for tpu_custom_call.1']
    #allocation46 [shape = 'u8[65536]{0}', space=vmem, size = 0x10000, scoped, tag = 'input window, operand 36, single buffered']
    #allocation47 [shape = 'u8[131072]{0}', space=vmem, size = 0x20000, scoped, tag = 'input window, operand 37, single buffered']
    #allocation48 [shape = 's32[1]{0}', space=sflag, size = 0x4, scoped, tag = 'scoped memory for tpu_custom_call.1']
    #allocation49 [shape = 'u8[4096]{0}', space=vmem, size = 0x1000, scoped, tag = 'input window, operand 38, single buffered']
    #allocation50 [shape = 'u8[4096]{0}', space=vmem, size = 0x1000, scoped, tag = 'input window, operand 39, single buffered']
    #allocation51 [shape = 's32[1]{0}', space=sflag, size = 0x4, scoped, tag = 'scoped memory for tpu_custom_call.1']
    #allocation52 [shape = 'u8[512]{0}', space=vmem, size = 0x400, scoped, tag = 'input window, operand 40, single buffered']
    #allocation53 [shape = 'u8[512]{0}', space=vmem, size = 0x400, scoped, tag = 'input window, operand 42, single buffered']
    #allocation54 [shape = 's32[1]{0}', space=sflag, size = 0x4, scoped, tag = 'scoped memory for tpu_custom_call.1']
    #allocation55 [shape = 'u8[512]{0}', space=vmem, size = 0x400, scoped, tag = 'input window, operand 44, single buffered']
    #allocation56 [shape = 'u8[32768]{0}', space=vmem, size = 0x8000, scoped, tag = 'input window, operand 45, single buffered']
    #allocation57 [shape = 's32[1]{0}', space=sflag, size = 0x4, scoped, tag = 'scoped memory for tpu_custom_call.1']
    #allocation58 [shape = 'u8[32768]{0}', space=vmem, size = 0x8000, scoped, tag = 'input window, operand 46, single buffered']
    #allocation59 [shape = 'u8[32768]{0}', space=vmem, size = 0x8000, scoped, tag = 'input window, operand 47, single buffered']
    #allocation60 [shape = 's32[1]{0}', space=sflag, size = 0x4, scoped, tag = 'scoped memory for tpu_custom_call.1']
    #allocation61 [shape = 'u8[4096]{0}', space=vmem, size = 0x1000, scoped, tag = 'input window, operand 48, single buffered']
    #allocation62 [shape = 'u8[4096]{0}', space=vmem, size = 0x1000, scoped, tag = 'input window, operand 49, single buffered']
    #allocation63 [shape = 's32[1]{0}', space=sflag, size = 0x4, scoped, tag = 'scoped memory for tpu_custom_call.1']
    #allocation64 [shape = 'u8[512]{0}', space=vmem, size = 0x400, scoped, tag = 'input window, operand 50, single buffered']
    #allocation65 [shape = 'u8[32768]{0}', space=vmem, size = 0x8000, scoped, tag = 'input window, operand 51, single buffered']
    #allocation66 [shape = 's32[1]{0}', space=sflag, size = 0x4, scoped, tag = 'scoped memory for tpu_custom_call.1']
    #allocation67 [shape = 'u8[2048]{0}', space=vmem, size = 0x800, scoped, tag = 'input window, operand 54, single buffered']
    #allocation68 [shape = 'u8[512]{0}', space=vmem, size = 0x400, scoped, tag = 'input window, operand 55, single buffered']
    #allocation69 [shape = 's32[1]{0}', space=sflag, size = 0x4, scoped, tag = 'scoped memory for tpu_custom_call.1']
    #allocation70 [shape = 'u8[8192]{0}', space=vmem, size = 0x2000, scoped, tag = 'output window, operand 0']
    #allocation71 [shape = 'u8[4096]{0}', space=vmem, size = 0x1000, scoped, tag = 'output window, operand 1']
    #allocation72 [shape = 's32[2]{0}', space=sflag, size = 0x8, scoped, tag = 'scoped memory for tpu_custom_call.1']
    %123 = vsyncpa [#allocation3], 0
    %124 = vsyncpa [#allocation6], 0
    %125 = vsyncpa [#allocation9], 0
    %126 = vsyncpa [#allocation12], 0
    %127 = vsyncpa [#allocation15], 0
    %128 = vsyncpa [#allocation18], 0
    %129 = vsyncpa [#allocation21], 0
    %130 = vsyncpa [#allocation24], 0
    %131 = vsyncpa [#allocation27], 0
    %132 = vsyncpa [#allocation30], 0
    %133 = vsyncpa [#allocation33], 0
    %134 = vsyncpa [#allocation36], 0
    %135 = vsyncpa [#allocation39], 0
    %136 = vsyncpa [#allocation42], 0
    %137 = vsyncpa [#allocation45], 0
    %138 = vsyncpa [#allocation48], 0
    %139 = vsyncpa [#allocation51], 0
    %140 = vsyncpa [#allocation54], 0
    %141 = vsyncpa [#allocation57], 0
    %142 = vsyncpa [#allocation60], 0
    %143 = vsyncpa [#allocation63], 0
    %144 = vsyncpa [#allocation66], 0
    %145 = vsyncpa [#allocation69], 0
    %146 = vsyncpa [#allocation4], 0
    %s147 = scalar_lea.sflag [#allocation4], 1
    %148 = vsyncpa %s147, 0
    %149 = vsyncpa [#allocation72], 0
    %s150 = scalar_lea.sflag [#allocation72], 1
    %151 = vsyncpa %s150, 0
    loop: start=0, step=1, limit=4
    $region2: #{tpu_custom_call.1} parent=1 // loop_pre_header
      _
    $region3: #{tpu_custom_call.1} parent=1 // loop_header
      %s153 = sphi 0, %s157
      %p154 = scmp.ge.s32.totalorder %s153, 4
      %s163 = sphi 0, %s165
      %s166 = sphi 0, %s163
      %s167 = sphi 0, %s166
      %s183 = sphi 0, %s167
      %s187 = sphi 0, %s187
      %s189 = sphi 0, %s187
      %s190 = sphi 0, %s189
      %s204 = sphi 0, %s190
      %s208 = sphi 0, %s208
      %s210 = sphi 0, %s208
      %s211 = sphi 0, %s210
      %s225 = sphi 0, %s211
      %s229 = sphi 0, %s229
      %s231 = sphi 0, %s229
      %s232 = sphi 0, %s231
      %s246 = sphi 0, %s232
      %s250 = sphi 0, %s250
      %s252 = sphi 0, %s250
      %s253 = sphi 0, %s252
      %s267 = sphi 0, %s253
      %s271 = sphi 0, %s271
      %s273 = sphi 0, %s271
      %s274 = sphi 0, %s273
      %s288 = sphi 0, %s274
      %s292 = sphi 0, %s292
      %s294 = sphi 0, %s292
      %s295 = sphi 0, %s294
      %s309 = sphi 0, %s295
      %s313 = sphi 0, %s313
      %s315 = sphi 0, %s313
      %s316 = sphi 0, %s315
      %s330 = sphi 0, %s316
      %s334 = sphi 0, %s334
      %s336 = sphi 0, %s334
      %s337 = sphi 0, %s336
      %s351 = sphi 0, %s337
      %s355 = sphi 0, %s355
      %s357 = sphi 0, %s355
      %s358 = sphi 0, %s357
      %s372 = sphi 0, %s358
      %s376 = sphi 0, %s376
      %s378 = sphi 0, %s376
      %s379 = sphi 0, %s378
      %s393 = sphi 0, %s379
      %s397 = sphi 0, %s397
      %s399 = sphi 0, %s397
      %s400 = sphi 0, %s399
      %s414 = sphi 0, %s400
      %s418 = sphi 0, %s418
      %s420 = sphi 0, %s418
      %s421 = sphi 0, %s420
      %s435 = sphi 0, %s421
      %s439 = sphi 0, %s439
      %s441 = sphi 0, %s439
      %s442 = sphi 0, %s441
      %s456 = sphi 0, %s442
      %s460 = sphi 0, %s460
      %s462 = sphi 0, %s460
      %s463 = sphi 0, %s462
      %s477 = sphi 0, %s463
      %s481 = sphi 0, %s481
      %s483 = sphi 0, %s481
      %s484 = sphi 0, %s483
      %s498 = sphi 0, %s484
      %s502 = sphi 0, %s502
      %s504 = sphi 0, %s502
      %s505 = sphi 0, %s504
      %s519 = sphi 0, %s505
      %s523 = sphi 0, %s523
      %s525 = sphi 0, %s523
      %s526 = sphi 0, %s525
      %s540 = sphi 0, %s526
      %s544 = sphi 0, %s544
      %s546 = sphi 0, %s544
      %s547 = sphi 0, %s546
      %s561 = sphi 0, %s547
      %s565 = sphi 0, %s565
      %s567 = sphi 0, %s565
      %s568 = sphi 0, %s567
      %s582 = sphi 0, %s568
      %s586 = sphi 0, %s586
      %s588 = sphi 0, %s586
      %s589 = sphi 0, %s588
      %s603 = sphi 0, %s589
      %s607 = sphi 0, %s607
      %s609 = sphi 0, %s607
      %s610 = sphi 0, %s609
      %s624 = sphi 0, %s610
      %s628 = sphi 0, %s628
      %s630 = sphi 0, %s628
      %s631 = sphi 0, %s630
      %s645 = sphi 0, %s631
      %s649 = sphi 0, %s649
      %s651 = sphi 0, %s649
      %s652 = sphi 0, %s651
      %s666 = sphi 0, %s652
      %s670 = sphi 0, %s670
      %s672 = sphi 0, %s670
      %s673 = sphi 0, %s672
      %s687 = sphi 0, %s673
      %s691 = sphi 0, %s691
      %s693 = sphi 0, %s691
      %s694 = sphi 0, %s693
      %s708 = sphi 0, %s694
      %s712 = sphi 0, %s712
      %s714 = sphi 0, %s712
      %s715 = sphi 0, %s714
      %s729 = sphi 0, %s715
      %s733 = sphi 0, %s733
      %s735 = sphi 0, %s733
      %s736 = sphi 0, %s735
      %s750 = sphi 0, %s736
      %s754 = sphi 0, %s754
      %s756 = sphi 0, %s754
      %s757 = sphi 0, %s756
      %s771 = sphi 0, %s757
      %s775 = sphi 0, %s775
      %s777 = sphi 0, %s775
      %s778 = sphi 0, %s777
      %s792 = sphi 0, %s778
      %s796 = sphi 0, %s796
      %s798 = sphi 0, %s796
      %s799 = sphi 0, %s798
      %s813 = sphi 0, %s799
      %s817 = sphi 0, %s817
      %s819 = sphi 0, %s817
      %s820 = sphi 0, %s819
      %s834 = sphi 0, %s820
      %s838 = sphi 0, %s838
      %s840 = sphi 0, %s838
      %s841 = sphi 0, %s840
      %s855 = sphi 0, %s841
      %s859 = sphi 0, %s859
      %s861 = sphi 0, %s859
      %s862 = sphi 0, %s861
      %s876 = sphi 0, %s862
      %s880 = sphi 0, %s880
      %s882 = sphi 0, %s880
      %s883 = sphi 0, %s882
      %s897 = sphi 0, %s883
      %s901 = sphi 0, %s901
      %s903 = sphi 0, %s901
      %s904 = sphi 0, %s903
      %s918 = sphi 0, %s904
      %s922 = sphi 0, %s922
      %s924 = sphi 0, %s922
      %s925 = sphi 0, %s924
      %s939 = sphi 0, %s925
      %s943 = sphi 0, %s943
      %s945 = sphi 0, %s943
      %s946 = sphi 0, %s945
      %s960 = sphi 0, %s946
      %s964 = sphi 0, %s964
      %s966 = sphi 0, %s964
      %s967 = sphi 0, %s966
      %s981 = sphi 0, %s967
      %s985 = sphi 0, %s985
      %s987 = sphi 0, %s985
      %s988 = sphi 0, %s987
      %s1002 = sphi 0, %s988
      %s1006 = sphi 0, %s1006
      %s1008 = sphi 0, %s1006
      %s1009 = sphi 0, %s1008
      %s1023 = sphi 0, %s1009
      %s1027 = sphi 0, %s1027
      %s1029 = sphi 0, %s1027
      %s1030 = sphi 0, %s1029
      %s1044 = sphi 0, %s1030
      %s1048 = sphi 0, %s1048
      %s1050 = sphi 0, %s1048
      %s1051 = sphi 0, %s1050
      %s1065 = sphi 0, %s1051
      %s1069 = sphi 0, %s1069
      %s1071 = sphi 0, %s1069
      %s1072 = sphi 0, %s1071
      %s1086 = sphi 0, %s1072
      %s1090 = sphi 0, %s1090
      %s1092 = sphi 0, %s1090
      %s1093 = sphi 0, %s1092
      %s1107 = sphi 0, %s1093
      %s1111 = sphi 0, %s1111
      %s1113 = sphi 0, %s1111
      %s1114 = sphi 0, %s1113
      %s1128 = sphi 0, %s1114
      %s1132 = sphi 0, %s1132
      %s1134 = sphi 0, %s1132
      %s1135 = sphi 0, %s1134
      %s1149 = sphi 0, %s1135
      %s1153 = sphi 0, %s1153
      %s1155 = sphi 0, %s1153
      %s1156 = sphi 0, %s1155
      %s1170 = sphi 0, %s1156
      %s1174 = sphi 0, %s1174
      %s1176 = sphi 0, %s1174
      %s1177 = sphi 0, %s1176
      %s1191 = sphi 0, %s1177
      %s1195 = sphi 0, %s1195
      %s1197 = sphi 0, %s1195
      %s1198 = sphi 0, %s1197
      %s1212 = sphi 0, %s1198
      %s1216 = sphi 0, %s1216
      %s1218 = sphi 0, %s1216
      %s1219 = sphi 0, %s1218
      %s1233 = sphi 0, %s1219
      %s1237 = sphi 0, %s1237
      %s1239 = sphi 0, %s1237
      %s1240 = sphi 0, %s1239
      %s1254 = sphi 0, %s1240
      %s1258 = sphi 0, %s1258
      %s1260 = sphi 0, %s1258
      %s1261 = sphi 0, %s1260
      %s1275 = sphi 0, %s1261
      %s1279 = sphi 0, %s1279
      %s1281 = sphi 0, %s1279
      %s1282 = sphi 0, %s1281
      %s1296 = sphi 0, %s1282
      %s1300 = sphi 0, %s1300
      %s1302 = sphi 0, %s1300
      %s1303 = sphi 0, %s1302
      %s1317 = sphi 0, %s1303
      %s1321 = sphi 0, %s1321
      %s1323 = sphi 0, %s1321
      %s1324 = sphi 0, %s1323
      %s1338 = sphi 0, %s1324
      %s1342 = sphi 0, %s1342
      %s1344 = sphi 0, %s1342
      %s1345 = sphi 0, %s1344
      %s1359 = sphi 0, %s1345
      %s1365 = sphi 0, %s1367
      %s1368 = sphi 0, %s1365
      %s1369 = sphi 0, %s1368
      %s1385 = sphi 0, %s1369
      %s1391 = sphi 0, %s1393
      %s1394 = sphi 0, %s1391
      %s1395 = sphi 0, %s1394
      %s1411 = sphi 0, %s1395
    $region4: #{tpu_custom_call.1} parent=1 // loop_header_branch
      %156 = sbr.rel (%p154) target = $region8
    $region5: #{tpu_custom_call.1} parent=1 // loop_body
      %s158 = ssub.s32 %s153, 1
      %s159 = ssub.s32 %s153, 2
      %s160 = sadd.s32 %s153, 1
      %s161 = ssub.s32 %s153, %s160
      %p162 = scmp.eq.s32.totalorder %s161, 0
      %s164 = sadd.s32 %s163, 1
      %s165 = scalar_select %p162, %s163, %s164
      %p168 = pneg %p162
      %p169 = scmp.eq.s32.totalorder %s153, 1
      %p170 = por %p168, %p169
      %p171 = scmp.ne.s32.totalorder %s163, %s166
      %p172 = scmp.eq.s32.totalorder %s153, 0
      %p173 = por %p171, %p172
      %p174 = scmp.ne.s32.totalorder %s163, %s166
      %p175 = scmp.eq.s32.totalorder %s158, 1
      %p176 = por %p174, %p175
      %p177 = scmp.ne.s32.totalorder %s166, %s167
      %p178 = scmp.eq.s32.totalorder %s158, 0
      %p179 = por %p177, %p178
      %p180 = scmp.ne.s32.totalorder %s166, %s167
      %p181 = scmp.eq.s32.totalorder %s159, 1
      %p182 = por %p180, %p181
      %p184 = scmp.ne.s32.totalorder %s167, %s183
      %p185 = scmp.eq.s32.totalorder %s159, 0
      %p186 = por %p184, %p185
      %s188 = sadd.s32 %s187, 1
      %p191 = scmp.eq.s32.totalorder %s153, 1
      %p192 = scmp.ne.s32.totalorder %s187, %s189
      %p193 = scmp.eq.s32.totalorder %s153, 0
      %p194 = por %p192, %p193
      %p195 = scmp.ne.s32.totalorder %s187, %s189
      %p196 = scmp.eq.s32.totalorder %s158, 1
      %p197 = por %p195, %p196
      %p198 = scmp.ne.s32.totalorder %s189, %s190
      %p199 = scmp.eq.s32.totalorder %s158, 0
      %p200 = por %p198, %p199
      %p201 = scmp.ne.s32.totalorder %s189, %s190
      %p202 = scmp.eq.s32.totalorder %s159, 1
      %p203 = por %p201, %p202
      %p205 = scmp.ne.s32.totalorder %s190, %s204
      %p206 = scmp.eq.s32.totalorder %s159, 0
      %p207 = por %p205, %p206
      %s209 = sadd.s32 %s208, 1
      %p212 = scmp.eq.s32.totalorder %s153, 1
      %p213 = scmp.ne.s32.totalorder %s208, %s210
      %p214 = scmp.eq.s32.totalorder %s153, 0
      %p215 = por %p213, %p214
      %p216 = scmp.ne.s32.totalorder %s208, %s210
      %p217 = scmp.eq.s32.totalorder %s158, 1
      %p218 = por %p216, %p217
      %p219 = scmp.ne.s32.totalorder %s210, %s211
      %p220 = scmp.eq.s32.totalorder %s158, 0
      %p221 = por %p219, %p220
      %p222 = scmp.ne.s32.totalorder %s210, %s211
      %p223 = scmp.eq.s32.totalorder %s159, 1
      %p224 = por %p222, %p223
      %p226 = scmp.ne.s32.totalorder %s211, %s225
      %p227 = scmp.eq.s32.totalorder %s159, 0
      %p228 = por %p226, %p227
      %s230 = sadd.s32 %s229, 1
      %p233 = scmp.eq.s32.totalorder %s153, 1
      %p234 = scmp.ne.s32.totalorder %s229, %s231
      %p235 = scmp.eq.s32.totalorder %s153, 0
      %p236 = por %p234, %p235
      %p237 = scmp.ne.s32.totalorder %s229, %s231
      %p238 = scmp.eq.s32.totalorder %s158, 1
      %p239 = por %p237, %p238
      %p240 = scmp.ne.s32.totalorder %s231, %s232
      %p241 = scmp.eq.s32.totalorder %s158, 0
      %p242 = por %p240, %p241
      %p243 = scmp.ne.s32.totalorder %s231, %s232
      %p244 = scmp.eq.s32.totalorder %s159, 1
      %p245 = por %p243, %p244
      %p247 = scmp.ne.s32.totalorder %s232, %s246
      %p248 = scmp.eq.s32.totalorder %s159, 0
      %p249 = por %p247, %p248
      %s251 = sadd.s32 %s250, 1
      %p254 = scmp.eq.s32.totalorder %s153, 1
      %p255 = scmp.ne.s32.totalorder %s250, %s252
      %p256 = scmp.eq.s32.totalorder %s153, 0
      %p257 = por %p255, %p256
      %p258 = scmp.ne.s32.totalorder %s250, %s252
      %p259 = scmp.eq.s32.totalorder %s158, 1
      %p260 = por %p258, %p259
      %p261 = scmp.ne.s32.totalorder %s252, %s253
      %p262 = scmp.eq.s32.totalorder %s158, 0
      %p263 = por %p261, %p262
      %p264 = scmp.ne.s32.totalorder %s252, %s253
      %p265 = scmp.eq.s32.totalorder %s159, 1
      %p266 = por %p264, %p265
      %p268 = scmp.ne.s32.totalorder %s253, %s267
      %p269 = scmp.eq.s32.totalorder %s159, 0
      %p270 = por %p268, %p269
      %s272 = sadd.s32 %s271, 1
      %p275 = scmp.eq.s32.totalorder %s153, 1
      %p276 = scmp.ne.s32.totalorder %s271, %s273
      %p277 = scmp.eq.s32.totalorder %s153, 0
      %p278 = por %p276, %p277
      %p279 = scmp.ne.s32.totalorder %s271, %s273
      %p280 = scmp.eq.s32.totalorder %s158, 1
      %p281 = por %p279, %p280
      %p282 = scmp.ne.s32.totalorder %s273, %s274
      %p283 = scmp.eq.s32.totalorder %s158, 0
      %p284 = por %p282, %p283
      %p285 = scmp.ne.s32.totalorder %s273, %s274
      %p286 = scmp.eq.s32.totalorder %s159, 1
      %p287 = por %p285, %p286
      %p289 = scmp.ne.s32.totalorder %s274, %s288
      %p290 = scmp.eq.s32.totalorder %s159, 0
      %p291 = por %p289, %p290
      %s293 = sadd.s32 %s292, 1
      %p296 = scmp.eq.s32.totalorder %s153, 1
      %p297 = scmp.ne.s32.totalorder %s292, %s294
      %p298 = scmp.eq.s32.totalorder %s153, 0
      %p299 = por %p297, %p298
      %p300 = scmp.ne.s32.totalorder %s292, %s294
      %p301 = scmp.eq.s32.totalorder %s158, 1
      %p302 = por %p300, %p301
      %p303 = scmp.ne.s32.totalorder %s294, %s295
      %p304 = scmp.eq.s32.totalorder %s158, 0
      %p305 = por %p303, %p304
      %p306 = scmp.ne.s32.totalorder %s294, %s295
      %p307 = scmp.eq.s32.totalorder %s159, 1
      %p308 = por %p306, %p307
      %p310 = scmp.ne.s32.totalorder %s295, %s309
      %p311 = scmp.eq.s32.totalorder %s159, 0
      %p312 = por %p310, %p311
      %s314 = sadd.s32 %s313, 1
      %p317 = scmp.eq.s32.totalorder %s153, 1
      %p318 = scmp.ne.s32.totalorder %s313, %s315
      %p319 = scmp.eq.s32.totalorder %s153, 0
      %p320 = por %p318, %p319
      %p321 = scmp.ne.s32.totalorder %s313, %s315
      %p322 = scmp.eq.s32.totalorder %s158, 1
      %p323 = por %p321, %p322
      %p324 = scmp.ne.s32.totalorder %s315, %s316
      %p325 = scmp.eq.s32.totalorder %s158, 0
      %p326 = por %p324, %p325
      %p327 = scmp.ne.s32.totalorder %s315, %s316
      %p328 = scmp.eq.s32.totalorder %s159, 1
      %p329 = por %p327, %p328
      %p331 = scmp.ne.s32.totalorder %s316, %s330
      %p332 = scmp.eq.s32.totalorder %s159, 0
      %p333 = por %p331, %p332
      %s335 = sadd.s32 %s334, 1
      %p338 = scmp.eq.s32.totalorder %s153, 1
      %p339 = scmp.ne.s32.totalorder %s334, %s336
      %p340 = scmp.eq.s32.totalorder %s153, 0
      %p341 = por %p339, %p340
      %p342 = scmp.ne.s32.totalorder %s334, %s336
      %p343 = scmp.eq.s32.totalorder %s158, 1
      %p344 = por %p342, %p343
      %p345 = scmp.ne.s32.totalorder %s336, %s337
      %p346 = scmp.eq.s32.totalorder %s158, 0
      %p347 = por %p345, %p346
      %p348 = scmp.ne.s32.totalorder %s336, %s337
      %p349 = scmp.eq.s32.totalorder %s159, 1
      %p350 = por %p348, %p349
      %p352 = scmp.ne.s32.totalorder %s337, %s351
      %p353 = scmp.eq.s32.totalorder %s159, 0
      %p354 = por %p352, %p353
      %s356 = sadd.s32 %s355, 1
      %p359 = scmp.eq.s32.totalorder %s153, 1
      %p360 = scmp.ne.s32.totalorder %s355, %s357
      %p361 = scmp.eq.s32.totalorder %s153, 0
      %p362 = por %p360, %p361
      %p363 = scmp.ne.s32.totalorder %s355, %s357
      %p364 = scmp.eq.s32.totalorder %s158, 1
      %p365 = por %p363, %p364
      %p366 = scmp.ne.s32.totalorder %s357, %s358
      %p367 = scmp.eq.s32.totalorder %s158, 0
      %p368 = por %p366, %p367
      %p369 = scmp.ne.s32.totalorder %s357, %s358
      %p370 = scmp.eq.s32.totalorder %s159, 1
      %p371 = por %p369, %p370
      %p373 = scmp.ne.s32.totalorder %s358, %s372
      %p374 = scmp.eq.s32.totalorder %s159, 0
      %p375 = por %p373, %p374
      %s377 = sadd.s32 %s376, 1
      %p380 = scmp.eq.s32.totalorder %s153, 1
      %p381 = scmp.ne.s32.totalorder %s376, %s378
      %p382 = scmp.eq.s32.totalorder %s153, 0
      %p383 = por %p381, %p382
      %p384 = scmp.ne.s32.totalorder %s376, %s378
      %p385 = scmp.eq.s32.totalorder %s158, 1
      %p386 = por %p384, %p385
      %p387 = scmp.ne.s32.totalorder %s378, %s379
      %p388 = scmp.eq.s32.totalorder %s158, 0
      %p389 = por %p387, %p388
      %p390 = scmp.ne.s32.totalorder %s378, %s379
      %p391 = scmp.eq.s32.totalorder %s159, 1
      %p392 = por %p390, %p391
      %p394 = scmp.ne.s32.totalorder %s379, %s393
      %p395 = scmp.eq.s32.totalorder %s159, 0
      %p396 = por %p394, %p395
      %s398 = sadd.s32 %s397, 1
      %p401 = scmp.eq.s32.totalorder %s153, 1
      %p402 = scmp.ne.s32.totalorder %s397, %s399
      %p403 = scmp.eq.s32.totalorder %s153, 0
      %p404 = por %p402, %p403
      %p405 = scmp.ne.s32.totalorder %s397, %s399
      %p406 = scmp.eq.s32.totalorder %s158, 1
      %p407 = por %p405, %p406
      %p408 = scmp.ne.s32.totalorder %s399, %s400
      %p409 = scmp.eq.s32.totalorder %s158, 0
      %p410 = por %p408, %p409
      %p411 = scmp.ne.s32.totalorder %s399, %s400
      %p412 = scmp.eq.s32.totalorder %s159, 1
      %p413 = por %p411, %p412
      %p415 = scmp.ne.s32.totalorder %s400, %s414
      %p416 = scmp.eq.s32.totalorder %s159, 0
      %p417 = por %p415, %p416
      %s419 = sadd.s32 %s418, 1
      %p422 = scmp.eq.s32.totalorder %s153, 1
      %p423 = scmp.ne.s32.totalorder %s418, %s420
      %p424 = scmp.eq.s32.totalorder %s153, 0
      %p425 = por %p423, %p424
      %p426 = scmp.ne.s32.totalorder %s418, %s420
      %p427 = scmp.eq.s32.totalorder %s158, 1
      %p428 = por %p426, %p427
      %p429 = scmp.ne.s32.totalorder %s420, %s421
      %p430 = scmp.eq.s32.totalorder %s158, 0
      %p431 = por %p429, %p430
      %p432 = scmp.ne.s32.totalorder %s420, %s421
      %p433 = scmp.eq.s32.totalorder %s159, 1
      %p434 = por %p432, %p433
      %p436 = scmp.ne.s32.totalorder %s421, %s435
      %p437 = scmp.eq.s32.totalorder %s159, 0
      %p438 = por %p436, %p437
      %s440 = sadd.s32 %s439, 1
      %p443 = scmp.eq.s32.totalorder %s153, 1
      %p444 = scmp.ne.s32.totalorder %s439, %s441
      %p445 = scmp.eq.s32.totalorder %s153, 0
      %p446 = por %p444, %p445
      %p447 = scmp.ne.s32.totalorder %s439, %s441
      %p448 = scmp.eq.s32.totalorder %s158, 1
      %p449 = por %p447, %p448
      %p450 = scmp.ne.s32.totalorder %s441, %s442
      %p451 = scmp.eq.s32.totalorder %s158, 0
      %p452 = por %p450, %p451
      %p453 = scmp.ne.s32.totalorder %s441, %s442
      %p454 = scmp.eq.s32.totalorder %s159, 1
      %p455 = por %p453, %p454
      %p457 = scmp.ne.s32.totalorder %s442, %s456
      %p458 = scmp.eq.s32.totalorder %s159, 0
      %p459 = por %p457, %p458
      %s461 = sadd.s32 %s460, 1
      %p464 = scmp.eq.s32.totalorder %s153, 1
      %p465 = scmp.ne.s32.totalorder %s460, %s462
      %p466 = scmp.eq.s32.totalorder %s153, 0
      %p467 = por %p465, %p466
      %p468 = scmp.ne.s32.totalorder %s460, %s462
      %p469 = scmp.eq.s32.totalorder %s158, 1
      %p470 = por %p468, %p469
      %p471 = scmp.ne.s32.totalorder %s462, %s463
      %p472 = scmp.eq.s32.totalorder %s158, 0
      %p473 = por %p471, %p472
      %p474 = scmp.ne.s32.totalorder %s462, %s463
      %p475 = scmp.eq.s32.totalorder %s159, 1
      %p476 = por %p474, %p475
      %p478 = scmp.ne.s32.totalorder %s463, %s477
      %p479 = scmp.eq.s32.totalorder %s159, 0
      %p480 = por %p478, %p479
      %s482 = sadd.s32 %s481, 1
      %p485 = scmp.eq.s32.totalorder %s153, 1
      %p486 = scmp.ne.s32.totalorder %s481, %s483
      %p487 = scmp.eq.s32.totalorder %s153, 0
      %p488 = por %p486, %p487
      %p489 = scmp.ne.s32.totalorder %s481, %s483
      %p490 = scmp.eq.s32.totalorder %s158, 1
      %p491 = por %p489, %p490
      %p492 = scmp.ne.s32.totalorder %s483, %s484
      %p493 = scmp.eq.s32.totalorder %s158, 0
      %p494 = por %p492, %p493
      %p495 = scmp.ne.s32.totalorder %s483, %s484
      %p496 = scmp.eq.s32.totalorder %s159, 1
      %p497 = por %p495, %p496
      %p499 = scmp.ne.s32.totalorder %s484, %s498
      %p500 = scmp.eq.s32.totalorder %s159, 0
      %p501 = por %p499, %p500
      %s503 = sadd.s32 %s502, 1
      %p506 = scmp.eq.s32.totalorder %s153, 1
      %p507 = scmp.ne.s32.totalorder %s502, %s504
      %p508 = scmp.eq.s32.totalorder %s153, 0
      %p509 = por %p507, %p508
      %p510 = scmp.ne.s32.totalorder %s502, %s504
      %p511 = scmp.eq.s32.totalorder %s158, 1
      %p512 = por %p510, %p511
      %p513 = scmp.ne.s32.totalorder %s504, %s505
      %p514 = scmp.eq.s32.totalorder %s158, 0
      %p515 = por %p513, %p514
      %p516 = scmp.ne.s32.totalorder %s504, %s505
      %p517 = scmp.eq.s32.totalorder %s159, 1
      %p518 = por %p516, %p517
      %p520 = scmp.ne.s32.totalorder %s505, %s519
      %p521 = scmp.eq.s32.totalorder %s159, 0
      %p522 = por %p520, %p521
      %s524 = sadd.s32 %s523, 1
      %p527 = scmp.eq.s32.totalorder %s153, 1
      %p528 = scmp.ne.s32.totalorder %s523, %s525
      %p529 = scmp.eq.s32.totalorder %s153, 0
      %p530 = por %p528, %p529
      %p531 = scmp.ne.s32.totalorder %s523, %s525
      %p532 = scmp.eq.s32.totalorder %s158, 1
      %p533 = por %p531, %p532
      %p534 = scmp.ne.s32.totalorder %s525, %s526
      %p535 = scmp.eq.s32.totalorder %s158, 0
      %p536 = por %p534, %p535
      %p537 = scmp.ne.s32.totalorder %s525, %s526
      %p538 = scmp.eq.s32.totalorder %s159, 1
      %p539 = por %p537, %p538
      %p541 = scmp.ne.s32.totalorder %s526, %s540
      %p542 = scmp.eq.s32.totalorder %s159, 0
      %p543 = por %p541, %p542
      %s545 = sadd.s32 %s544, 1
      %p548 = scmp.eq.s32.totalorder %s153, 1
      %p549 = scmp.ne.s32.totalorder %s544, %s546
      %p550 = scmp.eq.s32.totalorder %s153, 0
      %p551 = por %p549, %p550
      %p552 = scmp.ne.s32.totalorder %s544, %s546
      %p553 = scmp.eq.s32.totalorder %s158, 1
      %p554 = por %p552, %p553
      %p555 = scmp.ne.s32.totalorder %s546, %s547
      %p556 = scmp.eq.s32.totalorder %s158, 0
      %p557 = por %p555, %p556
      %p558 = scmp.ne.s32.totalorder %s546, %s547
      %p559 = scmp.eq.s32.totalorder %s159, 1
      %p560 = por %p558, %p559
      %p562 = scmp.ne.s32.totalorder %s547, %s561
      %p563 = scmp.eq.s32.totalorder %s159, 0
      %p564 = por %p562, %p563
      %s566 = sadd.s32 %s565, 1
      %p569 = scmp.eq.s32.totalorder %s153, 1
      %p570 = scmp.ne.s32.totalorder %s565, %s567
      %p571 = scmp.eq.s32.totalorder %s153, 0
      %p572 = por %p570, %p571
      %p573 = scmp.ne.s32.totalorder %s565, %s567
      %p574 = scmp.eq.s32.totalorder %s158, 1
      %p575 = por %p573, %p574
      %p576 = scmp.ne.s32.totalorder %s567, %s568
      %p577 = scmp.eq.s32.totalorder %s158, 0
      %p578 = por %p576, %p577
      %p579 = scmp.ne.s32.totalorder %s567, %s568
      %p580 = scmp.eq.s32.totalorder %s159, 1
      %p581 = por %p579, %p580
      %p583 = scmp.ne.s32.totalorder %s568, %s582
      %p584 = scmp.eq.s32.totalorder %s159, 0
      %p585 = por %p583, %p584
      %s587 = sadd.s32 %s586, 1
      %p590 = scmp.eq.s32.totalorder %s153, 1
      %p591 = scmp.ne.s32.totalorder %s586, %s588
      %p592 = scmp.eq.s32.totalorder %s153, 0
      %p593 = por %p591, %p592
      %p594 = scmp.ne.s32.totalorder %s586, %s588
      %p595 = scmp.eq.s32.totalorder %s158, 1
      %p596 = por %p594, %p595
      %p597 = scmp.ne.s32.totalorder %s588, %s589
      %p598 = scmp.eq.s32.totalorder %s158, 0
      %p599 = por %p597, %p598
      %p600 = scmp.ne.s32.totalorder %s588, %s589
      %p601 = scmp.eq.s32.totalorder %s159, 1
      %p602 = por %p600, %p601
      %p604 = scmp.ne.s32.totalorder %s589, %s603
      %p605 = scmp.eq.s32.totalorder %s159, 0
      %p606 = por %p604, %p605
      %s608 = sadd.s32 %s607, 1
      %p611 = scmp.eq.s32.totalorder %s153, 1
      %p612 = scmp.ne.s32.totalorder %s607, %s609
      %p613 = scmp.eq.s32.totalorder %s153, 0
      %p614 = por %p612, %p613
      %p615 = scmp.ne.s32.totalorder %s607, %s609
      %p616 = scmp.eq.s32.totalorder %s158, 1
      %p617 = por %p615, %p616
      %p618 = scmp.ne.s32.totalorder %s609, %s610
      %p619 = scmp.eq.s32.totalorder %s158, 0
      %p620 = por %p618, %p619
      %p621 = scmp.ne.s32.totalorder %s609, %s610
      %p622 = scmp.eq.s32.totalorder %s159, 1
      %p623 = por %p621, %p622
      %p625 = scmp.ne.s32.totalorder %s610, %s624
      %p626 = scmp.eq.s32.totalorder %s159, 0
      %p627 = por %p625, %p626
      %s629 = sadd.s32 %s628, 1
      %p632 = scmp.eq.s32.totalorder %s153, 1
      %p633 = scmp.ne.s32.totalorder %s628, %s630
      %p634 = scmp.eq.s32.totalorder %s153, 0
      %p635 = por %p633, %p634
      %p636 = scmp.ne.s32.totalorder %s628, %s630
      %p637 = scmp.eq.s32.totalorder %s158, 1
      %p638 = por %p636, %p637
      %p639 = scmp.ne.s32.totalorder %s630, %s631
      %p640 = scmp.eq.s32.totalorder %s158, 0
      %p641 = por %p639, %p640
      %p642 = scmp.ne.s32.totalorder %s630, %s631
      %p643 = scmp.eq.s32.totalorder %s159, 1
      %p644 = por %p642, %p643
      %p646 = scmp.ne.s32.totalorder %s631, %s645
      %p647 = scmp.eq.s32.totalorder %s159, 0
      %p648 = por %p646, %p647
      %s650 = sadd.s32 %s649, 1
      %p653 = scmp.eq.s32.totalorder %s153, 1
      %p654 = scmp.ne.s32.totalorder %s649, %s651
      %p655 = scmp.eq.s32.totalorder %s153, 0
      %p656 = por %p654, %p655
      %p657 = scmp.ne.s32.totalorder %s649, %s651
      %p658 = scmp.eq.s32.totalorder %s158, 1
      %p659 = por %p657, %p658
      %p660 = scmp.ne.s32.totalorder %s651, %s652
      %p661 = scmp.eq.s32.totalorder %s158, 0
      %p662 = por %p660, %p661
      %p663 = scmp.ne.s32.totalorder %s651, %s652
      %p664 = scmp.eq.s32.totalorder %s159, 1
      %p665 = por %p663, %p664
      %p667 = scmp.ne.s32.totalorder %s652, %s666
      %p668 = scmp.eq.s32.totalorder %s159, 0
      %p669 = por %p667, %p668
      %s671 = sadd.s32 %s670, 1
      %p674 = scmp.eq.s32.totalorder %s153, 1
      %p675 = scmp.ne.s32.totalorder %s670, %s672
      %p676 = scmp.eq.s32.totalorder %s153, 0
      %p677 = por %p675, %p676
      %p678 = scmp.ne.s32.totalorder %s670, %s672
      %p679 = scmp.eq.s32.totalorder %s158, 1
      %p680 = por %p678, %p679
      %p681 = scmp.ne.s32.totalorder %s672, %s673
      %p682 = scmp.eq.s32.totalorder %s158, 0
      %p683 = por %p681, %p682
      %p684 = scmp.ne.s32.totalorder %s672, %s673
      %p685 = scmp.eq.s32.totalorder %s159, 1
      %p686 = por %p684, %p685
      %p688 = scmp.ne.s32.totalorder %s673, %s687
      %p689 = scmp.eq.s32.totalorder %s159, 0
      %p690 = por %p688, %p689
      %s692 = sadd.s32 %s691, 1
      %p695 = scmp.eq.s32.totalorder %s153, 1
      %p696 = scmp.ne.s32.totalorder %s691, %s693
      %p697 = scmp.eq.s32.totalorder %s153, 0
      %p698 = por %p696, %p697
      %p699 = scmp.ne.s32.totalorder %s691, %s693
      %p700 = scmp.eq.s32.totalorder %s158, 1
      %p701 = por %p699, %p700
      %p702 = scmp.ne.s32.totalorder %s693, %s694
      %p703 = scmp.eq.s32.totalorder %s158, 0
      %p704 = por %p702, %p703
      %p705 = scmp.ne.s32.totalorder %s693, %s694
      %p706 = scmp.eq.s32.totalorder %s159, 1
      %p707 = por %p705, %p706
      %p709 = scmp.ne.s32.totalorder %s694, %s708
      %p710 = scmp.eq.s32.totalorder %s159, 0
      %p711 = por %p709, %p710
      %s713 = sadd.s32 %s712, 1
      %p716 = scmp.eq.s32.totalorder %s153, 1
      %p717 = scmp.ne.s32.totalorder %s712, %s714
      %p718 = scmp.eq.s32.totalorder %s153, 0
      %p719 = por %p717, %p718
      %p720 = scmp.ne.s32.totalorder %s712, %s714
      %p721 = scmp.eq.s32.totalorder %s158, 1
      %p722 = por %p720, %p721
      %p723 = scmp.ne.s32.totalorder %s714, %s715
      %p724 = scmp.eq.s32.totalorder %s158, 0
      %p725 = por %p723, %p724
      %p726 = scmp.ne.s32.totalorder %s714, %s715
      %p727 = scmp.eq.s32.totalorder %s159, 1
      %p728 = por %p726, %p727
      %p730 = scmp.ne.s32.totalorder %s715, %s729
      %p731 = scmp.eq.s32.totalorder %s159, 0
      %p732 = por %p730, %p731
      %s734 = sadd.s32 %s733, 1
      %p737 = scmp.eq.s32.totalorder %s153, 1
      %p738 = scmp.ne.s32.totalorder %s733, %s735
      %p739 = scmp.eq.s32.totalorder %s153, 0
      %p740 = por %p738, %p739
      %p741 = scmp.ne.s32.totalorder %s733, %s735
      %p742 = scmp.eq.s32.totalorder %s158, 1
      %p743 = por %p741, %p742
      %p744 = scmp.ne.s32.totalorder %s735, %s736
      %p745 = scmp.eq.s32.totalorder %s158, 0
      %p746 = por %p744, %p745
      %p747 = scmp.ne.s32.totalorder %s735, %s736
      %p748 = scmp.eq.s32.totalorder %s159, 1
      %p749 = por %p747, %p748
      %p751 = scmp.ne.s32.totalorder %s736, %s750
      %p752 = scmp.eq.s32.totalorder %s159, 0
      %p753 = por %p751, %p752
      %s755 = sadd.s32 %s754, 1
      %p758 = scmp.eq.s32.totalorder %s153, 1
      %p759 = scmp.ne.s32.totalorder %s754, %s756
      %p760 = scmp.eq.s32.totalorder %s153, 0
      %p761 = por %p759, %p760
      %p762 = scmp.ne.s32.totalorder %s754, %s756
      %p763 = scmp.eq.s32.totalorder %s158, 1
      %p764 = por %p762, %p763
      %p765 = scmp.ne.s32.totalorder %s756, %s757
      %p766 = scmp.eq.s32.totalorder %s158, 0
      %p767 = por %p765, %p766
      %p768 = scmp.ne.s32.totalorder %s756, %s757
      %p769 = scmp.eq.s32.totalorder %s159, 1
      %p770 = por %p768, %p769
      %p772 = scmp.ne.s32.totalorder %s757, %s771
      %p773 = scmp.eq.s32.totalorder %s159, 0
      %p774 = por %p772, %p773
      %s776 = sadd.s32 %s775, 1
      %p779 = scmp.eq.s32.totalorder %s153, 1
      %p780 = scmp.ne.s32.totalorder %s775, %s777
      %p781 = scmp.eq.s32.totalorder %s153, 0
      %p782 = por %p780, %p781
      %p783 = scmp.ne.s32.totalorder %s775, %s777
      %p784 = scmp.eq.s32.totalorder %s158, 1
      %p785 = por %p783, %p784
      %p786 = scmp.ne.s32.totalorder %s777, %s778
      %p787 = scmp.eq.s32.totalorder %s158, 0
      %p788 = por %p786, %p787
      %p789 = scmp.ne.s32.totalorder %s777, %s778
      %p790 = scmp.eq.s32.totalorder %s159, 1
      %p791 = por %p789, %p790
      %p793 = scmp.ne.s32.totalorder %s778, %s792
      %p794 = scmp.eq.s32.totalorder %s159, 0
      %p795 = por %p793, %p794
      %s797 = sadd.s32 %s796, 1
      %p800 = scmp.eq.s32.totalorder %s153, 1
      %p801 = scmp.ne.s32.totalorder %s796, %s798
      %p802 = scmp.eq.s32.totalorder %s153, 0
      %p803 = por %p801, %p802
      %p804 = scmp.ne.s32.totalorder %s796, %s798
      %p805 = scmp.eq.s32.totalorder %s158, 1
      %p806 = por %p804, %p805
      %p807 = scmp.ne.s32.totalorder %s798, %s799
      %p808 = scmp.eq.s32.totalorder %s158, 0
      %p809 = por %p807, %p808
      %p810 = scmp.ne.s32.totalorder %s798, %s799
      %p811 = scmp.eq.s32.totalorder %s159, 1
      %p812 = por %p810, %p811
      %p814 = scmp.ne.s32.totalorder %s799, %s813
      %p815 = scmp.eq.s32.totalorder %s159, 0
      %p816 = por %p814, %p815
      %s818 = sadd.s32 %s817, 1
      %p821 = scmp.eq.s32.totalorder %s153, 1
      %p822 = scmp.ne.s32.totalorder %s817, %s819
      %p823 = scmp.eq.s32.totalorder %s153, 0
      %p824 = por %p822, %p823
      %p825 = scmp.ne.s32.totalorder %s817, %s819
      %p826 = scmp.eq.s32.totalorder %s158, 1
      %p827 = por %p825, %p826
      %p828 = scmp.ne.s32.totalorder %s819, %s820
      %p829 = scmp.eq.s32.totalorder %s158, 0
      %p830 = por %p828, %p829
      %p831 = scmp.ne.s32.totalorder %s819, %s820
      %p832 = scmp.eq.s32.totalorder %s159, 1
      %p833 = por %p831, %p832
      %p835 = scmp.ne.s32.totalorder %s820, %s834
      %p836 = scmp.eq.s32.totalorder %s159, 0
      %p837 = por %p835, %p836
      %s839 = sadd.s32 %s838, 1
      %p842 = scmp.eq.s32.totalorder %s153, 1
      %p843 = scmp.ne.s32.totalorder %s838, %s840
      %p844 = scmp.eq.s32.totalorder %s153, 0
      %p845 = por %p843, %p844
      %p846 = scmp.ne.s32.totalorder %s838, %s840
      %p847 = scmp.eq.s32.totalorder %s158, 1
      %p848 = por %p846, %p847
      %p849 = scmp.ne.s32.totalorder %s840, %s841
      %p850 = scmp.eq.s32.totalorder %s158, 0
      %p851 = por %p849, %p850
      %p852 = scmp.ne.s32.totalorder %s840, %s841
      %p853 = scmp.eq.s32.totalorder %s159, 1
      %p854 = por %p852, %p853
      %p856 = scmp.ne.s32.totalorder %s841, %s855
      %p857 = scmp.eq.s32.totalorder %s159, 0
      %p858 = por %p856, %p857
      %s860 = sadd.s32 %s859, 1
      %p863 = scmp.eq.s32.totalorder %s153, 1
      %p864 = scmp.ne.s32.totalorder %s859, %s861
      %p865 = scmp.eq.s32.totalorder %s153, 0
      %p866 = por %p864, %p865
      %p867 = scmp.ne.s32.totalorder %s859, %s861
      %p868 = scmp.eq.s32.totalorder %s158, 1
      %p869 = por %p867, %p868
      %p870 = scmp.ne.s32.totalorder %s861, %s862
      %p871 = scmp.eq.s32.totalorder %s158, 0
      %p872 = por %p870, %p871
      %p873 = scmp.ne.s32.totalorder %s861, %s862
      %p874 = scmp.eq.s32.totalorder %s159, 1
      %p875 = por %p873, %p874
      %p877 = scmp.ne.s32.totalorder %s862, %s876
      %p878 = scmp.eq.s32.totalorder %s159, 0
      %p879 = por %p877, %p878
      %s881 = sadd.s32 %s880, 1
      %p884 = scmp.eq.s32.totalorder %s153, 1
      %p885 = scmp.ne.s32.totalorder %s880, %s882
      %p886 = scmp.eq.s32.totalorder %s153, 0
      %p887 = por %p885, %p886
      %p888 = scmp.ne.s32.totalorder %s880, %s882
      %p889 = scmp.eq.s32.totalorder %s158, 1
      %p890 = por %p888, %p889
      %p891 = scmp.ne.s32.totalorder %s882, %s883
      %p892 = scmp.eq.s32.totalorder %s158, 0
      %p893 = por %p891, %p892
      %p894 = scmp.ne.s32.totalorder %s882, %s883
      %p895 = scmp.eq.s32.totalorder %s159, 1
      %p896 = por %p894, %p895
      %p898 = scmp.ne.s32.totalorder %s883, %s897
      %p899 = scmp.eq.s32.totalorder %s159, 0
      %p900 = por %p898, %p899
      %s902 = sadd.s32 %s901, 1
      %p905 = scmp.eq.s32.totalorder %s153, 1
      %p906 = scmp.ne.s32.totalorder %s901, %s903
      %p907 = scmp.eq.s32.totalorder %s153, 0
      %p908 = por %p906, %p907
      %p909 = scmp.ne.s32.totalorder %s901, %s903
      %p910 = scmp.eq.s32.totalorder %s158, 1
      %p911 = por %p909, %p910
      %p912 = scmp.ne.s32.totalorder %s903, %s904
      %p913 = scmp.eq.s32.totalorder %s158, 0
      %p914 = por %p912, %p913
      %p915 = scmp.ne.s32.totalorder %s903, %s904
      %p916 = scmp.eq.s32.totalorder %s159, 1
      %p917 = por %p915, %p916
      %p919 = scmp.ne.s32.totalorder %s904, %s918
      %p920 = scmp.eq.s32.totalorder %s159, 0
      %p921 = por %p919, %p920
      %s923 = sadd.s32 %s922, 1
      %p926 = scmp.eq.s32.totalorder %s153, 1
      %p927 = scmp.ne.s32.totalorder %s922, %s924
      %p928 = scmp.eq.s32.totalorder %s153, 0
      %p929 = por %p927, %p928
      %p930 = scmp.ne.s32.totalorder %s922, %s924
      %p931 = scmp.eq.s32.totalorder %s158, 1
      %p932 = por %p930, %p931
      %p933 = scmp.ne.s32.totalorder %s924, %s925
      %p934 = scmp.eq.s32.totalorder %s158, 0
      %p935 = por %p933, %p934
      %p936 = scmp.ne.s32.totalorder %s924, %s925
      %p937 = scmp.eq.s32.totalorder %s159, 1
      %p938 = por %p936, %p937
      %p940 = scmp.ne.s32.totalorder %s925, %s939
      %p941 = scmp.eq.s32.totalorder %s159, 0
      %p942 = por %p940, %p941
      %s944 = sadd.s32 %s943, 1
      %p947 = scmp.eq.s32.totalorder %s153, 1
      %p948 = scmp.ne.s32.totalorder %s943, %s945
      %p949 = scmp.eq.s32.totalorder %s153, 0
      %p950 = por %p948, %p949
      %p951 = scmp.ne.s32.totalorder %s943, %s945
      %p952 = scmp.eq.s32.totalorder %s158, 1
      %p953 = por %p951, %p952
      %p954 = scmp.ne.s32.totalorder %s945, %s946
      %p955 = scmp.eq.s32.totalorder %s158, 0
      %p956 = por %p954, %p955
      %p957 = scmp.ne.s32.totalorder %s945, %s946
      %p958 = scmp.eq.s32.totalorder %s159, 1
      %p959 = por %p957, %p958
      %p961 = scmp.ne.s32.totalorder %s946, %s960
      %p962 = scmp.eq.s32.totalorder %s159, 0
      %p963 = por %p961, %p962
      %s965 = sadd.s32 %s964, 1
      %p968 = scmp.eq.s32.totalorder %s153, 1
      %p969 = scmp.ne.s32.totalorder %s964, %s966
      %p970 = scmp.eq.s32.totalorder %s153, 0
      %p971 = por %p969, %p970
      %p972 = scmp.ne.s32.totalorder %s964, %s966
      %p973 = scmp.eq.s32.totalorder %s158, 1
      %p974 = por %p972, %p973
      %p975 = scmp.ne.s32.totalorder %s966, %s967
      %p976 = scmp.eq.s32.totalorder %s158, 0
      %p977 = por %p975, %p976
      %p978 = scmp.ne.s32.totalorder %s966, %s967
      %p979 = scmp.eq.s32.totalorder %s159, 1
      %p980 = por %p978, %p979
      %p982 = scmp.ne.s32.totalorder %s967, %s981
      %p983 = scmp.eq.s32.totalorder %s159, 0
      %p984 = por %p982, %p983
      %s986 = sadd.s32 %s985, 1
      %p989 = scmp.eq.s32.totalorder %s153, 1
      %p990 = scmp.ne.s32.totalorder %s985, %s987
      %p991 = scmp.eq.s32.totalorder %s153, 0
      %p992 = por %p990, %p991
      %p993 = scmp.ne.s32.totalorder %s985, %s987
      %p994 = scmp.eq.s32.totalorder %s158, 1
      %p995 = por %p993, %p994
      %p996 = scmp.ne.s32.totalorder %s987, %s988
      %p997 = scmp.eq.s32.totalorder %s158, 0
      %p998 = por %p996, %p997
      %p999 = scmp.ne.s32.totalorder %s987, %s988
      %p1000 = scmp.eq.s32.totalorder %s159, 1
      %p1001 = por %p999, %p1000
      %p1003 = scmp.ne.s32.totalorder %s988, %s1002
      %p1004 = scmp.eq.s32.totalorder %s159, 0
      %p1005 = por %p1003, %p1004
      %s1007 = sadd.s32 %s1006, 1
      %p1010 = scmp.eq.s32.totalorder %s153, 1
      %p1011 = scmp.ne.s32.totalorder %s1006, %s1008
      %p1012 = scmp.eq.s32.totalorder %s153, 0
      %p1013 = por %p1011, %p1012
      %p1014 = scmp.ne.s32.totalorder %s1006, %s1008
      %p1015 = scmp.eq.s32.totalorder %s158, 1
      %p1016 = por %p1014, %p1015
      %p1017 = scmp.ne.s32.totalorder %s1008, %s1009
      %p1018 = scmp.eq.s32.totalorder %s158, 0
      %p1019 = por %p1017, %p1018
      %p1020 = scmp.ne.s32.totalorder %s1008, %s1009
      %p1021 = scmp.eq.s32.totalorder %s159, 1
      %p1022 = por %p1020, %p1021
      %p1024 = scmp.ne.s32.totalorder %s1009, %s1023
      %p1025 = scmp.eq.s32.totalorder %s159, 0
      %p1026 = por %p1024, %p1025
      %s1028 = sadd.s32 %s1027, 1
      %p1031 = scmp.eq.s32.totalorder %s153, 1
      %p1032 = scmp.ne.s32.totalorder %s1027, %s1029
      %p1033 = scmp.eq.s32.totalorder %s153, 0
      %p1034 = por %p1032, %p1033
      %p1035 = scmp.ne.s32.totalorder %s1027, %s1029
      %p1036 = scmp.eq.s32.totalorder %s158, 1
      %p1037 = por %p1035, %p1036
      %p1038 = scmp.ne.s32.totalorder %s1029, %s1030
      %p1039 = scmp.eq.s32.totalorder %s158, 0
      %p1040 = por %p1038, %p1039
      %p1041 = scmp.ne.s32.totalorder %s1029, %s1030
      %p1042 = scmp.eq.s32.totalorder %s159, 1
      %p1043 = por %p1041, %p1042
      %p1045 = scmp.ne.s32.totalorder %s1030, %s1044
      %p1046 = scmp.eq.s32.totalorder %s159, 0
      %p1047 = por %p1045, %p1046
      %s1049 = sadd.s32 %s1048, 1
      %p1052 = scmp.eq.s32.totalorder %s153, 1
      %p1053 = scmp.ne.s32.totalorder %s1048, %s1050
      %p1054 = scmp.eq.s32.totalorder %s153, 0
      %p1055 = por %p1053, %p1054
      %p1056 = scmp.ne.s32.totalorder %s1048, %s1050
      %p1057 = scmp.eq.s32.totalorder %s158, 1
      %p1058 = por %p1056, %p1057
      %p1059 = scmp.ne.s32.totalorder %s1050, %s1051
      %p1060 = scmp.eq.s32.totalorder %s158, 0
      %p1061 = por %p1059, %p1060
      %p1062 = scmp.ne.s32.totalorder %s1050, %s1051
      %p1063 = scmp.eq.s32.totalorder %s159, 1
      %p1064 = por %p1062, %p1063
      %p1066 = scmp.ne.s32.totalorder %s1051, %s1065
      %p1067 = scmp.eq.s32.totalorder %s159, 0
      %p1068 = por %p1066, %p1067
      %s1070 = sadd.s32 %s1069, 1
      %p1073 = scmp.eq.s32.totalorder %s153, 1
      %p1074 = scmp.ne.s32.totalorder %s1069, %s1071
      %p1075 = scmp.eq.s32.totalorder %s153, 0
      %p1076 = por %p1074, %p1075
      %p1077 = scmp.ne.s32.totalorder %s1069, %s1071
      %p1078 = scmp.eq.s32.totalorder %s158, 1
      %p1079 = por %p1077, %p1078
      %p1080 = scmp.ne.s32.totalorder %s1071, %s1072
      %p1081 = scmp.eq.s32.totalorder %s158, 0
      %p1082 = por %p1080, %p1081
      %p1083 = scmp.ne.s32.totalorder %s1071, %s1072
      %p1084 = scmp.eq.s32.totalorder %s159, 1
      %p1085 = por %p1083, %p1084
      %p1087 = scmp.ne.s32.totalorder %s1072, %s1086
      %p1088 = scmp.eq.s32.totalorder %s159, 0
      %p1089 = por %p1087, %p1088
      %s1091 = sadd.s32 %s1090, 1
      %p1094 = scmp.eq.s32.totalorder %s153, 1
      %p1095 = scmp.ne.s32.totalorder %s1090, %s1092
      %p1096 = scmp.eq.s32.totalorder %s153, 0
      %p1097 = por %p1095, %p1096
      %p1098 = scmp.ne.s32.totalorder %s1090, %s1092
      %p1099 = scmp.eq.s32.totalorder %s158, 1
      %p1100 = por %p1098, %p1099
      %p1101 = scmp.ne.s32.totalorder %s1092, %s1093
      %p1102 = scmp.eq.s32.totalorder %s158, 0
      %p1103 = por %p1101, %p1102
      %p1104 = scmp.ne.s32.totalorder %s1092, %s1093
      %p1105 = scmp.eq.s32.totalorder %s159, 1
      %p1106 = por %p1104, %p1105
      %p1108 = scmp.ne.s32.totalorder %s1093, %s1107
      %p1109 = scmp.eq.s32.totalorder %s159, 0
      %p1110 = por %p1108, %p1109
      %s1112 = sadd.s32 %s1111, 1
      %p1115 = scmp.eq.s32.totalorder %s153, 1
      %p1116 = scmp.ne.s32.totalorder %s1111, %s1113
      %p1117 = scmp.eq.s32.totalorder %s153, 0
      %p1118 = por %p1116, %p1117
      %p1119 = scmp.ne.s32.totalorder %s1111, %s1113
      %p1120 = scmp.eq.s32.totalorder %s158, 1
      %p1121 = por %p1119, %p1120
      %p1122 = scmp.ne.s32.totalorder %s1113, %s1114
      %p1123 = scmp.eq.s32.totalorder %s158, 0
      %p1124 = por %p1122, %p1123
      %p1125 = scmp.ne.s32.totalorder %s1113, %s1114
      %p1126 = scmp.eq.s32.totalorder %s159, 1
      %p1127 = por %p1125, %p1126
      %p1129 = scmp.ne.s32.totalorder %s1114, %s1128
      %p1130 = scmp.eq.s32.totalorder %s159, 0
      %p1131 = por %p1129, %p1130
      %s1133 = sadd.s32 %s1132, 1
      %p1136 = scmp.eq.s32.totalorder %s153, 1
      %p1137 = scmp.ne.s32.totalorder %s1132, %s1134
      %p1138 = scmp.eq.s32.totalorder %s153, 0
      %p1139 = por %p1137, %p1138
      %p1140 = scmp.ne.s32.totalorder %s1132, %s1134
      %p1141 = scmp.eq.s32.totalorder %s158, 1
      %p1142 = por %p1140, %p1141
      %p1143 = scmp.ne.s32.totalorder %s1134, %s1135
      %p1144 = scmp.eq.s32.totalorder %s158, 0
      %p1145 = por %p1143, %p1144
      %p1146 = scmp.ne.s32.totalorder %s1134, %s1135
      %p1147 = scmp.eq.s32.totalorder %s159, 1
      %p1148 = por %p1146, %p1147
      %p1150 = scmp.ne.s32.totalorder %s1135, %s1149
      %p1151 = scmp.eq.s32.totalorder %s159, 0
      %p1152 = por %p1150, %p1151
      %s1154 = sadd.s32 %s1153, 1
      %p1157 = scmp.eq.s32.totalorder %s153, 1
      %p1158 = scmp.ne.s32.totalorder %s1153, %s1155
      %p1159 = scmp.eq.s32.totalorder %s153, 0
      %p1160 = por %p1158, %p1159
      %p1161 = scmp.ne.s32.totalorder %s1153, %s1155
      %p1162 = scmp.eq.s32.totalorder %s158, 1
      %p1163 = por %p1161, %p1162
      %p1164 = scmp.ne.s32.totalorder %s1155, %s1156
      %p1165 = scmp.eq.s32.totalorder %s158, 0
      %p1166 = por %p1164, %p1165
      %p1167 = scmp.ne.s32.totalorder %s1155, %s1156
      %p1168 = scmp.eq.s32.totalorder %s159, 1
      %p1169 = por %p1167, %p1168
      %p1171 = scmp.ne.s32.totalorder %s1156, %s1170
      %p1172 = scmp.eq.s32.totalorder %s159, 0
      %p1173 = por %p1171, %p1172
      %s1175 = sadd.s32 %s1174, 1
      %p1178 = scmp.eq.s32.totalorder %s153, 1
      %p1179 = scmp.ne.s32.totalorder %s1174, %s1176
      %p1180 = scmp.eq.s32.totalorder %s153, 0
      %p1181 = por %p1179, %p1180
      %p1182 = scmp.ne.s32.totalorder %s1174, %s1176
      %p1183 = scmp.eq.s32.totalorder %s158, 1
      %p1184 = por %p1182, %p1183
      %p1185 = scmp.ne.s32.totalorder %s1176, %s1177
      %p1186 = scmp.eq.s32.totalorder %s158, 0
      %p1187 = por %p1185, %p1186
      %p1188 = scmp.ne.s32.totalorder %s1176, %s1177
      %p1189 = scmp.eq.s32.totalorder %s159, 1
      %p1190 = por %p1188, %p1189
      %p1192 = scmp.ne.s32.totalorder %s1177, %s1191
      %p1193 = scmp.eq.s32.totalorder %s159, 0
      %p1194 = por %p1192, %p1193
      %s1196 = sadd.s32 %s1195, 1
      %p1199 = scmp.eq.s32.totalorder %s153, 1
      %p1200 = scmp.ne.s32.totalorder %s1195, %s1197
      %p1201 = scmp.eq.s32.totalorder %s153, 0
      %p1202 = por %p1200, %p1201
      %p1203 = scmp.ne.s32.totalorder %s1195, %s1197
      %p1204 = scmp.eq.s32.totalorder %s158, 1
      %p1205 = por %p1203, %p1204
      %p1206 = scmp.ne.s32.totalorder %s1197, %s1198
      %p1207 = scmp.eq.s32.totalorder %s158, 0
      %p1208 = por %p1206, %p1207
      %p1209 = scmp.ne.s32.totalorder %s1197, %s1198
      %p1210 = scmp.eq.s32.totalorder %s159, 1
      %p1211 = por %p1209, %p1210
      %p1213 = scmp.ne.s32.totalorder %s1198, %s1212
      %p1214 = scmp.eq.s32.totalorder %s159, 0
      %p1215 = por %p1213, %p1214
      %s1217 = sadd.s32 %s1216, 1
      %p1220 = scmp.eq.s32.totalorder %s153, 1
      %p1221 = scmp.ne.s32.totalorder %s1216, %s1218
      %p1222 = scmp.eq.s32.totalorder %s153, 0
      %p1223 = por %p1221, %p1222
      %p1224 = scmp.ne.s32.totalorder %s1216, %s1218
      %p1225 = scmp.eq.s32.totalorder %s158, 1
      %p1226 = por %p1224, %p1225
      %p1227 = scmp.ne.s32.totalorder %s1218, %s1219
      %p1228 = scmp.eq.s32.totalorder %s158, 0
      %p1229 = por %p1227, %p1228
      %p1230 = scmp.ne.s32.totalorder %s1218, %s1219
      %p1231 = scmp.eq.s32.totalorder %s159, 1
      %p1232 = por %p1230, %p1231
      %p1234 = scmp.ne.s32.totalorder %s1219, %s1233
      %p1235 = scmp.eq.s32.totalorder %s159, 0
      %p1236 = por %p1234, %p1235
      %s1238 = sadd.s32 %s1237, 1
      %p1241 = scmp.eq.s32.totalorder %s153, 1
      %p1242 = scmp.ne.s32.totalorder %s1237, %s1239
      %p1243 = scmp.eq.s32.totalorder %s153, 0
      %p1244 = por %p1242, %p1243
      %p1245 = scmp.ne.s32.totalorder %s1237, %s1239
      %p1246 = scmp.eq.s32.totalorder %s158, 1
      %p1247 = por %p1245, %p1246
      %p1248 = scmp.ne.s32.totalorder %s1239, %s1240
      %p1249 = scmp.eq.s32.totalorder %s158, 0
      %p1250 = por %p1248, %p1249
      %p1251 = scmp.ne.s32.totalorder %s1239, %s1240
      %p1252 = scmp.eq.s32.totalorder %s159, 1
      %p1253 = por %p1251, %p1252
      %p1255 = scmp.ne.s32.totalorder %s1240, %s1254
      %p1256 = scmp.eq.s32.totalorder %s159, 0
      %p1257 = por %p1255, %p1256
      %s1259 = sadd.s32 %s1258, 1
      %p1262 = scmp.eq.s32.totalorder %s153, 1
      %p1263 = scmp.ne.s32.totalorder %s1258, %s1260
      %p1264 = scmp.eq.s32.totalorder %s153, 0
      %p1265 = por %p1263, %p1264
      %p1266 = scmp.ne.s32.totalorder %s1258, %s1260
      %p1267 = scmp.eq.s32.totalorder %s158, 1
      %p1268 = por %p1266, %p1267
      %p1269 = scmp.ne.s32.totalorder %s1260, %s1261
      %p1270 = scmp.eq.s32.totalorder %s158, 0
      %p1271 = por %p1269, %p1270
      %p1272 = scmp.ne.s32.totalorder %s1260, %s1261
      %p1273 = scmp.eq.s32.totalorder %s159, 1
      %p1274 = por %p1272, %p1273
      %p1276 = scmp.ne.s32.totalorder %s1261, %s1275
      %p1277 = scmp.eq.s32.totalorder %s159, 0
      %p1278 = por %p1276, %p1277
      %s1280 = sadd.s32 %s1279, 1
      %p1283 = scmp.eq.s32.totalorder %s153, 1
      %p1284 = scmp.ne.s32.totalorder %s1279, %s1281
      %p1285 = scmp.eq.s32.totalorder %s153, 0
      %p1286 = por %p1284, %p1285
      %p1287 = scmp.ne.s32.totalorder %s1279, %s1281
      %p1288 = scmp.eq.s32.totalorder %s158, 1
      %p1289 = por %p1287, %p1288
      %p1290 = scmp.ne.s32.totalorder %s1281, %s1282
      %p1291 = scmp.eq.s32.totalorder %s158, 0
      %p1292 = por %p1290, %p1291
      %p1293 = scmp.ne.s32.totalorder %s1281, %s1282
      %p1294 = scmp.eq.s32.totalorder %s159, 1
      %p1295 = por %p1293, %p1294
      %p1297 = scmp.ne.s32.totalorder %s1282, %s1296
      %p1298 = scmp.eq.s32.totalorder %s159, 0
      %p1299 = por %p1297, %p1298
      %s1301 = sadd.s32 %s1300, 1
      %p1304 = scmp.eq.s32.totalorder %s153, 1
      %p1305 = scmp.ne.s32.totalorder %s1300, %s1302
      %p1306 = scmp.eq.s32.totalorder %s153, 0
      %p1307 = por %p1305, %p1306
      %p1308 = scmp.ne.s32.totalorder %s1300, %s1302
      %p1309 = scmp.eq.s32.totalorder %s158, 1
      %p1310 = por %p1308, %p1309
      %p1311 = scmp.ne.s32.totalorder %s1302, %s1303
      %p1312 = scmp.eq.s32.totalorder %s158, 0
      %p1313 = por %p1311, %p1312
      %p1314 = scmp.ne.s32.totalorder %s1302, %s1303
      %p1315 = scmp.eq.s32.totalorder %s159, 1
      %p1316 = por %p1314, %p1315
      %p1318 = scmp.ne.s32.totalorder %s1303, %s1317
      %p1319 = scmp.eq.s32.totalorder %s159, 0
      %p1320 = por %p1318, %p1319
      %s1322 = sadd.s32 %s1321, 1
      %p1325 = scmp.eq.s32.totalorder %s153, 1
      %p1326 = scmp.ne.s32.totalorder %s1321, %s1323
      %p1327 = scmp.eq.s32.totalorder %s153, 0
      %p1328 = por %p1326, %p1327
      %p1329 = scmp.ne.s32.totalorder %s1321, %s1323
      %p1330 = scmp.eq.s32.totalorder %s158, 1
      %p1331 = por %p1329, %p1330
      %p1332 = scmp.ne.s32.totalorder %s1323, %s1324
      %p1333 = scmp.eq.s32.totalorder %s158, 0
      %p1334 = por %p1332, %p1333
      %p1335 = scmp.ne.s32.totalorder %s1323, %s1324
      %p1336 = scmp.eq.s32.totalorder %s159, 1
      %p1337 = por %p1335, %p1336
      %p1339 = scmp.ne.s32.totalorder %s1324, %s1338
      %p1340 = scmp.eq.s32.totalorder %s159, 0
      %p1341 = por %p1339, %p1340
      %s1343 = sadd.s32 %s1342, 1
      %p1346 = scmp.eq.s32.totalorder %s153, 1
      %p1347 = scmp.ne.s32.totalorder %s1342, %s1344
      %p1348 = scmp.eq.s32.totalorder %s153, 0
      %p1349 = por %p1347, %p1348
      %p1350 = scmp.ne.s32.totalorder %s1342, %s1344
      %p1351 = scmp.eq.s32.totalorder %s158, 1
      %p1352 = por %p1350, %p1351
      %p1353 = scmp.ne.s32.totalorder %s1344, %s1345
      %p1354 = scmp.eq.s32.totalorder %s158, 0
      %p1355 = por %p1353, %p1354
      %p1356 = scmp.ne.s32.totalorder %s1344, %s1345
      %p1357 = scmp.eq.s32.totalorder %s159, 1
      %p1358 = por %p1356, %p1357
      %p1360 = scmp.ne.s32.totalorder %s1345, %s1359
      %p1361 = scmp.eq.s32.totalorder %s159, 0
      %p1362 = por %p1360, %p1361
      %s1363 = ssub.s32 %s153, %s160
      %p1364 = scmp.eq.s32.totalorder %s1363, 0
      %s1366 = sadd.s32 %s1365, 1
      %s1367 = scalar_select %p1364, %s1365, %s1366
      %p1370 = pneg %p1364
      %p1371 = scmp.eq.s32.totalorder %s153, 1
      %p1372 = por %p1370, %p1371
      %p1373 = scmp.ne.s32.totalorder %s1365, %s1368
      %p1374 = scmp.eq.s32.totalorder %s153, 0
      %p1375 = por %p1373, %p1374
      %p1376 = scmp.ne.s32.totalorder %s1365, %s1368
      %p1377 = scmp.eq.s32.totalorder %s158, 1
      %p1378 = por %p1376, %p1377
      %p1379 = scmp.ne.s32.totalorder %s1368, %s1369
      %p1380 = scmp.eq.s32.totalorder %s158, 0
      %p1381 = por %p1379, %p1380
      %p1382 = scmp.ne.s32.totalorder %s1368, %s1369
      %p1383 = scmp.eq.s32.totalorder %s159, 1
      %p1384 = por %p1382, %p1383
      %p1386 = scmp.ne.s32.totalorder %s1369, %s1385
      %p1387 = scmp.eq.s32.totalorder %s159, 0
      %p1388 = por %p1386, %p1387
      %s1389 = ssub.s32 %s153, %s160
      %p1390 = scmp.eq.s32.totalorder %s1389, 0
      %s1392 = sadd.s32 %s1391, 1
      %s1393 = scalar_select %p1390, %s1391, %s1392
      %p1396 = pneg %p1390
      %p1397 = scmp.eq.s32.totalorder %s153, 1
      %p1398 = por %p1396, %p1397
      %p1399 = scmp.ne.s32.totalorder %s1391, %s1394
      %p1400 = scmp.eq.s32.totalorder %s153, 0
      %p1401 = por %p1399, %p1400
      %p1402 = scmp.ne.s32.totalorder %s1391, %s1394
      %p1403 = scmp.eq.s32.totalorder %s158, 1
      %p1404 = por %p1402, %p1403
      %p1405 = scmp.ne.s32.totalorder %s1394, %s1395
      %p1406 = scmp.eq.s32.totalorder %s158, 0
      %p1407 = por %p1405, %p1406
      %p1408 = scmp.ne.s32.totalorder %s1394, %s1395
      %p1409 = scmp.eq.s32.totalorder %s159, 1
      %p1410 = por %p1408, %p1409
      %p1412 = scmp.ne.s32.totalorder %s1395, %s1411
      %p1413 = scmp.eq.s32.totalorder %s159, 0
      %p1414 = por %p1412, %p1413
      %p1415 = scmp.le.s32.totalorder 1, %s153
      %p1416 = scmp.lt.s32.totalorder %s153, 3
      %p1417 = pnand %p1415, %p1416
      %p1418 = pneg %p1417
      // Predicated region
      $region9: #{tpu_custom_call.1} parent=5 // pred_check
        _
      $region10: #{tpu_custom_call.1} parent=5 // pred_check_branch
        %1420 = sbr.rel (%p1417) target = $region12
      $region11: #{tpu_custom_call.1} parent=5 // pred_region
        %s1421 = ssub.s32 %s153, 1
        // Predicated region
        $region13: #{tpu_custom_call.1} parent=11 // pred_check
          %p1422 = pneg %p200
        $region14: #{tpu_custom_call.1} parent=11 // pred_check_branch
          %1424 = sbr.rel (%p1422) target = $region16
        $region15: #{tpu_custom_call.1} parent=11 // pred_region
          %1426 = vsyncadd [#allocation3], 0
          %s1428 = sshll.u32 %s3, 4
          %s1429 = int_to_ptr.hbm [resolvable:$true] %s1428
          %s1430 = sshll.u32 [#allocation2], 4
          %s1431 = int_to_ptr.vmem [resolvable:$true] %s1430
          %1433 = dma.hbm_to_vmem [thread:$0]  %s1429, 32, %s1431, [#allocation3]
        $region16: #{tpu_custom_call.1} parent=11 // pred_fallthru
          _
        // Predicated region
        $region17: #{tpu_custom_call.1} parent=11 // pred_check
          %p1434 = pneg %p221
        $region18: #{tpu_custom_call.1} parent=11 // pred_check_branch
          %1436 = sbr.rel (%p1434) target = $region20
        $region19: #{tpu_custom_call.1} parent=11 // pred_region
          _
        $region20: #{tpu_custom_call.1} parent=11 // pred_fallthru
          _
        // Predicated region
        $region21: #{tpu_custom_call.1} parent=11 // pred_check
          %p1437 = pneg %p242
        $region22: #{tpu_custom_call.1} parent=11 // pred_check_branch
          %1439 = sbr.rel (%p1437) target = $region24
        $region23: #{tpu_custom_call.1} parent=11 // pred_region
          _
        $region24: #{tpu_custom_call.1} parent=11 // pred_fallthru
          _
        // Predicated region
        $region25: #{tpu_custom_call.1} parent=11 // pred_check
          %p1440 = pneg %p263
        $region26: #{tpu_custom_call.1} parent=11 // pred_check_branch
          %1442 = sbr.rel (%p1440) target = $region28
        $region27: #{tpu_custom_call.1} parent=11 // pred_region
          %1444 = vsyncadd [#allocation6], 0
          %s1445 = sshll.u32 %s9, 4
          %s1446 = int_to_ptr.hbm [resolvable:$true] %s1445
          %s1447 = sshll.u32 [#allocation5], 4
          %s1448 = int_to_ptr.vmem [resolvable:$true] %s1447
          %1453 = dma.hbm_to_vmem [thread:$0]  %s1446, 2048, %s1448, [#allocation6], 256, 256, 16
        $region28: #{tpu_custom_call.1} parent=11 // pred_fallthru
          _
        // Predicated region
        $region29: #{tpu_custom_call.1} parent=11 // pred_check
          %p1454 = pneg %p284
        $region30: #{tpu_custom_call.1} parent=11 // pred_check_branch
          %1456 = sbr.rel (%p1454) target = $region32
        $region31: #{tpu_custom_call.1} parent=11 // pred_region
          _
        $region32: #{tpu_custom_call.1} parent=11 // pred_fallthru
          _
        // Predicated region
        $region33: #{tpu_custom_call.1} parent=11 // pred_check
          %p1457 = pneg %p305
        $region34: #{tpu_custom_call.1} parent=11 // pred_check_branch
          %1459 = sbr.rel (%p1457) target = $region36
        $region35: #{tpu_custom_call.1} parent=11 // pred_region
          %1461 = vsyncadd [#allocation6], 0
          %s1462 = sshll.u32 %s13, 4
          %s1463 = int_to_ptr.hbm [resolvable:$true] %s1462
          %s1464 = sshll.u32 [#allocation7], 4
          %s1465 = int_to_ptr.vmem [resolvable:$true] %s1464
          %1470 = dma.hbm_to_vmem [thread:$0]  %s1463, 256, %s1465, [#allocation6], 128, 128, 8
        $region36: #{tpu_custom_call.1} parent=11 // pred_fallthru
          _
        // Predicated region
        $region37: #{tpu_custom_call.1} parent=11 // pred_check
          %p1471 = pneg %p326
        $region38: #{tpu_custom_call.1} parent=11 // pred_check_branch
          %1473 = sbr.rel (%p1471) target = $region40
        $region39: #{tpu_custom_call.1} parent=11 // pred_region
          _
        $region40: #{tpu_custom_call.1} parent=11 // pred_fallthru
          _
        // Predicated region
        $region41: #{tpu_custom_call.1} parent=11 // pred_check
          %p1474 = pneg %p347
        $region42: #{tpu_custom_call.1} parent=11 // pred_check_branch
          %1476 = sbr.rel (%p1474) target = $region44
        $region43: #{tpu_custom_call.1} parent=11 // pred_region
          _
        $region44: #{tpu_custom_call.1} parent=11 // pred_fallthru
          _
        // Predicated region
        $region45: #{tpu_custom_call.1} parent=11 // pred_check
          %p1477 = pneg %p368
        $region46: #{tpu_custom_call.1} parent=11 // pred_check_branch
          %1479 = sbr.rel (%p1477) target = $region48
        $region47: #{tpu_custom_call.1} parent=11 // pred_region
          %1481 = vsyncadd [#allocation9], 0
          %s1483 = sshll.u32 %s19, 4
          %s1484 = int_to_ptr.hbm [resolvable:$true] %s1483
          %s1485 = sshll.u32 [#allocation8], 4
          %s1486 = int_to_ptr.vmem [resolvable:$true] %s1485
          %1488 = dma.hbm_to_vmem [thread:$0]  %s1484, 16, %s1486, [#allocation9]
        $region48: #{tpu_custom_call.1} parent=11 // pred_fallthru
          _
        // Predicated region
        $region49: #{tpu_custom_call.1} parent=11 // pred_check
          %p1489 = pneg %p389
        $region50: #{tpu_custom_call.1} parent=11 // pred_check_branch
          %1491 = sbr.rel (%p1489) target = $region52
        $region51: #{tpu_custom_call.1} parent=11 // pred_region
          %1493 = vsyncadd [#allocation9], 0
          %s1494 = sshll.u32 %s21, 4
          %s1495 = int_to_ptr.hbm [resolvable:$true] %s1494
          %s1496 = sshll.u32 [#allocation10], 4
          %s1497 = int_to_ptr.vmem [resolvable:$true] %s1496
          %1502 = dma.hbm_to_vmem [thread:$0]  %s1495, 2048, %s1497, [#allocation9], 128, 128, 8
        $region52: #{tpu_custom_call.1} parent=11 // pred_fallthru
          _
        // Predicated region
        $region53: #{tpu_custom_call.1} parent=11 // pred_check
          %p1503 = pneg %p410
        $region54: #{tpu_custom_call.1} parent=11 // pred_check_branch
          %1505 = sbr.rel (%p1503) target = $region56
        $region55: #{tpu_custom_call.1} parent=11 // pred_region
          %1507 = vsyncadd [#allocation12], 0
          %s1508 = sshll.u32 %s23, 4
          %s1509 = int_to_ptr.hbm [resolvable:$true] %s1508
          %s1510 = sshll.u32 [#allocation11], 4
          %s1511 = int_to_ptr.vmem [resolvable:$true] %s1510
          %1516 = dma.hbm_to_vmem [thread:$0]  %s1509, 2048, %s1511, [#allocation12], 128, 128, 8
        $region56: #{tpu_custom_call.1} parent=11 // pred_fallthru
          _
        // Predicated region
        $region57: #{tpu_custom_call.1} parent=11 // pred_check
          %p1517 = pneg %p431
        $region58: #{tpu_custom_call.1} parent=11 // pred_check_branch
          %1519 = sbr.rel (%p1517) target = $region60
        $region59: #{tpu_custom_call.1} parent=11 // pred_region
          %1521 = vsyncadd [#allocation12], 0
          %s1522 = sshll.u32 %s25, 4
          %s1523 = int_to_ptr.hbm [resolvable:$true] %s1522
          %s1524 = sshll.u32 [#allocation13], 4
          %s1525 = int_to_ptr.vmem [resolvable:$true] %s1524
          %1530 = dma.hbm_to_vmem [thread:$0]  %s1523, 2048, %s1525, [#allocation12], 128, 128, 8
        $region60: #{tpu_custom_call.1} parent=11 // pred_fallthru
          _
        // Predicated region
        $region61: #{tpu_custom_call.1} parent=11 // pred_check
          %p1531 = pneg %p452
        $region62: #{tpu_custom_call.1} parent=11 // pred_check_branch
          %1533 = sbr.rel (%p1531) target = $region64
        $region63: #{tpu_custom_call.1} parent=11 // pred_region
          %1535 = vsyncadd [#allocation15], 0
          %s1536 = sshll.u32 %s27, 4
          %s1537 = int_to_ptr.hbm [resolvable:$true] %s1536
          %s1538 = sshll.u32 [#allocation14], 4
          %s1539 = int_to_ptr.vmem [resolvable:$true] %s1538
          %1544 = dma.hbm_to_vmem [thread:$0]  %s1537, 256, %s1539, [#allocation15], 128, 128, 8
        $region64: #{tpu_custom_call.1} parent=11 // pred_fallthru
          _
        // Predicated region
        $region65: #{tpu_custom_call.1} parent=11 // pred_check
          %p1545 = pneg %p473
        $region66: #{tpu_custom_call.1} parent=11 // pred_check_branch
          %1547 = sbr.rel (%p1545) target = $region68
        $region67: #{tpu_custom_call.1} parent=11 // pred_region
          %1549 = vsyncadd [#allocation15], 0
          %s1550 = sshll.u32 %s29, 4
          %s1551 = int_to_ptr.hbm [resolvable:$true] %s1550
          %s1552 = sshll.u32 [#allocation16], 4
          %s1553 = int_to_ptr.vmem [resolvable:$true] %s1552
          %1558 = dma.hbm_to_vmem [thread:$0]  %s1551, 256, %s1553, [#allocation15], 128, 128, 8
        $region68: #{tpu_custom_call.1} parent=11 // pred_fallthru
          _
        // Predicated region
        $region69: #{tpu_custom_call.1} parent=11 // pred_check
          %p1559 = pneg %p494
        $region70: #{tpu_custom_call.1} parent=11 // pred_check_branch
          %1561 = sbr.rel (%p1559) target = $region72
        $region71: #{tpu_custom_call.1} parent=11 // pred_region
          %1563 = vsyncadd [#allocation18], 0
          %s1565 = sshll.u32 %s31, 4
          %s1566 = int_to_ptr.hbm [resolvable:$true] %s1565
          %s1567 = sshll.u32 [#allocation17], 4
          %s1568 = int_to_ptr.vmem [resolvable:$true] %s1567
          %1570 = dma.hbm_to_vmem [thread:$0]  %s1566, 32, %s1568, [#allocation18]
        $region72: #{tpu_custom_call.1} parent=11 // pred_fallthru
          _
        // Predicated region
        $region73: #{tpu_custom_call.1} parent=11 // pred_check
          %p1571 = pneg %p515
        $region74: #{tpu_custom_call.1} parent=11 // pred_check_branch
          %1573 = sbr.rel (%p1571) target = $region76
        $region75: #{tpu_custom_call.1} parent=11 // pred_region
          %1575 = vsyncadd [#allocation18], 0
          %s1576 = sshll.u32 %s33, 4
          %s1577 = int_to_ptr.hbm [resolvable:$true] %s1576
          %s1578 = sshll.u32 [#allocation19], 4
          %s1579 = int_to_ptr.vmem [resolvable:$true] %s1578
          %1584 = dma.hbm_to_vmem [thread:$0]  %s1577, 4096, %s1579, [#allocation18], 256, 256, 16
        $region76: #{tpu_custom_call.1} parent=11 // pred_fallthru
          _
        // Predicated region
        $region77: #{tpu_custom_call.1} parent=11 // pred_check
          %p1585 = pneg %p536
        $region78: #{tpu_custom_call.1} parent=11 // pred_check_branch
          %1587 = sbr.rel (%p1585) target = $region80
        $region79: #{tpu_custom_call.1} parent=11 // pred_region
          %1589 = vsyncadd [#allocation21], 0
          %s1591 = sshll.u32 %s35, 4
          %s1592 = int_to_ptr.hbm [resolvable:$true] %s1591
          %s1593 = sshll.u32 [#allocation20], 4
          %s1594 = int_to_ptr.vmem [resolvable:$true] %s1593
          %1596 = dma.hbm_to_vmem [thread:$0]  %s1592, 16, %s1594, [#allocation21]
        $region80: #{tpu_custom_call.1} parent=11 // pred_fallthru
          _
        // Predicated region
        $region81: #{tpu_custom_call.1} parent=11 // pred_check
          %p1597 = pneg %p557
        $region82: #{tpu_custom_call.1} parent=11 // pred_check_branch
          %1599 = sbr.rel (%p1597) target = $region84
        $region83: #{tpu_custom_call.1} parent=11 // pred_region
          _
        $region84: #{tpu_custom_call.1} parent=11 // pred_fallthru
          _
        // Predicated region
        $region85: #{tpu_custom_call.1} parent=11 // pred_check
          %p1600 = pneg %p578
        $region86: #{tpu_custom_call.1} parent=11 // pred_check_branch
          %1602 = sbr.rel (%p1600) target = $region88
        $region87: #{tpu_custom_call.1} parent=11 // pred_region
          %1604 = vsyncadd [#allocation21], 0
          %s1606 = sshll.u32 %s39, 4
          %s1607 = int_to_ptr.hbm [resolvable:$true] %s1606
          %s1608 = sshll.u32 [#allocation22], 4
          %s1609 = int_to_ptr.vmem [resolvable:$true] %s1608
          %1611 = dma.hbm_to_vmem [thread:$0]  %s1607, 16, %s1609, [#allocation21]
        $region88: #{tpu_custom_call.1} parent=11 // pred_fallthru
          _
        // Predicated region
        $region89: #{tpu_custom_call.1} parent=11 // pred_check
          %p1612 = pneg %p599
        $region90: #{tpu_custom_call.1} parent=11 // pred_check_branch
          %1614 = sbr.rel (%p1612) target = $region92
        $region91: #{tpu_custom_call.1} parent=11 // pred_region
          _
        $region92: #{tpu_custom_call.1} parent=11 // pred_fallthru
          _
        // Predicated region
        $region93: #{tpu_custom_call.1} parent=11 // pred_check
          %p1615 = pneg %p620
        $region94: #{tpu_custom_call.1} parent=11 // pred_check_branch
          %1617 = sbr.rel (%p1615) target = $region96
        $region95: #{tpu_custom_call.1} parent=11 // pred_region
          %1619 = vsyncadd [#allocation24], 0
          %s1620 = sshll.u32 %s43, 4
          %s1621 = int_to_ptr.hbm [resolvable:$true] %s1620
          %s1622 = sshll.u32 [#allocation23], 4
          %s1623 = int_to_ptr.vmem [resolvable:$true] %s1622
          %1628 = dma.hbm_to_vmem [thread:$0]  %s1621, 1024, %s1623, [#allocation24], 128, 128, 8
        $region96: #{tpu_custom_call.1} parent=11 // pred_fallthru
          _
        // Predicated region
        $region97: #{tpu_custom_call.1} parent=11 // pred_check
          %p1629 = pneg %p641
        $region98: #{tpu_custom_call.1} parent=11 // pred_check_branch
          %1631 = sbr.rel (%p1629) target = $region100
        $region99: #{tpu_custom_call.1} parent=11 // pred_region
          %1633 = vsyncadd [#allocation24], 0
          %s1634 = sshll.u32 %s45, 4
          %s1635 = int_to_ptr.hbm [resolvable:$true] %s1634
          %s1636 = sshll.u32 [#allocation25], 4
          %s1637 = int_to_ptr.vmem [resolvable:$true] %s1636
          %1642 = dma.hbm_to_vmem [thread:$0]  %s1635, 1024, %s1637, [#allocation24], 128, 128, 8
        $region100: #{tpu_custom_call.1} parent=11 // pred_fallthru
          _
        // Predicated region
        $region101: #{tpu_custom_call.1} parent=11 // pred_check
          %p1643 = pneg %p662
        $region102: #{tpu_custom_call.1} parent=11 // pred_check_branch
          %1645 = sbr.rel (%p1643) target = $region104
        $region103: #{tpu_custom_call.1} parent=11 // pred_region
          %1647 = vsyncadd [#allocation27], 0
          %s1649 = sshll.u32 %s47, 4
          %s1650 = int_to_ptr.hbm [resolvable:$true] %s1649
          %s1651 = sshll.u32 [#allocation26], 4
          %s1652 = int_to_ptr.vmem [resolvable:$true] %s1651
          %1654 = dma.hbm_to_vmem [thread:$0]  %s1650, 128, %s1652, [#allocation27]
        $region104: #{tpu_custom_call.1} parent=11 // pred_fallthru
          _
        // Predicated region
        $region105: #{tpu_custom_call.1} parent=11 // pred_check
          %p1655 = pneg %p683
        $region106: #{tpu_custom_call.1} parent=11 // pred_check_branch
          %1657 = sbr.rel (%p1655) target = $region108
        $region107: #{tpu_custom_call.1} parent=11 // pred_region
          %1659 = vsyncadd [#allocation27], 0
          %s1661 = sshll.u32 %s49, 4
          %s1662 = int_to_ptr.hbm [resolvable:$true] %s1661
          %s1663 = sshll.u32 [#allocation28], 4
          %s1664 = int_to_ptr.vmem [resolvable:$true] %s1663
          %1666 = dma.hbm_to_vmem [thread:$0]  %s1662, 128, %s1664, [#allocation27]
        $region108: #{tpu_custom_call.1} parent=11 // pred_fallthru
          _
        // Predicated region
        $region109: #{tpu_custom_call.1} parent=11 // pred_check
          %p1667 = pneg %p704
        $region110: #{tpu_custom_call.1} parent=11 // pred_check_branch
          %1669 = sbr.rel (%p1667) target = $region112
        $region111: #{tpu_custom_call.1} parent=11 // pred_region
          %1671 = vsyncadd [#allocation30], 0
          %s1673 = sshll.u32 %s51, 4
          %s1674 = int_to_ptr.hbm [resolvable:$true] %s1673
          %s1675 = sshll.u32 [#allocation29], 4
          %s1676 = int_to_ptr.vmem [resolvable:$true] %s1675
          %1678 = dma.hbm_to_vmem [thread:$0]  %s1674, 16, %s1676, [#allocation30]
        $region112: #{tpu_custom_call.1} parent=11 // pred_fallthru
          _
        // Predicated region
        $region113: #{tpu_custom_call.1} parent=11 // pred_check
          %p1679 = pneg %p725
        $region114: #{tpu_custom_call.1} parent=11 // pred_check_branch
          %1681 = sbr.rel (%p1679) target = $region116
        $region115: #{tpu_custom_call.1} parent=11 // pred_region
          %1683 = vsyncadd [#allocation30], 0
          %s1684 = sshll.u32 %s53, 4
          %s1685 = int_to_ptr.hbm [resolvable:$true] %s1684
          %s1686 = sshll.u32 [#allocation31], 4
          %s1687 = int_to_ptr.vmem [resolvable:$true] %s1686
          %1692 = dma.hbm_to_vmem [thread:$0]  %s1685, 1024, %s1687, [#allocation30], 128, 128, 8
        $region116: #{tpu_custom_call.1} parent=11 // pred_fallthru
          _
        // Predicated region
        $region117: #{tpu_custom_call.1} parent=11 // pred_check
          %p1693 = pneg %p746
        $region118: #{tpu_custom_call.1} parent=11 // pred_check_branch
          %1695 = sbr.rel (%p1693) target = $region120
        $region119: #{tpu_custom_call.1} parent=11 // pred_region
          %1697 = vsyncadd [#allocation33], 0
          %s1699 = sshll.u32 %s55, 4
          %s1700 = int_to_ptr.hbm [resolvable:$true] %s1699
          %s1701 = sshll.u32 [#allocation32], 4
          %s1702 = int_to_ptr.vmem [resolvable:$true] %s1701
          %1704 = dma.hbm_to_vmem [thread:$0]  %s1700, 16, %s1702, [#allocation33]
        $region120: #{tpu_custom_call.1} parent=11 // pred_fallthru
          _
        // Predicated region
        $region121: #{tpu_custom_call.1} parent=11 // pred_check
          %p1705 = pneg %p767
        $region122: #{tpu_custom_call.1} parent=11 // pred_check_branch
          %1707 = sbr.rel (%p1705) target = $region124
        $region123: #{tpu_custom_call.1} parent=11 // pred_region
          %1709 = vsyncadd [#allocation33], 0
          %s1710 = sshll.u32 %s57, 4
          %s1711 = int_to_ptr.hbm [resolvable:$true] %s1710
          %s1712 = sshll.u32 [#allocation34], 4
          %s1713 = int_to_ptr.vmem [resolvable:$true] %s1712
          %1718 = dma.hbm_to_vmem [thread:$0]  %s1711, 4096, %s1713, [#allocation33], 128, 128, 8
        $region124: #{tpu_custom_call.1} parent=11 // pred_fallthru
          _
        // Predicated region
        $region125: #{tpu_custom_call.1} parent=11 // pred_check
          %p1719 = pneg %p788
        $region126: #{tpu_custom_call.1} parent=11 // pred_check_branch
          %1721 = sbr.rel (%p1719) target = $region128
        $region127: #{tpu_custom_call.1} parent=11 // pred_region
          %1723 = vsyncadd [#allocation36], 0
          %s1725 = sshll.u32 %s59, 4
          %s1726 = int_to_ptr.hbm [resolvable:$true] %s1725
          %s1727 = sshll.u32 [#allocation35], 4
          %s1728 = int_to_ptr.vmem [resolvable:$true] %s1727
          %1730 = dma.hbm_to_vmem [thread:$0]  %s1726, 16, %s1728, [#allocation36]
        $region128: #{tpu_custom_call.1} parent=11 // pred_fallthru
          _
        // Predicated region
        $region129: #{tpu_custom_call.1} parent=11 // pred_check
          %p1731 = pneg %p809
        $region130: #{tpu_custom_call.1} parent=11 // pred_check_branch
          %1733 = sbr.rel (%p1731) target = $region132
        $region131: #{tpu_custom_call.1} parent=11 // pred_region
          %1735 = vsyncadd [#allocation36], 0
          %s1736 = sshll.u32 %s61, 4
          %s1737 = int_to_ptr.hbm [resolvable:$true] %s1736
          %s1738 = sshll.u32 [#allocation37], 4
          %s1739 = int_to_ptr.vmem [resolvable:$true] %s1738
          %1744 = dma.hbm_to_vmem [thread:$0]  %s1737, 2048, %s1739, [#allocation36], 128, 128, 8
        $region132: #{tpu_custom_call.1} parent=11 // pred_fallthru
          _
        // Predicated region
        $region133: #{tpu_custom_call.1} parent=11 // pred_check
          %p1745 = pneg %p830
        $region134: #{tpu_custom_call.1} parent=11 // pred_check_branch
          %1747 = sbr.rel (%p1745) target = $region136
        $region135: #{tpu_custom_call.1} parent=11 // pred_region
          %1749 = vsyncadd [#allocation39], 0
          %s1750 = sshll.u32 %s63, 4
          %s1751 = int_to_ptr.hbm [resolvable:$true] %s1750
          %s1752 = sshll.u32 [#allocation38], 4
          %s1753 = int_to_ptr.vmem [resolvable:$true] %s1752
          %1758 = dma.hbm_to_vmem [thread:$0]  %s1751, 2048, %s1753, [#allocation39], 128, 128, 8
        $region136: #{tpu_custom_call.1} parent=11 // pred_fallthru
          _
        // Predicated region
        $region137: #{tpu_custom_call.1} parent=11 // pred_check
          %p1759 = pneg %p851
        $region138: #{tpu_custom_call.1} parent=11 // pred_check_branch
          %1761 = sbr.rel (%p1759) target = $region140
        $region139: #{tpu_custom_call.1} parent=11 // pred_region
          %1763 = vsyncadd [#allocation39], 0
          %s1764 = sshll.u32 %s65, 4
          %s1765 = int_to_ptr.hbm [resolvable:$true] %s1764
          %s1766 = sshll.u32 [#allocation40], 4
          %s1767 = int_to_ptr.vmem [resolvable:$true] %s1766
          %1772 = dma.hbm_to_vmem [thread:$0]  %s1765, 2048, %s1767, [#allocation39], 128, 128, 8
        $region140: #{tpu_custom_call.1} parent=11 // pred_fallthru
          _
        // Predicated region
        $region141: #{tpu_custom_call.1} parent=11 // pred_check
          %p1773 = pneg %p872
        $region142: #{tpu_custom_call.1} parent=11 // pred_check_branch
          %1775 = sbr.rel (%p1773) target = $region144
        $region143: #{tpu_custom_call.1} parent=11 // pred_region
          %1777 = vsyncadd [#allocation42], 0
          %s1778 = sshll.u32 %s67, 4
          %s1779 = int_to_ptr.hbm [resolvable:$true] %s1778
          %s1780 = sshll.u32 [#allocation41], 4
          %s1781 = int_to_ptr.vmem [resolvable:$true] %s1780
          %1786 = dma.hbm_to_vmem [thread:$0]  %s1779, 256, %s1781, [#allocation42], 128, 128, 8
        $region144: #{tpu_custom_call.1} parent=11 // pred_fallthru
          _
        // Predicated region
        $region145: #{tpu_custom_call.1} parent=11 // pred_check
          %p1787 = pneg %p893
        $region146: #{tpu_custom_call.1} parent=11 // pred_check_branch
          %1789 = sbr.rel (%p1787) target = $region148
        $region147: #{tpu_custom_call.1} parent=11 // pred_region
          %1791 = vsyncadd [#allocation42], 0
          %s1792 = sshll.u32 %s69, 4
          %s1793 = int_to_ptr.hbm [resolvable:$true] %s1792
          %s1794 = sshll.u32 [#allocation43], 4
          %s1795 = int_to_ptr.vmem [resolvable:$true] %s1794
          %1800 = dma.hbm_to_vmem [thread:$0]  %s1793, 256, %s1795, [#allocation42], 128, 128, 8
        $region148: #{tpu_custom_call.1} parent=11 // pred_fallthru
          _
        // Predicated region
        $region149: #{tpu_custom_call.1} parent=11 // pred_check
          %p1801 = pneg %p914
        $region150: #{tpu_custom_call.1} parent=11 // pred_check_branch
          %1803 = sbr.rel (%p1801) target = $region152
        $region151: #{tpu_custom_call.1} parent=11 // pred_region
          %1805 = vsyncadd [#allocation45], 0
          %s1807 = sshll.u32 %s71, 4
          %s1808 = int_to_ptr.hbm [resolvable:$true] %s1807
          %s1809 = sshll.u32 [#allocation44], 4
          %s1810 = int_to_ptr.vmem [resolvable:$true] %s1809
          %1812 = dma.hbm_to_vmem [thread:$0]  %s1808, 16, %s1810, [#allocation45]
        $region152: #{tpu_custom_call.1} parent=11 // pred_fallthru
          _
        // Predicated region
        $region153: #{tpu_custom_call.1} parent=11 // pred_check
          %p1813 = pneg %p935
        $region154: #{tpu_custom_call.1} parent=11 // pred_check_branch
          %1815 = sbr.rel (%p1813) target = $region156
        $region155: #{tpu_custom_call.1} parent=11 // pred_region
          %1817 = vsyncadd [#allocation45], 0
          %s1818 = sshll.u32 %s73, 4
          %s1819 = int_to_ptr.hbm [resolvable:$true] %s1818
          %s1820 = sshll.u32 [#allocation46], 4
          %s1821 = int_to_ptr.vmem [resolvable:$true] %s1820
          %1826 = dma.hbm_to_vmem [thread:$0]  %s1819, 2048, %s1821, [#allocation45], 128, 128, 8
        $region156: #{tpu_custom_call.1} parent=11 // pred_fallthru
          _
        // Predicated region
        $region157: #{tpu_custom_call.1} parent=11 // pred_check
          %p1827 = pneg %p956
        $region158: #{tpu_custom_call.1} parent=11 // pred_check_branch
          %1829 = sbr.rel (%p1827) target = $region160
        $region159: #{tpu_custom_call.1} parent=11 // pred_region
          %1831 = vsyncadd [#allocation48], 0
          %s1832 = sshll.u32 %s75, 4
          %s1833 = int_to_ptr.hbm [resolvable:$true] %s1832
          %s1834 = sshll.u32 [#allocation47], 4
          %s1835 = int_to_ptr.vmem [resolvable:$true] %s1834
          %1840 = dma.hbm_to_vmem [thread:$0]  %s1833, 4096, %s1835, [#allocation48], 128, 128, 8
        $region160: #{tpu_custom_call.1} parent=11 // pred_fallthru
          _
        // Predicated region
        $region161: #{tpu_custom_call.1} parent=11 // pred_check
          %p1841 = pneg %p977
        $region162: #{tpu_custom_call.1} parent=11 // pred_check_branch
          %1843 = sbr.rel (%p1841) target = $region164
        $region163: #{tpu_custom_call.1} parent=11 // pred_region
          %1845 = vsyncadd [#allocation48], 0
          %s1847 = sshll.u32 %s77, 4
          %s1848 = int_to_ptr.hbm [resolvable:$true] %s1847
          %s1849 = sshll.u32 [#allocation49], 4
          %s1850 = int_to_ptr.vmem [resolvable:$true] %s1849
          %1852 = dma.hbm_to_vmem [thread:$0]  %s1848, 128, %s1850, [#allocation48]
        $region164: #{tpu_custom_call.1} parent=11 // pred_fallthru
          _
        // Predicated region
        $region165: #{tpu_custom_call.1} parent=11 // pred_check
          %p1853 = pneg %p998
        $region166: #{tpu_custom_call.1} parent=11 // pred_check_branch
          %1855 = sbr.rel (%p1853) target = $region168
        $region167: #{tpu_custom_call.1} parent=11 // pred_region
          %1857 = vsyncadd [#allocation51], 0
          %s1859 = sshll.u32 %s79, 4
          %s1860 = int_to_ptr.hbm [resolvable:$true] %s1859
          %s1861 = sshll.u32 [#allocation50], 4
          %s1862 = int_to_ptr.vmem [resolvable:$true] %s1861
          %1864 = dma.hbm_to_vmem [thread:$0]  %s1860, 128, %s1862, [#allocation51]
        $region168: #{tpu_custom_call.1} parent=11 // pred_fallthru
          _
        // Predicated region
        $region169: #{tpu_custom_call.1} parent=11 // pred_check
          %p1865 = pneg %p1019
        $region170: #{tpu_custom_call.1} parent=11 // pred_check_branch
          %1867 = sbr.rel (%p1865) target = $region172
        $region171: #{tpu_custom_call.1} parent=11 // pred_region
          %1869 = vsyncadd [#allocation51], 0
          %s1871 = sshll.u32 %s81, 4
          %s1872 = int_to_ptr.hbm [resolvable:$true] %s1871
          %s1873 = sshll.u32 [#allocation52], 4
          %s1874 = int_to_ptr.vmem [resolvable:$true] %s1873
          %1876 = dma.hbm_to_vmem [thread:$0]  %s1872, 16, %s1874, [#allocation51]
        $region172: #{tpu_custom_call.1} parent=11 // pred_fallthru
          _
        // Predicated region
        $region173: #{tpu_custom_call.1} parent=11 // pred_check
          %p1877 = pneg %p1040
        $region174: #{tpu_custom_call.1} parent=11 // pred_check_branch
          %1879 = sbr.rel (%p1877) target = $region176
        $region175: #{tpu_custom_call.1} parent=11 // pred_region
          _
        $region176: #{tpu_custom_call.1} parent=11 // pred_fallthru
          _
        // Predicated region
        $region177: #{tpu_custom_call.1} parent=11 // pred_check
          %p1880 = pneg %p1061
        $region178: #{tpu_custom_call.1} parent=11 // pred_check_branch
          %1882 = sbr.rel (%p1880) target = $region180
        $region179: #{tpu_custom_call.1} parent=11 // pred_region
          %1884 = vsyncadd [#allocation54], 0
          %s1886 = sshll.u32 %s85, 4
          %s1887 = int_to_ptr.hbm [resolvable:$true] %s1886
          %s1888 = sshll.u32 [#allocation53], 4
          %s1889 = int_to_ptr.vmem [resolvable:$true] %s1888
          %1891 = dma.hbm_to_vmem [thread:$0]  %s1887, 16, %s1889, [#allocation54]
        $region180: #{tpu_custom_call.1} parent=11 // pred_fallthru
          _
        // Predicated region
        $region181: #{tpu_custom_call.1} parent=11 // pred_check
          %p1892 = pneg %p1082
        $region182: #{tpu_custom_call.1} parent=11 // pred_check_branch
          %1894 = sbr.rel (%p1892) target = $region184
        $region183: #{tpu_custom_call.1} parent=11 // pred_region
          _
        $region184: #{tpu_custom_call.1} parent=11 // pred_fallthru
          _
        // Predicated region
        $region185: #{tpu_custom_call.1} parent=11 // pred_check
          %p1895 = pneg %p1103
        $region186: #{tpu_custom_call.1} parent=11 // pred_check_branch
          %1897 = sbr.rel (%p1895) target = $region188
        $region187: #{tpu_custom_call.1} parent=11 // pred_region
          %1899 = vsyncadd [#allocation54], 0
          %s1901 = sshll.u32 %s89, 4
          %s1902 = int_to_ptr.hbm [resolvable:$true] %s1901
          %s1903 = sshll.u32 [#allocation55], 4
          %s1904 = int_to_ptr.vmem [resolvable:$true] %s1903
          %1906 = dma.hbm_to_vmem [thread:$0]  %s1902, 16, %s1904, [#allocation54]
        $region188: #{tpu_custom_call.1} parent=11 // pred_fallthru
          _
        // Predicated region
        $region189: #{tpu_custom_call.1} parent=11 // pred_check
          %p1907 = pneg %p1124
        $region190: #{tpu_custom_call.1} parent=11 // pred_check_branch
          %1909 = sbr.rel (%p1907) target = $region192
        $region191: #{tpu_custom_call.1} parent=11 // pred_region
          %1911 = vsyncadd [#allocation57], 0
          %s1912 = sshll.u32 %s91, 4
          %s1913 = int_to_ptr.hbm [resolvable:$true] %s1912
          %s1914 = sshll.u32 [#allocation56], 4
          %s1915 = int_to_ptr.vmem [resolvable:$true] %s1914
          %1920 = dma.hbm_to_vmem [thread:$0]  %s1913, 1024, %s1915, [#allocation57], 128, 128, 8
        $region192: #{tpu_custom_call.1} parent=11 // pred_fallthru
          _
        // Predicated region
        $region193: #{tpu_custom_call.1} parent=11 // pred_check
          %p1921 = pneg %p1145
        $region194: #{tpu_custom_call.1} parent=11 // pred_check_branch
          %1923 = sbr.rel (%p1921) target = $region196
        $region195: #{tpu_custom_call.1} parent=11 // pred_region
          %1925 = vsyncadd [#allocation57], 0
          %s1926 = sshll.u32 %s93, 4
          %s1927 = int_to_ptr.hbm [resolvable:$true] %s1926
          %s1928 = sshll.u32 [#allocation58], 4
          %s1929 = int_to_ptr.vmem [resolvable:$true] %s1928
          %1934 = dma.hbm_to_vmem [thread:$0]  %s1927, 1024, %s1929, [#allocation57], 128, 128, 8
        $region196: #{tpu_custom_call.1} parent=11 // pred_fallthru
          _
        // Predicated region
        $region197: #{tpu_custom_call.1} parent=11 // pred_check
          %p1935 = pneg %p1166
        $region198: #{tpu_custom_call.1} parent=11 // pred_check_branch
          %1937 = sbr.rel (%p1935) target = $region200
        $region199: #{tpu_custom_call.1} parent=11 // pred_region
          %1939 = vsyncadd [#allocation60], 0
          %s1940 = sshll.u32 %s95, 4
          %s1941 = int_to_ptr.hbm [resolvable:$true] %s1940
          %s1942 = sshll.u32 [#allocation59], 4
          %s1943 = int_to_ptr.vmem [resolvable:$true] %s1942
          %1948 = dma.hbm_to_vmem [thread:$0]  %s1941, 1024, %s1943, [#allocation60], 128, 128, 8
        $region200: #{tpu_custom_call.1} parent=11 // pred_fallthru
          _
        // Predicated region
        $region201: #{tpu_custom_call.1} parent=11 // pred_check
          %p1949 = pneg %p1187
        $region202: #{tpu_custom_call.1} parent=11 // pred_check_branch
          %1951 = sbr.rel (%p1949) target = $region204
        $region203: #{tpu_custom_call.1} parent=11 // pred_region
          %1953 = vsyncadd [#allocation60], 0
          %s1955 = sshll.u32 %s97, 4
          %s1956 = int_to_ptr.hbm [resolvable:$true] %s1955
          %s1957 = sshll.u32 [#allocation61], 4
          %s1958 = int_to_ptr.vmem [resolvable:$true] %s1957
          %1960 = dma.hbm_to_vmem [thread:$0]  %s1956, 128, %s1958, [#allocation60]
        $region204: #{tpu_custom_call.1} parent=11 // pred_fallthru
          _
        // Predicated region
        $region205: #{tpu_custom_call.1} parent=11 // pred_check
          %p1961 = pneg %p1208
        $region206: #{tpu_custom_call.1} parent=11 // pred_check_branch
          %1963 = sbr.rel (%p1961) target = $region208
        $region207: #{tpu_custom_call.1} parent=11 // pred_region
          %1965 = vsyncadd [#allocation63], 0
          %s1967 = sshll.u32 %s99, 4
          %s1968 = int_to_ptr.hbm [resolvable:$true] %s1967
          %s1969 = sshll.u32 [#allocation62], 4
          %s1970 = int_to_ptr.vmem [resolvable:$true] %s1969
          %1972 = dma.hbm_to_vmem [thread:$0]  %s1968, 128, %s1970, [#allocation63]
        $region208: #{tpu_custom_call.1} parent=11 // pred_fallthru
          _
        // Predicated region
        $region209: #{tpu_custom_call.1} parent=11 // pred_check
          %p1973 = pneg %p1229
        $region210: #{tpu_custom_call.1} parent=11 // pred_check_branch
          %1975 = sbr.rel (%p1973) target = $region212
        $region211: #{tpu_custom_call.1} parent=11 // pred_region
          %1977 = vsyncadd [#allocation63], 0
          %s1979 = sshll.u32 %s101, 4
          %s1980 = int_to_ptr.hbm [resolvable:$true] %s1979
          %s1981 = sshll.u32 [#allocation64], 4
          %s1982 = int_to_ptr.vmem [resolvable:$true] %s1981
          %1984 = dma.hbm_to_vmem [thread:$0]  %s1980, 16, %s1982, [#allocation63]
        $region212: #{tpu_custom_call.1} parent=11 // pred_fallthru
          _
        // Predicated region
        $region213: #{tpu_custom_call.1} parent=11 // pred_check
          %p1985 = pneg %p1250
        $region214: #{tpu_custom_call.1} parent=11 // pred_check_branch
          %1987 = sbr.rel (%p1985) target = $region216
        $region215: #{tpu_custom_call.1} parent=11 // pred_region
          %1989 = vsyncadd [#allocation66], 0
          %s1990 = sshll.u32 %s103, 4
          %s1991 = int_to_ptr.hbm [resolvable:$true] %s1990
          %s1992 = sshll.u32 [#allocation65], 4
          %s1993 = int_to_ptr.vmem [resolvable:$true] %s1992
          %1998 = dma.hbm_to_vmem [thread:$0]  %s1991, 1024, %s1993, [#allocation66], 128, 128, 8
        $region216: #{tpu_custom_call.1} parent=11 // pred_fallthru
          _
        // Predicated region
        $region217: #{tpu_custom_call.1} parent=11 // pred_check
          %p1999 = pneg %p1271
        $region218: #{tpu_custom_call.1} parent=11 // pred_check_branch
          %2001 = sbr.rel (%p1999) target = $region220
        $region219: #{tpu_custom_call.1} parent=11 // pred_region
          _
        $region220: #{tpu_custom_call.1} parent=11 // pred_fallthru
          _
        // Predicated region
        $region221: #{tpu_custom_call.1} parent=11 // pred_check
          %p2002 = pneg %p1292
        $region222: #{tpu_custom_call.1} parent=11 // pred_check_branch
          %2004 = sbr.rel (%p2002) target = $region224
        $region223: #{tpu_custom_call.1} parent=11 // pred_region
          _
        $region224: #{tpu_custom_call.1} parent=11 // pred_fallthru
          _
        // Predicated region
        $region225: #{tpu_custom_call.1} parent=11 // pred_check
          %p2005 = pneg %p1313
        $region226: #{tpu_custom_call.1} parent=11 // pred_check_branch
          %2007 = sbr.rel (%p2005) target = $region228
        $region227: #{tpu_custom_call.1} parent=11 // pred_region
          %2009 = vsyncadd [#allocation66], 0
          %s2011 = sshll.u32 %s109, 4
          %s2012 = int_to_ptr.hbm [resolvable:$true] %s2011
          %s2013 = sshll.u32 [#allocation67], 4
          %s2014 = int_to_ptr.vmem [resolvable:$true] %s2013
          %2016 = dma.hbm_to_vmem [thread:$0]  %s2012, 64, %s2014, [#allocation66]
        $region228: #{tpu_custom_call.1} parent=11 // pred_fallthru
          _
        // Predicated region
        $region229: #{tpu_custom_call.1} parent=11 // pred_check
          %p2017 = pneg %p1334
        $region230: #{tpu_custom_call.1} parent=11 // pred_check_branch
          %2019 = sbr.rel (%p2017) target = $region232
        $region231: #{tpu_custom_call.1} parent=11 // pred_region
          %2021 = vsyncadd [#allocation69], 0
          %s2023 = sshll.u32 %s111, 4
          %s2024 = int_to_ptr.hbm [resolvable:$true] %s2023
          %s2025 = sshll.u32 [#allocation68], 4
          %s2026 = int_to_ptr.vmem [resolvable:$true] %s2025
          %2028 = dma.hbm_to_vmem [thread:$0]  %s2024, 16, %s2026, [#allocation69]
        $region232: #{tpu_custom_call.1} parent=11 // pred_fallthru
          _
        // Predicated region
        $region233: #{tpu_custom_call.1} parent=11 // pred_check
          %p2029 = pneg %p1355
        $region234: #{tpu_custom_call.1} parent=11 // pred_check_branch
          %2031 = sbr.rel (%p2029) target = $region236
        $region235: #{tpu_custom_call.1} parent=11 // pred_region
          _
        $region236: #{tpu_custom_call.1} parent=11 // pred_fallthru
          _
      $region12: #{tpu_custom_call.1} parent=5 // pred_fallthru
        _
      %p2032 = scmp.lt.s32.totalorder %s153, 2
      // Predicated region
      $region237: #{tpu_custom_call.1} parent=5 // pred_check
        %p2033 = pneg %p2032
      $region238: #{tpu_custom_call.1} parent=5 // pred_check_branch
        %2035 = sbr.rel (%p2033) target = $region240
      $region239: #{tpu_custom_call.1} parent=5 // pred_region
        // Predicated region
        $region241: #{tpu_custom_call.1} parent=239 // pred_check
          %p2036 = pneg %p173
        $region242: #{tpu_custom_call.1} parent=239 // pred_check_branch
          %2038 = sbr.rel (%p2036) target = $region244
        $region243: #{tpu_custom_call.1} parent=239 // pred_region
          %p2039 = scmp.lt.s32.totalorder %s153, 1
          %s2040 = scalar_select %p2039, %s153, 1
          %s2041 = smul.addr %s2040, 2
          %s2042 = smul.addr %s2041, 8
          %s2043 = scalar_lea.vmem %s1, %s2042
        $region244: #{tpu_custom_call.1} parent=239 // pred_fallthru
          _
      $region240: #{tpu_custom_call.1} parent=5 // pred_fallthru
        _
      %p2044 = scmp.le.s32.totalorder 1, %s153
      %p2045 = scmp.lt.s32.totalorder %s153, 3
      %p2046 = pnand %p2044, %p2045
      %p2047 = pneg %p2046
      // Predicated region
      $region245: #{tpu_custom_call.1} parent=5 // pred_check
        _
      $region246: #{tpu_custom_call.1} parent=5 // pred_check_branch
        %2049 = sbr.rel (%p2046) target = $region248
      $region247: #{tpu_custom_call.1} parent=5 // pred_region
        %s2050 = ssub.s32 %s153, 1
        // Predicated region
        $region249: #{tpu_custom_call.1} parent=247 // pred_check
          %p2051 = pneg %p200
        $region250: #{tpu_custom_call.1} parent=247 // pred_check_branch
          %2053 = sbr.rel (%p2051) target = $region252
        $region251: #{tpu_custom_call.1} parent=247 // pred_region
          %2055 = dma.done [#allocation3], 32
        $region252: #{tpu_custom_call.1} parent=247 // pred_fallthru
          _
        // Predicated region
        $region253: #{tpu_custom_call.1} parent=247 // pred_check
          %p2056 = pneg %p263
        $region254: #{tpu_custom_call.1} parent=247 // pred_check_branch
          %2058 = sbr.rel (%p2056) target = $region256
        $region255: #{tpu_custom_call.1} parent=247 // pred_region
          %2060 = dma.done [#allocation6], 2048
        $region256: #{tpu_custom_call.1} parent=247 // pred_fallthru
          _
        // Predicated region
        $region257: #{tpu_custom_call.1} parent=247 // pred_check
          %p2061 = pneg %p305
        $region258: #{tpu_custom_call.1} parent=247 // pred_check_branch
          %2063 = sbr.rel (%p2061) target = $region260
        $region259: #{tpu_custom_call.1} parent=247 // pred_region
          %2065 = dma.done [#allocation6], 256
        $region260: #{tpu_custom_call.1} parent=247 // pred_fallthru
          _
        // Predicated region
        $region261: #{tpu_custom_call.1} parent=247 // pred_check
          %p2066 = pneg %p368
        $region262: #{tpu_custom_call.1} parent=247 // pred_check_branch
          %2068 = sbr.rel (%p2066) target = $region264
        $region263: #{tpu_custom_call.1} parent=247 // pred_region
          %2070 = dma.done [#allocation9], 16
        $region264: #{tpu_custom_call.1} parent=247 // pred_fallthru
          _
        // Predicated region
        $region265: #{tpu_custom_call.1} parent=247 // pred_check
          %p2071 = pneg %p389
        $region266: #{tpu_custom_call.1} parent=247 // pred_check_branch
          %2073 = sbr.rel (%p2071) target = $region268
        $region267: #{tpu_custom_call.1} parent=247 // pred_region
          %2075 = dma.done [#allocation9], 2048
        $region268: #{tpu_custom_call.1} parent=247 // pred_fallthru
          _
        // Predicated region
        $region269: #{tpu_custom_call.1} parent=247 // pred_check
          %p2076 = pneg %p410
        $region270: #{tpu_custom_call.1} parent=247 // pred_check_branch
          %2078 = sbr.rel (%p2076) target = $region272
        $region271: #{tpu_custom_call.1} parent=247 // pred_region
          %2080 = dma.done [#allocation12], 2048
        $region272: #{tpu_custom_call.1} parent=247 // pred_fallthru
          _
        // Predicated region
        $region273: #{tpu_custom_call.1} parent=247 // pred_check
          %p2081 = pneg %p431
        $region274: #{tpu_custom_call.1} parent=247 // pred_check_branch
          %2083 = sbr.rel (%p2081) target = $region276
        $region275: #{tpu_custom_call.1} parent=247 // pred_region
          %2085 = dma.done [#allocation12], 2048
        $region276: #{tpu_custom_call.1} parent=247 // pred_fallthru
          _
        // Predicated region
        $region277: #{tpu_custom_call.1} parent=247 // pred_check
          %p2086 = pneg %p452
        $region278: #{tpu_custom_call.1} parent=247 // pred_check_branch
          %2088 = sbr.rel (%p2086) target = $region280
        $region279: #{tpu_custom_call.1} parent=247 // pred_region
          %2090 = dma.done [#allocation15], 256
        $region280: #{tpu_custom_call.1} parent=247 // pred_fallthru
          _
        // Predicated region
        $region281: #{tpu_custom_call.1} parent=247 // pred_check
          %p2091 = pneg %p473
        $region282: #{tpu_custom_call.1} parent=247 // pred_check_branch
          %2093 = sbr.rel (%p2091) target = $region284
        $region283: #{tpu_custom_call.1} parent=247 // pred_region
          %2095 = dma.done [#allocation15], 256
        $region284: #{tpu_custom_call.1} parent=247 // pred_fallthru
          _
        // Predicated region
        $region285: #{tpu_custom_call.1} parent=247 // pred_check
          %p2096 = pneg %p494
        $region286: #{tpu_custom_call.1} parent=247 // pred_check_branch
          %2098 = sbr.rel (%p2096) target = $region288
        $region287: #{tpu_custom_call.1} parent=247 // pred_region
          %2100 = dma.done [#allocation18], 32
        $region288: #{tpu_custom_call.1} parent=247 // pred_fallthru
          _
        // Predicated region
        $region289: #{tpu_custom_call.1} parent=247 // pred_check
          %p2101 = pneg %p515
        $region290: #{tpu_custom_call.1} parent=247 // pred_check_branch
          %2103 = sbr.rel (%p2101) target = $region292
        $region291: #{tpu_custom_call.1} parent=247 // pred_region
          %2105 = dma.done [#allocation18], 4096
        $region292: #{tpu_custom_call.1} parent=247 // pred_fallthru
          _
        // Predicated region
        $region293: #{tpu_custom_call.1} parent=247 // pred_check
          %p2106 = pneg %p536
        $region294: #{tpu_custom_call.1} parent=247 // pred_check_branch
          %2108 = sbr.rel (%p2106) target = $region296
        $region295: #{tpu_custom_call.1} parent=247 // pred_region
          %2110 = dma.done [#allocation21], 16
        $region296: #{tpu_custom_call.1} parent=247 // pred_fallthru
          _
        // Predicated region
        $region297: #{tpu_custom_call.1} parent=247 // pred_check
          %p2111 = pneg %p578
        $region298: #{tpu_custom_call.1} parent=247 // pred_check_branch
          %2113 = sbr.rel (%p2111) target = $region300
        $region299: #{tpu_custom_call.1} parent=247 // pred_region
          %2115 = dma.done [#allocation21], 16
        $region300: #{tpu_custom_call.1} parent=247 // pred_fallthru
          _
        // Predicated region
        $region301: #{tpu_custom_call.1} parent=247 // pred_check
          %p2116 = pneg %p620
        $region302: #{tpu_custom_call.1} parent=247 // pred_check_branch
          %2118 = sbr.rel (%p2116) target = $region304
        $region303: #{tpu_custom_call.1} parent=247 // pred_region
          %2120 = dma.done [#allocation24], 1024
        $region304: #{tpu_custom_call.1} parent=247 // pred_fallthru
          _
        // Predicated region
        $region305: #{tpu_custom_call.1} parent=247 // pred_check
          %p2121 = pneg %p641
        $region306: #{tpu_custom_call.1} parent=247 // pred_check_branch
          %2123 = sbr.rel (%p2121) target = $region308
        $region307: #{tpu_custom_call.1} parent=247 // pred_region
          %2125 = dma.done [#allocation24], 1024
        $region308: #{tpu_custom_call.1} parent=247 // pred_fallthru
          _
        // Predicated region
        $region309: #{tpu_custom_call.1} parent=247 // pred_check
          %p2126 = pneg %p662
        $region310: #{tpu_custom_call.1} parent=247 // pred_check_branch
          %2128 = sbr.rel (%p2126) target = $region312
        $region311: #{tpu_custom_call.1} parent=247 // pred_region
          %2130 = dma.done [#allocation27], 128
        $region312: #{tpu_custom_call.1} parent=247 // pred_fallthru
          _
        // Predicated region
        $region313: #{tpu_custom_call.1} parent=247 // pred_check
          %p2131 = pneg %p683
        $region314: #{tpu_custom_call.1} parent=247 // pred_check_branch
          %2133 = sbr.rel (%p2131) target = $region316
        $region315: #{tpu_custom_call.1} parent=247 // pred_region
          %2135 = dma.done [#allocation27], 128
        $region316: #{tpu_custom_call.1} parent=247 // pred_fallthru
          _
        // Predicated region
        $region317: #{tpu_custom_call.1} parent=247 // pred_check
          %p2136 = pneg %p704
        $region318: #{tpu_custom_call.1} parent=247 // pred_check_branch
          %2138 = sbr.rel (%p2136) target = $region320
        $region319: #{tpu_custom_call.1} parent=247 // pred_region
          %2140 = dma.done [#allocation30], 16
        $region320: #{tpu_custom_call.1} parent=247 // pred_fallthru
          _
        // Predicated region
        $region321: #{tpu_custom_call.1} parent=247 // pred_check
          %p2141 = pneg %p725
        $region322: #{tpu_custom_call.1} parent=247 // pred_check_branch
          %2143 = sbr.rel (%p2141) target = $region324
        $region323: #{tpu_custom_call.1} parent=247 // pred_region
          %2145 = dma.done [#allocation30], 1024
        $region324: #{tpu_custom_call.1} parent=247 // pred_fallthru
          _
        // Predicated region
        $region325: #{tpu_custom_call.1} parent=247 // pred_check
          %p2146 = pneg %p746
        $region326: #{tpu_custom_call.1} parent=247 // pred_check_branch
          %2148 = sbr.rel (%p2146) target = $region328
        $region327: #{tpu_custom_call.1} parent=247 // pred_region
          %2150 = dma.done [#allocation33], 16
        $region328: #{tpu_custom_call.1} parent=247 // pred_fallthru
          _
        // Predicated region
        $region329: #{tpu_custom_call.1} parent=247 // pred_check
          %p2151 = pneg %p767
        $region330: #{tpu_custom_call.1} parent=247 // pred_check_branch
          %2153 = sbr.rel (%p2151) target = $region332
        $region331: #{tpu_custom_call.1} parent=247 // pred_region
          %2155 = dma.done [#allocation33], 4096
        $region332: #{tpu_custom_call.1} parent=247 // pred_fallthru
          _
        // Predicated region
        $region333: #{tpu_custom_call.1} parent=247 // pred_check
          %p2156 = pneg %p788
        $region334: #{tpu_custom_call.1} parent=247 // pred_check_branch
          %2158 = sbr.rel (%p2156) target = $region336
        $region335: #{tpu_custom_call.1} parent=247 // pred_region
          %2160 = dma.done [#allocation36], 16
        $region336: #{tpu_custom_call.1} parent=247 // pred_fallthru
          _
        // Predicated region
        $region337: #{tpu_custom_call.1} parent=247 // pred_check
          %p2161 = pneg %p809
        $region338: #{tpu_custom_call.1} parent=247 // pred_check_branch
          %2163 = sbr.rel (%p2161) target = $region340
        $region339: #{tpu_custom_call.1} parent=247 // pred_region
          %2165 = dma.done [#allocation36], 2048
        $region340: #{tpu_custom_call.1} parent=247 // pred_fallthru
          _
        // Predicated region
        $region341: #{tpu_custom_call.1} parent=247 // pred_check
          %p2166 = pneg %p830
        $region342: #{tpu_custom_call.1} parent=247 // pred_check_branch
          %2168 = sbr.rel (%p2166) target = $region344
        $region343: #{tpu_custom_call.1} parent=247 // pred_region
          %2170 = dma.done [#allocation39], 2048
        $region344: #{tpu_custom_call.1} parent=247 // pred_fallthru
          _
        // Predicated region
        $region345: #{tpu_custom_call.1} parent=247 // pred_check
          %p2171 = pneg %p851
        $region346: #{tpu_custom_call.1} parent=247 // pred_check_branch
          %2173 = sbr.rel (%p2171) target = $region348
        $region347: #{tpu_custom_call.1} parent=247 // pred_region
          %2175 = dma.done [#allocation39], 2048
        $region348: #{tpu_custom_call.1} parent=247 // pred_fallthru
          _
        // Predicated region
        $region349: #{tpu_custom_call.1} parent=247 // pred_check
          %p2176 = pneg %p872
        $region350: #{tpu_custom_call.1} parent=247 // pred_check_branch
          %2178 = sbr.rel (%p2176) target = $region352
        $region351: #{tpu_custom_call.1} parent=247 // pred_region
          %2180 = dma.done [#allocation42], 256
        $region352: #{tpu_custom_call.1} parent=247 // pred_fallthru
          _
        // Predicated region
        $region353: #{tpu_custom_call.1} parent=247 // pred_check
          %p2181 = pneg %p893
        $region354: #{tpu_custom_call.1} parent=247 // pred_check_branch
          %2183 = sbr.rel (%p2181) target = $region356
        $region355: #{tpu_custom_call.1} parent=247 // pred_region
          %2185 = dma.done [#allocation42], 256
        $region356: #{tpu_custom_call.1} parent=247 // pred_fallthru
          _
        // Predicated region
        $region357: #{tpu_custom_call.1} parent=247 // pred_check
          %p2186 = pneg %p914
        $region358: #{tpu_custom_call.1} parent=247 // pred_check_branch
          %2188 = sbr.rel (%p2186) target = $region360
        $region359: #{tpu_custom_call.1} parent=247 // pred_region
          %2190 = dma.done [#allocation45], 16
        $region360: #{tpu_custom_call.1} parent=247 // pred_fallthru
          _
        // Predicated region
        $region361: #{tpu_custom_call.1} parent=247 // pred_check
          %p2191 = pneg %p935
        $region362: #{tpu_custom_call.1} parent=247 // pred_check_branch
          %2193 = sbr.rel (%p2191) target = $region364
        $region363: #{tpu_custom_call.1} parent=247 // pred_region
          %2195 = dma.done [#allocation45], 2048
        $region364: #{tpu_custom_call.1} parent=247 // pred_fallthru
          _
        // Predicated region
        $region365: #{tpu_custom_call.1} parent=247 // pred_check
          %p2196 = pneg %p956
        $region366: #{tpu_custom_call.1} parent=247 // pred_check_branch
          %2198 = sbr.rel (%p2196) target = $region368
        $region367: #{tpu_custom_call.1} parent=247 // pred_region
          %2200 = dma.done [#allocation48], 4096
        $region368: #{tpu_custom_call.1} parent=247 // pred_fallthru
          _
        // Predicated region
        $region369: #{tpu_custom_call.1} parent=247 // pred_check
          %p2201 = pneg %p977
        $region370: #{tpu_custom_call.1} parent=247 // pred_check_branch
          %2203 = sbr.rel (%p2201) target = $region372
        $region371: #{tpu_custom_call.1} parent=247 // pred_region
          %2205 = dma.done [#allocation48], 128
        $region372: #{tpu_custom_call.1} parent=247 // pred_fallthru
          _
        // Predicated region
        $region373: #{tpu_custom_call.1} parent=247 // pred_check
          %p2206 = pneg %p998
        $region374: #{tpu_custom_call.1} parent=247 // pred_check_branch
          %2208 = sbr.rel (%p2206) target = $region376
        $region375: #{tpu_custom_call.1} parent=247 // pred_region
          %2210 = dma.done [#allocation51], 128
        $region376: #{tpu_custom_call.1} parent=247 // pred_fallthru
          _
        // Predicated region
        $region377: #{tpu_custom_call.1} parent=247 // pred_check
          %p2211 = pneg %p1019
        $region378: #{tpu_custom_call.1} parent=247 // pred_check_branch
          %2213 = sbr.rel (%p2211) target = $region380
        $region379: #{tpu_custom_call.1} parent=247 // pred_region
          %2215 = dma.done [#allocation51], 16
        $region380: #{tpu_custom_call.1} parent=247 // pred_fallthru
          _
        // Predicated region
        $region381: #{tpu_custom_call.1} parent=247 // pred_check
          %p2216 = pneg %p1061
        $region382: #{tpu_custom_call.1} parent=247 // pred_check_branch
          %2218 = sbr.rel (%p2216) target = $region384
        $region383: #{tpu_custom_call.1} parent=247 // pred_region
          %2220 = dma.done [#allocation54], 16
        $region384: #{tpu_custom_call.1} parent=247 // pred_fallthru
          _
        // Predicated region
        $region385: #{tpu_custom_call.1} parent=247 // pred_check
          %p2221 = pneg %p1103
        $region386: #{tpu_custom_call.1} parent=247 // pred_check_branch
          %2223 = sbr.rel (%p2221) target = $region388
        $region387: #{tpu_custom_call.1} parent=247 // pred_region
          %2225 = dma.done [#allocation54], 16
        $region388: #{tpu_custom_call.1} parent=247 // pred_fallthru
          _
        // Predicated region
        $region389: #{tpu_custom_call.1} parent=247 // pred_check
          %p2226 = pneg %p1124
        $region390: #{tpu_custom_call.1} parent=247 // pred_check_branch
          %2228 = sbr.rel (%p2226) target = $region392
        $region391: #{tpu_custom_call.1} parent=247 // pred_region
          %2230 = dma.done [#allocation57], 1024
        $region392: #{tpu_custom_call.1} parent=247 // pred_fallthru
          _
        // Predicated region
        $region393: #{tpu_custom_call.1} parent=247 // pred_check
          %p2231 = pneg %p1145
        $region394: #{tpu_custom_call.1} parent=247 // pred_check_branch
          %2233 = sbr.rel (%p2231) target = $region396
        $region395: #{tpu_custom_call.1} parent=247 // pred_region
          %2235 = dma.done [#allocation57], 1024
        $region396: #{tpu_custom_call.1} parent=247 // pred_fallthru
          _
        // Predicated region
        $region397: #{tpu_custom_call.1} parent=247 // pred_check
          %p2236 = pneg %p1166
        $region398: #{tpu_custom_call.1} parent=247 // pred_check_branch
          %2238 = sbr.rel (%p2236) target = $region400
        $region399: #{tpu_custom_call.1} parent=247 // pred_region
          %2240 = dma.done [#allocation60], 1024
        $region400: #{tpu_custom_call.1} parent=247 // pred_fallthru
          _
        // Predicated region
        $region401: #{tpu_custom_call.1} parent=247 // pred_check
          %p2241 = pneg %p1187
        $region402: #{tpu_custom_call.1} parent=247 // pred_check_branch
          %2243 = sbr.rel (%p2241) target = $region404
        $region403: #{tpu_custom_call.1} parent=247 // pred_region
          %2245 = dma.done [#allocation60], 128
        $region404: #{tpu_custom_call.1} parent=247 // pred_fallthru
          _
        // Predicated region
        $region405: #{tpu_custom_call.1} parent=247 // pred_check
          %p2246 = pneg %p1208
        $region406: #{tpu_custom_call.1} parent=247 // pred_check_branch
          %2248 = sbr.rel (%p2246) target = $region408
        $region407: #{tpu_custom_call.1} parent=247 // pred_region
          %2250 = dma.done [#allocation63], 128
        $region408: #{tpu_custom_call.1} parent=247 // pred_fallthru
          _
        // Predicated region
        $region409: #{tpu_custom_call.1} parent=247 // pred_check
          %p2251 = pneg %p1229
        $region410: #{tpu_custom_call.1} parent=247 // pred_check_branch
          %2253 = sbr.rel (%p2251) target = $region412
        $region411: #{tpu_custom_call.1} parent=247 // pred_region
          %2255 = dma.done [#allocation63], 16
        $region412: #{tpu_custom_call.1} parent=247 // pred_fallthru
          _
        // Predicated region
        $region413: #{tpu_custom_call.1} parent=247 // pred_check
          %p2256 = pneg %p1250
        $region414: #{tpu_custom_call.1} parent=247 // pred_check_branch
          %2258 = sbr.rel (%p2256) target = $region416
        $region415: #{tpu_custom_call.1} parent=247 // pred_region
          %2260 = dma.done [#allocation66], 1024
        $region416: #{tpu_custom_call.1} parent=247 // pred_fallthru
          _
        // Predicated region
        $region417: #{tpu_custom_call.1} parent=247 // pred_check
          %p2261 = pneg %p1313
        $region418: #{tpu_custom_call.1} parent=247 // pred_check_branch
          %2263 = sbr.rel (%p2261) target = $region420
        $region419: #{tpu_custom_call.1} parent=247 // pred_region
          %2265 = dma.done [#allocation66], 64
        $region420: #{tpu_custom_call.1} parent=247 // pred_fallthru
          _
        // Predicated region
        $region421: #{tpu_custom_call.1} parent=247 // pred_check
          %p2266 = pneg %p1334
        $region422: #{tpu_custom_call.1} parent=247 // pred_check_branch
          %2268 = sbr.rel (%p2266) target = $region424
        $region423: #{tpu_custom_call.1} parent=247 // pred_region
          %2270 = dma.done [#allocation69], 16
        $region424: #{tpu_custom_call.1} parent=247 // pred_fallthru
          _
        %p2271 = scmp.lt.s32.totalorder %s158, 1
        %s2272 = scalar_select %p2271, %s158, 1
        %s2273 = smul.addr %s2272, 2
        %s2274 = smul.addr %s2273, 8
        %s2275 = scalar_lea.vmem %s1, %s2274
        %p2276 = pneg %p179
        %p2277 = pneg %p176
        %p2278 = pneg %p200
        %p2279 = pneg %p197
        %p2280 = pneg %p221
        %p2281 = pneg %p218
        %p2282 = pneg %p242
        %p2283 = pneg %p239
        %p2284 = pneg %p263
        %p2285 = pneg %p260
        %p2286 = pneg %p284
        %p2287 = pneg %p281
        %p2288 = pneg %p305
        %p2289 = pneg %p302
        %p2290 = pneg %p326
        %p2291 = pneg %p323
        %p2292 = pneg %p347
        %p2293 = pneg %p344
        %p2294 = pneg %p368
        %p2295 = pneg %p365
        %p2296 = pneg %p389
        %p2297 = pneg %p386
        %p2298 = pneg %p410
        %p2299 = pneg %p407
        %p2300 = pneg %p431
        %p2301 = pneg %p428
        %p2302 = pneg %p452
        %p2303 = pneg %p449
        %p2304 = pneg %p473
        %p2305 = pneg %p470
        %p2306 = pneg %p494
        %p2307 = pneg %p491
        %p2308 = pneg %p515
        %p2309 = pneg %p512
        %p2310 = pneg %p536
        %p2311 = pneg %p533
        %p2312 = pneg %p557
        %p2313 = pneg %p554
        %p2314 = pneg %p578
        %p2315 = pneg %p575
        %p2316 = pneg %p599
        %p2317 = pneg %p596
        %p2318 = pneg %p620
        %p2319 = pneg %p617
        %p2320 = pneg %p641
        %p2321 = pneg %p638
        %p2322 = pneg %p662
        %p2323 = pneg %p659
        %p2324 = pneg %p683
        %p2325 = pneg %p680
        %p2326 = pneg %p704
        %p2327 = pneg %p701
        %p2328 = pneg %p725
        %p2329 = pneg %p722
        %p2330 = pneg %p746
        %p2331 = pneg %p743
        %p2332 = pneg %p767
        %p2333 = pneg %p764
        %p2334 = pneg %p788
        %p2335 = pneg %p785
        %p2336 = pneg %p809
        %p2337 = pneg %p806
        %p2338 = pneg %p830
        %p2339 = pneg %p827
        %p2340 = pneg %p851
        %p2341 = pneg %p848
        %p2342 = pneg %p872
        %p2343 = pneg %p869
        %p2344 = pneg %p893
        %p2345 = pneg %p890
        %p2346 = pneg %p914
        %p2347 = pneg %p911
        %p2348 = pneg %p935
        %p2349 = pneg %p932
        %p2350 = pneg %p956
        %p2351 = pneg %p953
        %p2352 = pneg %p977
        %p2353 = pneg %p974
        %p2354 = pneg %p998
        %p2355 = pneg %p995
        %p2356 = pneg %p1019
        %p2357 = pneg %p1016
        %p2358 = pneg %p1040
        %p2359 = pneg %p1037
        %p2360 = pneg %p1061
        %p2361 = pneg %p1058
        %p2362 = pneg %p1082
        %p2363 = pneg %p1079
        %p2364 = pneg %p1103
        %p2365 = pneg %p1100
        %p2366 = pneg %p1124
        %p2367 = pneg %p1121
        %p2368 = pneg %p1145
        %p2369 = pneg %p1142
        %p2370 = pneg %p1166
        %p2371 = pneg %p1163
        %p2372 = pneg %p1187
        %p2373 = pneg %p1184
        %p2374 = pneg %p1208
        %p2375 = pneg %p1205
        %p2376 = pneg %p1229
        %p2377 = pneg %p1226
        %p2378 = pneg %p1250
        %p2379 = pneg %p1247
        %p2380 = pneg %p1271
        %p2381 = pneg %p1268
        %p2382 = pneg %p1292
        %p2383 = pneg %p1289
        %p2384 = pneg %p1313
        %p2385 = pneg %p1310
        %p2386 = pneg %p1334
        %p2387 = pneg %p1331
        %p2388 = pneg %p1355
        %p2389 = pneg %p1352
        %p2390 = pneg %p1381
        %p2391 = pneg %p1378
        %s2392 = sand.u32 %s1368, 1
        %s2393 = scalar_lea.sflag [#allocation4], %s2392
        %s2394 = sand.u32 %s1368, 1
        %s2395 = smul.addr %s2394, 8
        %s2396 = scalar_lea.vmem [#allocation70], %s2395
        %p2397 = pneg %p1407
        %p2398 = pneg %p1404
        %s2399 = sand.u32 %s1394, 1
        %s2400 = scalar_lea.sflag [#allocation72], %s2399
        %s2401 = sand.u32 %s1394, 1
        %s2402 = smul.addr %s2401, 4
        %s2403 = scalar_lea.vmem [#allocation71], %s2402
        %p2404 = scmp.lt.s32.totalorder %s158, 1
        %s2405 = scalar_select %p2404, %s158, 1
        %s2406 = smul.addr %s2405, 2
        %s2407 = smul.addr %s2406, 8
        %s2408 = scalar_lea.vmem %s1, %s2407
        %v2409 = vld [vmem:[%s2408] sm:$0xff]
        %v2410 = vld [vmem:[%s2408 + $0x8] sm:$0xff]
        %v2411 = vld [vmem:[#allocation2] sm:$0x3]
        %v2412 = vld [vmem:[%s11] sm:$0xff]
        %v2413 = vld [vmem:[%s11 + $0x8] sm:$0xff]
        %vm2414 = vcmask 130048
        %v2416 = vsel %vm2414, %v2412, 0
        %v2419 = vsel %vm2414, %v2413, 0
        %2421 = vmatpush.msra.mxu0 0.0
        %2422 = vmatpush.msra.mxu0 0.0
        %2423 = vmatpush.msra.mxu0 0.0
        %2424 = vmatpush.msra.mxu0 0.0
        %2425 = vmatpush.msra.mxu0 0.0
        %2426 = vmatpush.msra.mxu0 0.0
        %2427 = vmatpush.msra.mxu0 0.0
        %2428 = vmatpush.msra.mxu0 0.0
        %2429 = vmatpush.msra.mxu0 0.0
        %2430 = vmatpush.msra.mxu0 0.0
        %2431 = vmatpush.msra.mxu0 0.0
        %2432 = vmatpush.msra.mxu0 0.0
        %2433 = vmatpush.msra.mxu0 0.0
        %2434 = vmatpush.msra.mxu0 0.0
        %2435 = vmatpush.msra.mxu0 %v2410
        %2436 = vmatpush.msra.mxu0 %v2409
        %2437 = vmatmul.f32.gmra.mxu0 %v2416
        %v2438 = vpop.f32.mrf.mxu0
        %v2439 = vadd.f32 0.0, %v2438
        %2440 = vmatmul.f32.gmra.mxu0 %v2419
        %v2441 = vpop.f32.mrf.mxu0
        %v2442 = vadd.f32 0.0, %v2441
        %2443 = vdwg.mxu0
        %v2444 = vld [vmem:[%s5] sm:$0xff]
        %v2445 = vld [vmem:[%s5 + $0x8] sm:$0xff]
        %v2446 = vld [vmem:[%s5 + $0x10] sm:$0xff]
        %v2447 = vld [vmem:[%s5 + $0x18] sm:$0xff]
        %v2448 = vld [vmem:[%s5 + $0x20] sm:$0xff]
        %v2449 = vld [vmem:[%s5 + $0x28] sm:$0xff]
        %v2450 = vld [vmem:[%s5 + $0x30] sm:$0xff]
        %v2451 = vld [vmem:[%s5 + $0x38] sm:$0xff]
        %v2452 = vld [vmem:[%s5 + $0x40] sm:$0xff]
        %v2453 = vld [vmem:[%s5 + $0x48] sm:$0xff]
        %v2454 = vld [vmem:[%s5 + $0x50] sm:$0xff]
        %v2455 = vld [vmem:[%s5 + $0x58] sm:$0xff]
        %v2456 = vld [vmem:[%s5 + $0x60] sm:$0xff]
        %v2457 = vld [vmem:[%s5 + $0x68] sm:$0xff]
        %v2458 = vld [vmem:[%s5 + $0x70] sm:$0xff]
        %v2459 = vld [vmem:[%s5 + $0x78] sm:$0xff]
        %vm2460 = vcmask 523264
        %v2462 = vsel %vm2460, %v2439, 0
        %v2465 = vsel %vm2460, %v2442, 0
        %2467 = vmatpush.msra.mxu0 0.0
        %2468 = vmatpush.msra.mxu0 0.0
        %2469 = vmatpush.msra.mxu0 0.0
        %2470 = vmatpush.msra.mxu0 0.0
        %2471 = vmatpush.msra.mxu0 0.0
        %2472 = vmatpush.msra.mxu0 0.0
        %2473 = vmatpush.msra.mxu0 0.0
        %2474 = vmatpush.msra.mxu0 0.0
        %2475 = vmatpush.msra.mxu0 %v2458
        %2476 = vmatpush.msra.mxu0 %v2456
        %2477 = vmatpush.msra.mxu0 %v2454
        %2478 = vmatpush.msra.mxu0 %v2452
        %2479 = vmatpush.msra.mxu0 %v2450
        %2480 = vmatpush.msra.mxu0 %v2448
        %2481 = vmatpush.msra.mxu0 %v2446
        %2482 = vmatpush.msra.mxu0 %v2444
        %2483 = vmatmul.f32.gmra.mxu0 %v2462
        %v2484 = vpop.f32.mrf.mxu0
        %v2485 = vadd.f32 0.0, %v2484
        %2486 = vmatmul.f32.gmra.mxu0 %v2465
        %v2487 = vpop.f32.mrf.mxu0
        %v2488 = vadd.f32 0.0, %v2487
        %2489 = vdwg.mxu0
        %2490 = vmatpush.msra.mxu0 0.0
        %2491 = vmatpush.msra.mxu0 0.0
        %2492 = vmatpush.msra.mxu0 0.0
        %2493 = vmatpush.msra.mxu0 0.0
        %2494 = vmatpush.msra.mxu0 0.0
        %2495 = vmatpush.msra.mxu0 0.0
        %2496 = vmatpush.msra.mxu0 0.0
        %2497 = vmatpush.msra.mxu0 0.0
        %2498 = vmatpush.msra.mxu0 %v2459
        %2499 = vmatpush.msra.mxu0 %v2457
        %2500 = vmatpush.msra.mxu0 %v2455
        %2501 = vmatpush.msra.mxu0 %v2453
        %2502 = vmatpush.msra.mxu0 %v2451
        %2503 = vmatpush.msra.mxu0 %v2449
        %2504 = vmatpush.msra.mxu0 %v2447
        %2505 = vmatpush.msra.mxu0 %v2445
        %2506 = vmatmul.f32.gmra.mxu0 %v2462
        %v2507 = vpop.f32.mrf.mxu0
        %v2508 = vadd.f32 0.0, %v2507
        %2509 = vmatmul.f32.gmra.mxu0 %v2465
        %v2510 = vpop.f32.mrf.mxu0
        %v2511 = vadd.f32 0.0, %v2510
        %2512 = vdwg.mxu0
        %v2514 = vperm.slane %v2411, 0
        %v2515 = vperm.slane %v2411, 1
        %v2518 = vadd.f32 %v2514, %v2485
        %v2519 = vadd.f32 %v2515, %v2508
        %v2520 = vadd.f32 %v2514, %v2488
        %v2521 = vadd.f32 %v2515, %v2511
        %v2522 = vld [vmem:[%s7] sm:$0xff]
        %v2523 = vld [vmem:[%s7 + $0x8] sm:$0xff]
        %v2524 = vld [vmem:[%s7 + $0x10] sm:$0xff]
        %v2525 = vld [vmem:[%s7 + $0x18] sm:$0xff]
        %v2526 = vld [vmem:[%s7 + $0x20] sm:$0xff]
        %v2527 = vld [vmem:[%s7 + $0x28] sm:$0xff]
        %v2528 = vld [vmem:[%s7 + $0x30] sm:$0xff]
        %v2529 = vld [vmem:[%s7 + $0x38] sm:$0xff]
        %v2530 = vld [vmem:[%s7 + $0x40] sm:$0xff]
        %v2531 = vld [vmem:[%s7 + $0x48] sm:$0xff]
        %v2532 = vld [vmem:[%s7 + $0x50] sm:$0xff]
        %v2533 = vld [vmem:[%s7 + $0x58] sm:$0xff]
        %v2534 = vld [vmem:[%s7 + $0x60] sm:$0xff]
        %v2535 = vld [vmem:[%s7 + $0x68] sm:$0xff]
        %v2536 = vld [vmem:[%s7 + $0x70] sm:$0xff]
        %v2537 = vld [vmem:[%s7 + $0x78] sm:$0xff]
        %v2539 = vsel %vm2460, %v2409, 0
        %v2542 = vsel %vm2460, %v2410, 0
        %2544 = vmatpush.msra.mxu0 0.0
        %2545 = vmatpush.msra.mxu0 0.0
        %2546 = vmatpush.msra.mxu0 0.0
        %2547 = vmatpush.msra.mxu0 0.0
        %2548 = vmatpush.msra.mxu0 0.0
        %2549 = vmatpush.msra.mxu0 0.0
        %2550 = vmatpush.msra.mxu0 0.0
        %2551 = vmatpush.msra.mxu0 0.0
        %2552 = vmatpush.msra.mxu0 %v2536
        %2553 = vmatpush.msra.mxu0 %v2534
        %2554 = vmatpush.msra.mxu0 %v2532
        %2555 = vmatpush.msra.mxu0 %v2530
        %2556 = vmatpush.msra.mxu0 %v2528
        %2557 = vmatpush.msra.mxu0 %v2526
        %2558 = vmatpush.msra.mxu0 %v2524
        %2559 = vmatpush.msra.mxu0 %v2522
        %2560 = vmatmul.f32.gmra.mxu0 %v2539
        %v2561 = vpop.f32.mrf.mxu0
        %v2562 = vadd.f32 0.0, %v2561
        %2563 = vmatmul.f32.gmra.mxu0 %v2542
        %v2564 = vpop.f32.mrf.mxu0
        %v2565 = vadd.f32 0.0, %v2564
        %2566 = vdwg.mxu0
        %2567 = vmatpush.msra.mxu0 0.0
        %2568 = vmatpush.msra.mxu0 0.0
        %2569 = vmatpush.msra.mxu0 0.0
        %2570 = vmatpush.msra.mxu0 0.0
        %2571 = vmatpush.msra.mxu0 0.0
        %2572 = vmatpush.msra.mxu0 0.0
        %2573 = vmatpush.msra.mxu0 0.0
        %2574 = vmatpush.msra.mxu0 0.0
        %2575 = vmatpush.msra.mxu0 %v2537
        %2576 = vmatpush.msra.mxu0 %v2535
        %2577 = vmatpush.msra.mxu0 %v2533
        %2578 = vmatpush.msra.mxu0 %v2531
        %2579 = vmatpush.msra.mxu0 %v2529
        %2580 = vmatpush.msra.mxu0 %v2527
        %2581 = vmatpush.msra.mxu0 %v2525
        %2582 = vmatpush.msra.mxu0 %v2523
        %2583 = vmatmul.f32.gmra.mxu0 %v2539
        %v2584 = vpop.f32.mrf.mxu0
        %v2585 = vadd.f32 0.0, %v2584
        %2586 = vmatmul.f32.gmra.mxu0 %v2542
        %v2587 = vpop.f32.mrf.mxu0
        %v2588 = vadd.f32 0.0, %v2587
        %2589 = vdwg.mxu0
        %v2590 = vadd.f32 %v2518, %v2562
        %v2591 = vadd.f32 %v2519, %v2585
        %v2592 = vadd.f32 %v2520, %v2565
        %v2593 = vadd.f32 %v2521, %v2588
        %v2594 = vld [vmem:[#allocation7] sm:$0xff]
        %v2595 = vld [vmem:[#allocation7 + $0x8] sm:$0xff]
        %v2597 = vsel %vm2414, %v2594, 0
        %v2600 = vsel %vm2414, %v2595, 0
        %2602 = vmatpush.msra.mxu0 0.0
        %2603 = vmatpush.msra.mxu0 0.0
        %2604 = vmatpush.msra.mxu0 0.0
        %2605 = vmatpush.msra.mxu0 0.0
        %2606 = vmatpush.msra.mxu0 0.0
        %2607 = vmatpush.msra.mxu0 0.0
        %2608 = vmatpush.msra.mxu0 0.0
        %2609 = vmatpush.msra.mxu0 0.0
        %2610 = vmatpush.msra.mxu0 0.0
        %2611 = vmatpush.msra.mxu0 0.0
        %2612 = vmatpush.msra.mxu0 0.0
        %2613 = vmatpush.msra.mxu0 0.0
        %2614 = vmatpush.msra.mxu0 0.0
        %2615 = vmatpush.msra.mxu0 0.0
        %2616 = vmatpush.msra.mxu0 %v2410
        %2617 = vmatpush.msra.mxu0 %v2409
        %2618 = vmatmul.f32.gmra.mxu0 %v2597
        %v2619 = vpop.f32.mrf.mxu0
        %v2620 = vadd.f32 0.0, %v2619
        %2621 = vmatmul.f32.gmra.mxu0 %v2600
        %v2622 = vpop.f32.mrf.mxu0
        %v2623 = vadd.f32 0.0, %v2622
        %2624 = vdwg.mxu0
        %v2625 = vld [vmem:[#allocation5] sm:$0xff]
        %v2626 = vld [vmem:[#allocation5 + $0x8] sm:$0xff]
        %v2627 = vld [vmem:[#allocation5 + $0x10] sm:$0xff]
        %v2628 = vld [vmem:[#allocation5 + $0x18] sm:$0xff]
        %v2629 = vld [vmem:[#allocation5 + $0x20] sm:$0xff]
        %v2630 = vld [vmem:[#allocation5 + $0x28] sm:$0xff]
        %v2631 = vld [vmem:[#allocation5 + $0x30] sm:$0xff]
        %v2632 = vld [vmem:[#allocation5 + $0x38] sm:$0xff]
        %v2633 = vld [vmem:[#allocation5 + $0x40] sm:$0xff]
        %v2634 = vld [vmem:[#allocation5 + $0x48] sm:$0xff]
        %v2635 = vld [vmem:[#allocation5 + $0x50] sm:$0xff]
        %v2636 = vld [vmem:[#allocation5 + $0x58] sm:$0xff]
        %v2637 = vld [vmem:[#allocation5 + $0x60] sm:$0xff]
        %v2638 = vld [vmem:[#allocation5 + $0x68] sm:$0xff]
        %v2639 = vld [vmem:[#allocation5 + $0x70] sm:$0xff]
        %v2640 = vld [vmem:[#allocation5 + $0x78] sm:$0xff]
        %v2642 = vsel %vm2460, %v2620, 0
        %v2645 = vsel %vm2460, %v2623, 0
        %2647 = vmatpush.msra.mxu0 0.0
        %2648 = vmatpush.msra.mxu0 0.0
        %2649 = vmatpush.msra.mxu0 0.0
        %2650 = vmatpush.msra.mxu0 0.0
        %2651 = vmatpush.msra.mxu0 0.0
        %2652 = vmatpush.msra.mxu0 0.0
        %2653 = vmatpush.msra.mxu0 0.0
        %2654 = vmatpush.msra.mxu0 0.0
        %2655 = vmatpush.msra.mxu0 %v2639
        %2656 = vmatpush.msra.mxu0 %v2637
        %2657 = vmatpush.msra.mxu0 %v2635
        %2658 = vmatpush.msra.mxu0 %v2633
        %2659 = vmatpush.msra.mxu0 %v2631
        %2660 = vmatpush.msra.mxu0 %v2629
        %2661 = vmatpush.msra.mxu0 %v2627
        %2662 = vmatpush.msra.mxu0 %v2625
        %2663 = vmatmul.f32.gmra.mxu0 %v2642
        %v2664 = vpop.f32.mrf.mxu0
        %v2665 = vadd.f32 0.0, %v2664
        %2666 = vmatmul.f32.gmra.mxu0 %v2645
        %v2667 = vpop.f32.mrf.mxu0
        %v2668 = vadd.f32 0.0, %v2667
        %2669 = vdwg.mxu0
        %2670 = vmatpush.msra.mxu0 0.0
        %2671 = vmatpush.msra.mxu0 0.0
        %2672 = vmatpush.msra.mxu0 0.0
        %2673 = vmatpush.msra.mxu0 0.0
        %2674 = vmatpush.msra.mxu0 0.0
        %2675 = vmatpush.msra.mxu0 0.0
        %2676 = vmatpush.msra.mxu0 0.0
        %2677 = vmatpush.msra.mxu0 0.0
        %2678 = vmatpush.msra.mxu0 %v2640
        %2679 = vmatpush.msra.mxu0 %v2638
        %2680 = vmatpush.msra.mxu0 %v2636
        %2681 = vmatpush.msra.mxu0 %v2634
        %2682 = vmatpush.msra.mxu0 %v2632
        %2683 = vmatpush.msra.mxu0 %v2630
        %2684 = vmatpush.msra.mxu0 %v2628
        %2685 = vmatpush.msra.mxu0 %v2626
        %2686 = vmatmul.f32.gmra.mxu0 %v2642
        %v2687 = vpop.f32.mrf.mxu0
        %v2688 = vadd.f32 0.0, %v2687
        %2689 = vmatmul.f32.gmra.mxu0 %v2645
        %v2690 = vpop.f32.mrf.mxu0
        %v2691 = vadd.f32 0.0, %v2690
        %2692 = vdwg.mxu0
        %v2693 = vadd.f32 %v2590, %v2665
        %v2694 = vadd.f32 %v2591, %v2688
        %v2695 = vadd.f32 %v2592, %v2668
        %v2696 = vadd.f32 %v2593, %v2691
        %v2697 = vxor.u32 %v2693, 2147483648
        %v2698 = vxor.u32 %v2694, 2147483648
        %v2699 = vxor.u32 %v2695, 2147483648
        %v2700 = vxor.u32 %v2696, 2147483648
        %v2701 = vmul.f32 %v2697, 1.442695
        %v2702 = vpow.pop %v2701
        %v2703 = vmul.f32 %v2698, 1.442695
        %v2704 = vpow.pop %v2703
        %v2705 = vmul.f32 %v2699, 1.442695
        %v2706 = vpow.pop %v2705
        %v2707 = vmul.f32 %v2700, 1.442695
        %v2708 = vpow.pop %v2707
        %v2709 = vadd.f32 %v2702, 1.0
        %v2710 = vadd.f32 %v2704, 1.0
        %v2711 = vadd.f32 %v2706, 1.0
        %v2712 = vadd.f32 %v2708, 1.0
        %v2713 = vrcp.pop %v2709
        %v2714 = vmul.f32 %v2709, %v2713
        %v2715 = vsub.f32 1.0, %v2714
        %v2716 = vmul.f32 %v2713, %v2715
        %v2717 = vadd.f32 %v2713, %v2716
        %vm2718 = vweird.f32 %v2709
        %vm2719 = vweird.f32 %v2713
        %vm2720 = vmor %vm2718, %vm2719
        %v2721 = vsel %vm2720, %v2713, %v2717
        %v2722 = vand.u32 2147483647, %v2709
        %vm2723 = vcmp.eq.f32.partialorder %v2722, 8.507059e+37
        %v2724 = vand.u32 %v2709, 2147483648
        %v2725 = vor.u32 1.1754944e-38, %v2724
        %v2726 = vsel %vm2723, %v2725, %v2721
        %v2727 = vmul.f32 1.0, %v2726
        %v2728 = vrcp.pop %v2710
        %v2729 = vmul.f32 %v2710, %v2728
        %v2730 = vsub.f32 1.0, %v2729
        %v2731 = vmul.f32 %v2728, %v2730
        %v2732 = vadd.f32 %v2728, %v2731
        %vm2733 = vweird.f32 %v2710
        %vm2734 = vweird.f32 %v2728
        %vm2735 = vmor %vm2733, %vm2734
        %v2736 = vsel %vm2735, %v2728, %v2732
        %v2737 = vand.u32 2147483647, %v2710
        %vm2738 = vcmp.eq.f32.partialorder %v2737, 8.507059e+37
        %v2739 = vand.u32 %v2710, 2147483648
        %v2740 = vor.u32 1.1754944e-38, %v2739
        %v2741 = vsel %vm2738, %v2740, %v2736
        %v2742 = vmul.f32 1.0, %v2741
        %v2743 = vrcp.pop %v2711
        %v2744 = vmul.f32 %v2711, %v2743
        %v2745 = vsub.f32 1.0, %v2744
        %v2746 = vmul.f32 %v2743, %v2745
        %v2747 = vadd.f32 %v2743, %v2746
        %vm2748 = vweird.f32 %v2711
        %vm2749 = vweird.f32 %v2743
        %vm2750 = vmor %vm2748, %vm2749
        %v2751 = vsel %vm2750, %v2743, %v2747
        %v2752 = vand.u32 2147483647, %v2711
        %vm2753 = vcmp.eq.f32.partialorder %v2752, 8.507059e+37
        %v2754 = vand.u32 %v2711, 2147483648
        %v2755 = vor.u32 1.1754944e-38, %v2754
        %v2756 = vsel %vm2753, %v2755, %v2751
        %v2757 = vmul.f32 1.0, %v2756
        %v2758 = vrcp.pop %v2712
        %v2759 = vmul.f32 %v2712, %v2758
        %v2760 = vsub.f32 1.0, %v2759
        %v2761 = vmul.f32 %v2758, %v2760
        %v2762 = vadd.f32 %v2758, %v2761
        %vm2763 = vweird.f32 %v2712
        %vm2764 = vweird.f32 %v2758
        %vm2765 = vmor %vm2763, %vm2764
        %v2766 = vsel %vm2765, %v2758, %v2762
        %v2767 = vand.u32 2147483647, %v2712
        %vm2768 = vcmp.eq.f32.partialorder %v2767, 8.507059e+37
        %v2769 = vand.u32 %v2712, 2147483648
        %v2770 = vor.u32 1.1754944e-38, %v2769
        %v2771 = vsel %vm2768, %v2770, %v2766
        %v2772 = vmul.f32 1.0, %v2771
        %v2773 = vmul.f32 %v2693, %v2727
        %v2774 = vmul.f32 %v2694, %v2742
        %v2775 = vmul.f32 %v2695, %v2757
        %v2776 = vmul.f32 %v2696, %v2772
        %v2777 = vld [vmem:[%s15] sm:$0x1]
        %v2778 = vld [vmem:[%s17] sm:$0xff]
        %v2779 = vld [vmem:[%s17 + $0x8] sm:$0xff]
        %v2780 = vld [vmem:[%s17 + $0x10] sm:$0xff]
        %v2781 = vld [vmem:[%s17 + $0x18] sm:$0xff]
        %v2782 = vld [vmem:[%s17 + $0x20] sm:$0xff]
        %v2783 = vld [vmem:[%s17 + $0x28] sm:$0xff]
        %v2784 = vld [vmem:[%s17 + $0x30] sm:$0xff]
        %v2785 = vld [vmem:[%s17 + $0x38] sm:$0xff]
        %v2786 = vld [vmem:[%s17 + $0x40] sm:$0xff]
        %v2787 = vld [vmem:[%s17 + $0x48] sm:$0xff]
        %v2788 = vld [vmem:[%s17 + $0x50] sm:$0xff]
        %v2789 = vld [vmem:[%s17 + $0x58] sm:$0xff]
        %v2790 = vld [vmem:[%s17 + $0x60] sm:$0xff]
        %v2791 = vld [vmem:[%s17 + $0x68] sm:$0xff]
        %v2792 = vld [vmem:[%s17 + $0x70] sm:$0xff]
        %v2793 = vld [vmem:[%s17 + $0x78] sm:$0xff]
        %v2794 = vld [vmem:[%s17 + $0x80] sm:$0xff]
        %v2795 = vld [vmem:[%s17 + $0x88] sm:$0xff]
        %v2796 = vld [vmem:[%s17 + $0x90] sm:$0xff]
        %v2797 = vld [vmem:[%s17 + $0x98] sm:$0xff]
        %v2798 = vld [vmem:[%s17 + $0xa0] sm:$0xff]
        %v2799 = vld [vmem:[%s17 + $0xa8] sm:$0xff]
        %v2800 = vld [vmem:[%s17 + $0xb0] sm:$0xff]
        %v2801 = vld [vmem:[%s17 + $0xb8] sm:$0xff]
        %v2802 = vld [vmem:[%s17 + $0xc0] sm:$0xff]
        %v2803 = vld [vmem:[%s17 + $0xc8] sm:$0xff]
        %v2804 = vld [vmem:[%s17 + $0xd0] sm:$0xff]
        %v2805 = vld [vmem:[%s17 + $0xd8] sm:$0xff]
        %v2806 = vld [vmem:[%s17 + $0xe0] sm:$0xff]
        %v2807 = vld [vmem:[%s17 + $0xe8] sm:$0xff]
        %v2808 = vld [vmem:[%s17 + $0xf0] sm:$0xff]
        %v2809 = vld [vmem:[%s17 + $0xf8] sm:$0xff]
        %2810 = vmatpush.msra.mxu0 %v2793
        %2811 = vmatpush.msra.mxu0 %v2792
        %2812 = vmatpush.msra.mxu0 %v2791
        %2813 = vmatpush.msra.mxu0 %v2790
        %2814 = vmatpush.msra.mxu0 %v2789
        %2815 = vmatpush.msra.mxu0 %v2788
        %2816 = vmatpush.msra.mxu0 %v2787
        %2817 = vmatpush.msra.mxu0 %v2786
        %2818 = vmatpush.msra.mxu0 %v2785
        %2819 = vmatpush.msra.mxu0 %v2784
        %2820 = vmatpush.msra.mxu0 %v2783
        %2821 = vmatpush.msra.mxu0 %v2782
        %2822 = vmatpush.msra.mxu0 %v2781
        %2823 = vmatpush.msra.mxu0 %v2780
        %2824 = vmatpush.msra.mxu0 %v2779
        %2825 = vmatpush.msra.mxu0 %v2778
        %2826 = vmatmul.f32.gmra.mxu0 %v2773
        %v2827 = vpop.f32.mrf.mxu0
        %v2828 = vadd.f32 0.0, %v2827
        %2829 = vmatmul.f32.gmra.mxu0 %v2775
        %v2830 = vpop.f32.mrf.mxu0
        %v2831 = vadd.f32 0.0, %v2830
        %2832 = vdwg.mxu0
        %2833 = vmatpush.msra.mxu0 %v2809
        %2834 = vmatpush.msra.mxu0 %v2808
        %2835 = vmatpush.msra.mxu0 %v2807
        %2836 = vmatpush.msra.mxu0 %v2806
        %2837 = vmatpush.msra.mxu0 %v2805
        %2838 = vmatpush.msra.mxu0 %v2804
        %2839 = vmatpush.msra.mxu0 %v2803
        %2840 = vmatpush.msra.mxu0 %v2802
        %2841 = vmatpush.msra.mxu0 %v2801
        %2842 = vmatpush.msra.mxu0 %v2800
        %2843 = vmatpush.msra.mxu0 %v2799
        %2844 = vmatpush.msra.mxu0 %v2798
        %2845 = vmatpush.msra.mxu0 %v2797
        %2846 = vmatpush.msra.mxu0 %v2796
        %2847 = vmatpush.msra.mxu0 %v2795
        %2848 = vmatpush.msra.mxu0 %v2794
        %2849 = vmatmul.f32.gmra.mxu0 %v2774
        %v2850 = vpop.f32.mrf.mxu0
        %v2851 = vadd.f32 %v2828, %v2850
        %2852 = vmatmul.f32.gmra.mxu0 %v2776
        %v2853 = vpop.f32.mrf.mxu0
        %v2854 = vadd.f32 %v2831, %v2853
        %2855 = vdwg.mxu0
        %v2857 = vperm.slane %v2777, 0
        %v2859 = vadd.f32 %v2857, %v2851
        %v2860 = vadd.f32 %v2857, %v2854
        %v2861 = vxor.u32 %v2859, 2147483648
        %v2862 = vxor.u32 %v2860, 2147483648
        %v2863 = vmul.f32 %v2861, 1.442695
        %v2864 = vpow.pop %v2863
        %v2865 = vmul.f32 %v2862, 1.442695
        %v2866 = vpow.pop %v2865
        %v2867 = vadd.f32 %v2864, 1.0
        %v2868 = vadd.f32 %v2866, 1.0
        %v2869 = vrcp.pop %v2867
        %v2870 = vmul.f32 %v2867, %v2869
        %v2871 = vsub.f32 1.0, %v2870
        %v2872 = vmul.f32 %v2869, %v2871
        %v2873 = vadd.f32 %v2869, %v2872
        %vm2874 = vweird.f32 %v2867
        %vm2875 = vweird.f32 %v2869
        %vm2876 = vmor %vm2874, %vm2875
        %v2877 = vsel %vm2876, %v2869, %v2873
        %v2878 = vand.u32 2147483647, %v2867
        %vm2879 = vcmp.eq.f32.partialorder %v2878, 8.507059e+37
        %v2880 = vand.u32 %v2867, 2147483648
        %v2881 = vor.u32 1.1754944e-38, %v2880
        %v2882 = vsel %vm2879, %v2881, %v2877
        %v2883 = vmul.f32 1.0, %v2882
        %v2884 = vrcp.pop %v2868
        %v2885 = vmul.f32 %v2868, %v2884
        %v2886 = vsub.f32 1.0, %v2885
        %v2887 = vmul.f32 %v2884, %v2886
        %v2888 = vadd.f32 %v2884, %v2887
        %vm2889 = vweird.f32 %v2868
        %vm2890 = vweird.f32 %v2884
        %vm2891 = vmor %vm2889, %vm2890
        %v2892 = vsel %vm2891, %v2884, %v2888
        %v2893 = vand.u32 2147483647, %v2868
        %vm2894 = vcmp.eq.f32.partialorder %v2893, 8.507059e+37
        %v2895 = vand.u32 %v2868, 2147483648
        %v2896 = vor.u32 1.1754944e-38, %v2895
        %v2897 = vsel %vm2894, %v2896, %v2892
        %v2898 = vmul.f32 1.0, %v2897
        %v2899 = vmul.f32 %v2859, %v2883
        %v2900 = vmul.f32 %v2860, %v2898
        %v2901 = vld [vmem:[#allocation8] sm:$0x1]
        %v2902 = vld [vmem:[#allocation14] sm:$0xff]
        %v2903 = vld [vmem:[#allocation14 + $0x8] sm:$0xff]
        %v2905 = vsel %vm2414, %v2902, 0
        %v2908 = vsel %vm2414, %v2903, 0
        %2910 = vmatpush.msra.mxu0 0.0
        %2911 = vmatpush.msra.mxu0 0.0
        %2912 = vmatpush.msra.mxu0 0.0
        %2913 = vmatpush.msra.mxu0 0.0
        %2914 = vmatpush.msra.mxu0 0.0
        %2915 = vmatpush.msra.mxu0 0.0
        %2916 = vmatpush.msra.mxu0 0.0
        %2917 = vmatpush.msra.mxu0 0.0
        %2918 = vmatpush.msra.mxu0 0.0
        %2919 = vmatpush.msra.mxu0 0.0
        %2920 = vmatpush.msra.mxu0 0.0
        %2921 = vmatpush.msra.mxu0 0.0
        %2922 = vmatpush.msra.mxu0 0.0
        %2923 = vmatpush.msra.mxu0 0.0
        %2924 = vmatpush.msra.mxu0 %v2900
        %2925 = vmatpush.msra.mxu0 %v2899
        %2926 = vmatmul.f32.gmra.mxu0 %v2905
        %v2927 = vpop.f32.mrf.mxu0
        %v2928 = vadd.f32 0.0, %v2927
        %2929 = vmatmul.f32.gmra.mxu0 %v2908
        %v2930 = vpop.f32.mrf.mxu0
        %v2931 = vadd.f32 0.0, %v2930
        %2932 = vdwg.mxu0
        %v2933 = vld [vmem:[#allocation10] sm:$0xff]
        %v2934 = vld [vmem:[#allocation10 + $0x8] sm:$0xff]
        %v2935 = vld [vmem:[#allocation10 + $0x10] sm:$0xff]
        %v2936 = vld [vmem:[#allocation10 + $0x18] sm:$0xff]
        %v2937 = vld [vmem:[#allocation10 + $0x20] sm:$0xff]
        %v2938 = vld [vmem:[#allocation10 + $0x28] sm:$0xff]
        %v2939 = vld [vmem:[#allocation10 + $0x30] sm:$0xff]
        %v2940 = vld [vmem:[#allocation10 + $0x38] sm:$0xff]
        %v2941 = vld [vmem:[#allocation10 + $0x40] sm:$0xff]
        %v2942 = vld [vmem:[#allocation10 + $0x48] sm:$0xff]
        %v2943 = vld [vmem:[#allocation10 + $0x50] sm:$0xff]
        %v2944 = vld [vmem:[#allocation10 + $0x58] sm:$0xff]
        %v2945 = vld [vmem:[#allocation10 + $0x60] sm:$0xff]
        %v2946 = vld [vmem:[#allocation10 + $0x68] sm:$0xff]
        %v2947 = vld [vmem:[#allocation10 + $0x70] sm:$0xff]
        %v2948 = vld [vmem:[#allocation10 + $0x78] sm:$0xff]
        %2949 = vmatpush.msra.mxu0 %v2948
        %2950 = vmatpush.msra.mxu0 %v2947
        %2951 = vmatpush.msra.mxu0 %v2946
        %2952 = vmatpush.msra.mxu0 %v2945
        %2953 = vmatpush.msra.mxu0 %v2944
        %2954 = vmatpush.msra.mxu0 %v2943
        %2955 = vmatpush.msra.mxu0 %v2942
        %2956 = vmatpush.msra.mxu0 %v2941
        %2957 = vmatpush.msra.mxu0 %v2940
        %2958 = vmatpush.msra.mxu0 %v2939
        %2959 = vmatpush.msra.mxu0 %v2938
        %2960 = vmatpush.msra.mxu0 %v2937
        %2961 = vmatpush.msra.mxu0 %v2936
        %2962 = vmatpush.msra.mxu0 %v2935
        %2963 = vmatpush.msra.mxu0 %v2934
        %2964 = vmatpush.msra.mxu0 %v2933
        %2965 = vmatmul.f32.gmra.mxu0 %v2928
        %v2966 = vpop.f32.mrf.mxu0
        %v2967 = vadd.f32 0.0, %v2966
        %2968 = vmatmul.f32.gmra.mxu0 %v2931
        %v2969 = vpop.f32.mrf.mxu0
        %v2970 = vadd.f32 0.0, %v2969
        %2971 = vdwg.mxu0
        %v2973 = vperm.slane %v2901, 0
        %v2975 = vadd.f32 %v2973, %v2967
        %v2976 = vadd.f32 %v2973, %v2970
        %v2977 = vld [vmem:[#allocation11] sm:$0xff]
        %v2978 = vld [vmem:[#allocation11 + $0x8] sm:$0xff]
        %v2979 = vld [vmem:[#allocation11 + $0x10] sm:$0xff]
        %v2980 = vld [vmem:[#allocation11 + $0x18] sm:$0xff]
        %v2981 = vld [vmem:[#allocation11 + $0x20] sm:$0xff]
        %v2982 = vld [vmem:[#allocation11 + $0x28] sm:$0xff]
        %v2983 = vld [vmem:[#allocation11 + $0x30] sm:$0xff]
        %v2984 = vld [vmem:[#allocation11 + $0x38] sm:$0xff]
        %v2985 = vld [vmem:[#allocation11 + $0x40] sm:$0xff]
        %v2986 = vld [vmem:[#allocation11 + $0x48] sm:$0xff]
        %v2987 = vld [vmem:[#allocation11 + $0x50] sm:$0xff]
        %v2988 = vld [vmem:[#allocation11 + $0x58] sm:$0xff]
        %v2989 = vld [vmem:[#allocation11 + $0x60] sm:$0xff]
        %v2990 = vld [vmem:[#allocation11 + $0x68] sm:$0xff]
        %v2991 = vld [vmem:[#allocation11 + $0x70] sm:$0xff]
        %v2992 = vld [vmem:[#allocation11 + $0x78] sm:$0xff]
        %2993 = vmatpush.msra.mxu0 %v2992
        %2994 = vmatpush.msra.mxu0 %v2991
        %2995 = vmatpush.msra.mxu0 %v2990
        %2996 = vmatpush.msra.mxu0 %v2989
        %2997 = vmatpush.msra.mxu0 %v2988
        %2998 = vmatpush.msra.mxu0 %v2987
        %2999 = vmatpush.msra.mxu0 %v2986
        %3000 = vmatpush.msra.mxu0 %v2985
        %3001 = vmatpush.msra.mxu0 %v2984
        %3002 = vmatpush.msra.mxu0 %v2983
        %3003 = vmatpush.msra.mxu0 %v2982
        %3004 = vmatpush.msra.mxu0 %v2981
        %3005 = vmatpush.msra.mxu0 %v2980
        %3006 = vmatpush.msra.mxu0 %v2979
        %3007 = vmatpush.msra.mxu0 %v2978
        %3008 = vmatpush.msra.mxu0 %v2977
        %3009 = vmatmul.f32.gmra.mxu0 %v2899
        %v3010 = vpop.f32.mrf.mxu0
        %v3011 = vadd.f32 0.0, %v3010
        %3012 = vmatmul.f32.gmra.mxu0 %v2900
        %v3013 = vpop.f32.mrf.mxu0
        %v3014 = vadd.f32 0.0, %v3013
        %3015 = vdwg.mxu0
        %v3016 = vadd.f32 %v2975, %v3011
        %v3017 = vadd.f32 %v2976, %v3014
        %v3018 = vld [vmem:[#allocation16] sm:$0xff]
        %v3019 = vld [vmem:[#allocation16 + $0x8] sm:$0xff]
        %v3021 = vsel %vm2414, %v3018, 0
        %v3024 = vsel %vm2414, %v3019, 0
        %3026 = vmatpush.msra.mxu0 0.0
        %3027 = vmatpush.msra.mxu0 0.0
        %3028 = vmatpush.msra.mxu0 0.0
        %3029 = vmatpush.msra.mxu0 0.0
        %3030 = vmatpush.msra.mxu0 0.0
        %3031 = vmatpush.msra.mxu0 0.0
        %3032 = vmatpush.msra.mxu0 0.0
        %3033 = vmatpush.msra.mxu0 0.0
        %3034 = vmatpush.msra.mxu0 0.0
        %3035 = vmatpush.msra.mxu0 0.0
        %3036 = vmatpush.msra.mxu0 0.0
        %3037 = vmatpush.msra.mxu0 0.0
        %3038 = vmatpush.msra.mxu0 0.0
        %3039 = vmatpush.msra.mxu0 0.0
        %3040 = vmatpush.msra.mxu0 %v2900
        %3041 = vmatpush.msra.mxu0 %v2899
        %3042 = vmatmul.f32.gmra.mxu0 %v3021
        %v3043 = vpop.f32.mrf.mxu0
        %v3044 = vadd.f32 0.0, %v3043
        %3045 = vmatmul.f32.gmra.mxu0 %v3024
        %v3046 = vpop.f32.mrf.mxu0
        %v3047 = vadd.f32 0.0, %v3046
        %3048 = vdwg.mxu0
        %v3049 = vld [vmem:[#allocation13] sm:$0xff]
        %v3050 = vld [vmem:[#allocation13 + $0x8] sm:$0xff]
        %v3051 = vld [vmem:[#allocation13 + $0x10] sm:$0xff]
        %v3052 = vld [vmem:[#allocation13 + $0x18] sm:$0xff]
        %v3053 = vld [vmem:[#allocation13 + $0x20] sm:$0xff]
        %v3054 = vld [vmem:[#allocation13 + $0x28] sm:$0xff]
        %v3055 = vld [vmem:[#allocation13 + $0x30] sm:$0xff]
        %v3056 = vld [vmem:[#allocation13 + $0x38] sm:$0xff]
        %v3057 = vld [vmem:[#allocation13 + $0x40] sm:$0xff]
        %v3058 = vld [vmem:[#allocation13 + $0x48] sm:$0xff]
        %v3059 = vld [vmem:[#allocation13 + $0x50] sm:$0xff]
        %v3060 = vld [vmem:[#allocation13 + $0x58] sm:$0xff]
        %v3061 = vld [vmem:[#allocation13 + $0x60] sm:$0xff]
        %v3062 = vld [vmem:[#allocation13 + $0x68] sm:$0xff]
        %v3063 = vld [vmem:[#allocation13 + $0x70] sm:$0xff]
        %v3064 = vld [vmem:[#allocation13 + $0x78] sm:$0xff]
        %3065 = vmatpush.msra.mxu0 %v3064
        %3066 = vmatpush.msra.mxu0 %v3063
        %3067 = vmatpush.msra.mxu0 %v3062
        %3068 = vmatpush.msra.mxu0 %v3061
        %3069 = vmatpush.msra.mxu0 %v3060
        %3070 = vmatpush.msra.mxu0 %v3059
        %3071 = vmatpush.msra.mxu0 %v3058
        %3072 = vmatpush.msra.mxu0 %v3057
        %3073 = vmatpush.msra.mxu0 %v3056
        %3074 = vmatpush.msra.mxu0 %v3055
        %3075 = vmatpush.msra.mxu0 %v3054
        %3076 = vmatpush.msra.mxu0 %v3053
        %3077 = vmatpush.msra.mxu0 %v3052
        %3078 = vmatpush.msra.mxu0 %v3051
        %3079 = vmatpush.msra.mxu0 %v3050
        %3080 = vmatpush.msra.mxu0 %v3049
        %3081 = vmatmul.f32.gmra.mxu0 %v3044
        %v3082 = vpop.f32.mrf.mxu0
        %v3083 = vadd.f32 0.0, %v3082
        %3084 = vmatmul.f32.gmra.mxu0 %v3047
        %v3085 = vpop.f32.mrf.mxu0
        %v3086 = vadd.f32 0.0, %v3085
        %3087 = vdwg.mxu0
        %v3088 = vadd.f32 %v3016, %v3083
        %v3089 = vadd.f32 %v3017, %v3086
        %v3090 = vxor.u32 %v3088, 2147483648
        %v3091 = vxor.u32 %v3089, 2147483648
        %v3092 = vmul.f32 %v3090, 1.442695
        %v3093 = vpow.pop %v3092
        %v3094 = vmul.f32 %v3091, 1.442695
        %v3095 = vpow.pop %v3094
        %v3096 = vadd.f32 %v3093, 1.0
        %v3097 = vadd.f32 %v3095, 1.0
        %v3098 = vrcp.pop %v3096
        %v3099 = vmul.f32 %v3096, %v3098
        %v3100 = vsub.f32 1.0, %v3099
        %v3101 = vmul.f32 %v3098, %v3100
        %v3102 = vadd.f32 %v3098, %v3101
        %vm3103 = vweird.f32 %v3096
        %vm3104 = vweird.f32 %v3098
        %vm3105 = vmor %vm3103, %vm3104
        %v3106 = vsel %vm3105, %v3098, %v3102
        %v3107 = vand.u32 2147483647, %v3096
        %vm3108 = vcmp.eq.f32.partialorder %v3107, 8.507059e+37
        %v3109 = vand.u32 %v3096, 2147483648
        %v3110 = vor.u32 1.1754944e-38, %v3109
        %v3111 = vsel %vm3108, %v3110, %v3106
        %v3112 = vmul.f32 1.0, %v3111
        %v3113 = vrcp.pop %v3097
        %v3114 = vmul.f32 %v3097, %v3113
        %v3115 = vsub.f32 1.0, %v3114
        %v3116 = vmul.f32 %v3113, %v3115
        %v3117 = vadd.f32 %v3113, %v3116
        %vm3118 = vweird.f32 %v3097
        %vm3119 = vweird.f32 %v3113
        %vm3120 = vmor %vm3118, %vm3119
        %v3121 = vsel %vm3120, %v3113, %v3117
        %v3122 = vand.u32 2147483647, %v3097
        %vm3123 = vcmp.eq.f32.partialorder %v3122, 8.507059e+37
        %v3124 = vand.u32 %v3097, 2147483648
        %v3125 = vor.u32 1.1754944e-38, %v3124
        %v3126 = vsel %vm3123, %v3125, %v3121
        %v3127 = vmul.f32 1.0, %v3126
        %v3128 = vmul.f32 %v3088, %v3112
        %v3129 = vmul.f32 %v3089, %v3127
        %v3130 = vld [vmem:[#allocation17] sm:$0x3]
        %v3131 = vld [vmem:[#allocation19] sm:$0xff]
        %v3132 = vld [vmem:[#allocation19 + $0x8] sm:$0xff]
        %v3133 = vld [vmem:[#allocation19 + $0x10] sm:$0xff]
        %v3134 = vld [vmem:[#allocation19 + $0x18] sm:$0xff]
        %v3135 = vld [vmem:[#allocation19 + $0x20] sm:$0xff]
        %v3136 = vld [vmem:[#allocation19 + $0x28] sm:$0xff]
        %v3137 = vld [vmem:[#allocation19 + $0x30] sm:$0xff]
        %v3138 = vld [vmem:[#allocation19 + $0x38] sm:$0xff]
        %v3139 = vld [vmem:[#allocation19 + $0x40] sm:$0xff]
        %v3140 = vld [vmem:[#allocation19 + $0x48] sm:$0xff]
        %v3141 = vld [vmem:[#allocation19 + $0x50] sm:$0xff]
        %v3142 = vld [vmem:[#allocation19 + $0x58] sm:$0xff]
        %v3143 = vld [vmem:[#allocation19 + $0x60] sm:$0xff]
        %v3144 = vld [vmem:[#allocation19 + $0x68] sm:$0xff]
        %v3145 = vld [vmem:[#allocation19 + $0x70] sm:$0xff]
        %v3146 = vld [vmem:[#allocation19 + $0x78] sm:$0xff]
        %v3147 = vld [vmem:[#allocation19 + $0x80] sm:$0xff]
        %v3148 = vld [vmem:[#allocation19 + $0x88] sm:$0xff]
        %v3149 = vld [vmem:[#allocation19 + $0x90] sm:$0xff]
        %v3150 = vld [vmem:[#allocation19 + $0x98] sm:$0xff]
        %v3151 = vld [vmem:[#allocation19 + $0xa0] sm:$0xff]
        %v3152 = vld [vmem:[#allocation19 + $0xa8] sm:$0xff]
        %v3153 = vld [vmem:[#allocation19 + $0xb0] sm:$0xff]
        %v3154 = vld [vmem:[#allocation19 + $0xb8] sm:$0xff]
        %v3155 = vld [vmem:[#allocation19 + $0xc0] sm:$0xff]
        %v3156 = vld [vmem:[#allocation19 + $0xc8] sm:$0xff]
        %v3157 = vld [vmem:[#allocation19 + $0xd0] sm:$0xff]
        %v3158 = vld [vmem:[#allocation19 + $0xd8] sm:$0xff]
        %v3159 = vld [vmem:[#allocation19 + $0xe0] sm:$0xff]
        %v3160 = vld [vmem:[#allocation19 + $0xe8] sm:$0xff]
        %v3161 = vld [vmem:[#allocation19 + $0xf0] sm:$0xff]
        %v3162 = vld [vmem:[#allocation19 + $0xf8] sm:$0xff]
        %3163 = vmatpush.msra.mxu0 %v3161
        %3164 = vmatpush.msra.mxu0 %v3159
        %3165 = vmatpush.msra.mxu0 %v3157
        %3166 = vmatpush.msra.mxu0 %v3155
        %3167 = vmatpush.msra.mxu0 %v3153
        %3168 = vmatpush.msra.mxu0 %v3151
        %3169 = vmatpush.msra.mxu0 %v3149
        %3170 = vmatpush.msra.mxu0 %v3147
        %3171 = vmatpush.msra.mxu0 %v3145
        %3172 = vmatpush.msra.mxu0 %v3143
        %3173 = vmatpush.msra.mxu0 %v3141
        %3174 = vmatpush.msra.mxu0 %v3139
        %3175 = vmatpush.msra.mxu0 %v3137
        %3176 = vmatpush.msra.mxu0 %v3135
        %3177 = vmatpush.msra.mxu0 %v3133
        %3178 = vmatpush.msra.mxu0 %v3131
        %3179 = vmatmul.f32.gmra.mxu0 %v3128
        %v3180 = vpop.f32.mrf.mxu0
        %v3181 = vadd.f32 0.0, %v3180
        %3182 = vmatmul.f32.gmra.mxu0 %v3129
        %v3183 = vpop.f32.mrf.mxu0
        %v3184 = vadd.f32 0.0, %v3183
        %3185 = vdwg.mxu0
        %3186 = vmatpush.msra.mxu0 %v3162
        %3187 = vmatpush.msra.mxu0 %v3160
        %3188 = vmatpush.msra.mxu0 %v3158
        %3189 = vmatpush.msra.mxu0 %v3156
        %3190 = vmatpush.msra.mxu0 %v3154
        %3191 = vmatpush.msra.mxu0 %v3152
        %3192 = vmatpush.msra.mxu0 %v3150
        %3193 = vmatpush.msra.mxu0 %v3148
        %3194 = vmatpush.msra.mxu0 %v3146
        %3195 = vmatpush.msra.mxu0 %v3144
        %3196 = vmatpush.msra.mxu0 %v3142
        %3197 = vmatpush.msra.mxu0 %v3140
        %3198 = vmatpush.msra.mxu0 %v3138
        %3199 = vmatpush.msra.mxu0 %v3136
        %3200 = vmatpush.msra.mxu0 %v3134
        %3201 = vmatpush.msra.mxu0 %v3132
        %3202 = vmatmul.f32.gmra.mxu0 %v3128
        %v3203 = vpop.f32.mrf.mxu0
        %v3204 = vadd.f32 0.0, %v3203
        %3205 = vmatmul.f32.gmra.mxu0 %v3129
        %v3206 = vpop.f32.mrf.mxu0
        %v3207 = vadd.f32 0.0, %v3206
        %3208 = vdwg.mxu0
        %v3210 = vperm.slane %v3130, 0
        %v3211 = vperm.slane %v3130, 1
        %v3214 = vadd.f32 %v3210, %v3181
        %v3215 = vadd.f32 %v3211, %v3204
        %v3216 = vadd.f32 %v3210, %v3184
        %v3217 = vadd.f32 %v3211, %v3207
        %v3218 = vadd.f32 %v2693, %v3214
        %v3219 = vadd.f32 %v2694, %v3215
        %v3220 = vadd.f32 %v2695, %v3216
        %v3221 = vadd.f32 %v2696, %v3217
        %v3222 = vxor.u32 %v3218, 2147483648
        %v3223 = vxor.u32 %v3219, 2147483648
        %v3224 = vxor.u32 %v3220, 2147483648
        %v3225 = vxor.u32 %v3221, 2147483648
        %v3226 = vmul.f32 %v3222, 1.442695
        %v3227 = vpow.pop %v3226
        %v3228 = vmul.f32 %v3223, 1.442695
        %v3229 = vpow.pop %v3228
        %v3230 = vmul.f32 %v3224, 1.442695
        %v3231 = vpow.pop %v3230
        %v3232 = vmul.f32 %v3225, 1.442695
        %v3233 = vpow.pop %v3232
        %v3234 = vadd.f32 %v3227, 1.0
        %v3235 = vadd.f32 %v3229, 1.0
        %v3236 = vadd.f32 %v3231, 1.0
        %v3237 = vadd.f32 %v3233, 1.0
        %v3238 = vrcp.pop %v3234
        %v3239 = vmul.f32 %v3234, %v3238
        %v3240 = vsub.f32 1.0, %v3239
        %v3241 = vmul.f32 %v3238, %v3240
        %v3242 = vadd.f32 %v3238, %v3241
        %vm3243 = vweird.f32 %v3234
        %vm3244 = vweird.f32 %v3238
        %vm3245 = vmor %vm3243, %vm3244
        %v3246 = vsel %vm3245, %v3238, %v3242
        %v3247 = vand.u32 2147483647, %v3234
        %vm3248 = vcmp.eq.f32.partialorder %v3247, 8.507059e+37
        %v3249 = vand.u32 %v3234, 2147483648
        %v3250 = vor.u32 1.1754944e-38, %v3249
        %v3251 = vsel %vm3248, %v3250, %v3246
        %v3252 = vmul.f32 1.0, %v3251
        %v3253 = vrcp.pop %v3235
        %v3254 = vmul.f32 %v3235, %v3253
        %v3255 = vsub.f32 1.0, %v3254
        %v3256 = vmul.f32 %v3253, %v3255
        %v3257 = vadd.f32 %v3253, %v3256
        %vm3258 = vweird.f32 %v3235
        %vm3259 = vweird.f32 %v3253
        %vm3260 = vmor %vm3258, %vm3259
        %v3261 = vsel %vm3260, %v3253, %v3257
        %v3262 = vand.u32 2147483647, %v3235
        %vm3263 = vcmp.eq.f32.partialorder %v3262, 8.507059e+37
        %v3264 = vand.u32 %v3235, 2147483648
        %v3265 = vor.u32 1.1754944e-38, %v3264
        %v3266 = vsel %vm3263, %v3265, %v3261
        %v3267 = vmul.f32 1.0, %v3266
        %v3268 = vrcp.pop %v3236
        %v3269 = vmul.f32 %v3236, %v3268
        %v3270 = vsub.f32 1.0, %v3269
        %v3271 = vmul.f32 %v3268, %v3270
        %v3272 = vadd.f32 %v3268, %v3271
        %vm3273 = vweird.f32 %v3236
        %vm3274 = vweird.f32 %v3268
        %vm3275 = vmor %vm3273, %vm3274
        %v3276 = vsel %vm3275, %v3268, %v3272
        %v3277 = vand.u32 2147483647, %v3236
        %vm3278 = vcmp.eq.f32.partialorder %v3277, 8.507059e+37
        %v3279 = vand.u32 %v3236, 2147483648
        %v3280 = vor.u32 1.1754944e-38, %v3279
        %v3281 = vsel %vm3278, %v3280, %v3276
        %v3282 = vmul.f32 1.0, %v3281
        %v3283 = vrcp.pop %v3237
        %v3284 = vmul.f32 %v3237, %v3283
        %v3285 = vsub.f32 1.0, %v3284
        %v3286 = vmul.f32 %v3283, %v3285
        %v3287 = vadd.f32 %v3283, %v3286
        %vm3288 = vweird.f32 %v3237
        %vm3289 = vweird.f32 %v3283
        %vm3290 = vmor %vm3288, %vm3289
        %v3291 = vsel %vm3290, %v3283, %v3287
        %v3292 = vand.u32 2147483647, %v3237
        %vm3293 = vcmp.eq.f32.partialorder %v3292, 8.507059e+37
        %v3294 = vand.u32 %v3237, 2147483648
        %v3295 = vor.u32 1.1754944e-38, %v3294
        %v3296 = vsel %vm3293, %v3295, %v3291
        %v3297 = vmul.f32 1.0, %v3296
        %v3298 = vmul.f32 %v3218, %v3252
        %v3299 = vmul.f32 %v3219, %v3267
        %v3300 = vmul.f32 %v3220, %v3282
        %v3301 = vmul.f32 %v3221, %v3297
        %v3302 = vld [vmem:[#allocation32] sm:$0x1]
        %v3303 = vld [vmem:[#allocation34] sm:$0xff]
        %v3304 = vld [vmem:[#allocation34 + $0x8] sm:$0xff]
        %v3305 = vld [vmem:[#allocation34 + $0x10] sm:$0xff]
        %v3306 = vld [vmem:[#allocation34 + $0x18] sm:$0xff]
        %v3307 = vld [vmem:[#allocation34 + $0x20] sm:$0xff]
        %v3308 = vld [vmem:[#allocation34 + $0x28] sm:$0xff]
        %v3309 = vld [vmem:[#allocation34 + $0x30] sm:$0xff]
        %v3310 = vld [vmem:[#allocation34 + $0x38] sm:$0xff]
        %v3311 = vld [vmem:[#allocation34 + $0x40] sm:$0xff]
        %v3312 = vld [vmem:[#allocation34 + $0x48] sm:$0xff]
        %v3313 = vld [vmem:[#allocation34 + $0x50] sm:$0xff]
        %v3314 = vld [vmem:[#allocation34 + $0x58] sm:$0xff]
        %v3315 = vld [vmem:[#allocation34 + $0x60] sm:$0xff]
        %v3316 = vld [vmem:[#allocation34 + $0x68] sm:$0xff]
        %v3317 = vld [vmem:[#allocation34 + $0x70] sm:$0xff]
        %v3318 = vld [vmem:[#allocation34 + $0x78] sm:$0xff]
        %v3319 = vld [vmem:[#allocation34 + $0x80] sm:$0xff]
        %v3320 = vld [vmem:[#allocation34 + $0x88] sm:$0xff]
        %v3321 = vld [vmem:[#allocation34 + $0x90] sm:$0xff]
        %v3322 = vld [vmem:[#allocation34 + $0x98] sm:$0xff]
        %v3323 = vld [vmem:[#allocation34 + $0xa0] sm:$0xff]
        %v3324 = vld [vmem:[#allocation34 + $0xa8] sm:$0xff]
        %v3325 = vld [vmem:[#allocation34 + $0xb0] sm:$0xff]
        %v3326 = vld [vmem:[#allocation34 + $0xb8] sm:$0xff]
        %v3327 = vld [vmem:[#allocation34 + $0xc0] sm:$0xff]
        %v3328 = vld [vmem:[#allocation34 + $0xc8] sm:$0xff]
        %v3329 = vld [vmem:[#allocation34 + $0xd0] sm:$0xff]
        %v3330 = vld [vmem:[#allocation34 + $0xd8] sm:$0xff]
        %v3331 = vld [vmem:[#allocation34 + $0xe0] sm:$0xff]
        %v3332 = vld [vmem:[#allocation34 + $0xe8] sm:$0xff]
        %v3333 = vld [vmem:[#allocation34 + $0xf0] sm:$0xff]
        %v3334 = vld [vmem:[#allocation34 + $0xf8] sm:$0xff]
        %3335 = vmatpush.msra.mxu0 %v3318
        %3336 = vmatpush.msra.mxu0 %v3317
        %3337 = vmatpush.msra.mxu0 %v3316
        %3338 = vmatpush.msra.mxu0 %v3315
        %3339 = vmatpush.msra.mxu0 %v3314
        %3340 = vmatpush.msra.mxu0 %v3313
        %3341 = vmatpush.msra.mxu0 %v3312
        %3342 = vmatpush.msra.mxu0 %v3311
        %3343 = vmatpush.msra.mxu0 %v3310
        %3344 = vmatpush.msra.mxu0 %v3309
        %3345 = vmatpush.msra.mxu0 %v3308
        %3346 = vmatpush.msra.mxu0 %v3307
        %3347 = vmatpush.msra.mxu0 %v3306
        %3348 = vmatpush.msra.mxu0 %v3305
        %3349 = vmatpush.msra.mxu0 %v3304
        %3350 = vmatpush.msra.mxu0 %v3303
        %3351 = vmatmul.f32.gmra.mxu0 %v3298
        %v3352 = vpop.f32.mrf.mxu0
        %v3353 = vadd.f32 0.0, %v3352
        %3354 = vmatmul.f32.gmra.mxu0 %v3300
        %v3355 = vpop.f32.mrf.mxu0
        %v3356 = vadd.f32 0.0, %v3355
        %3357 = vdwg.mxu0
        %3358 = vmatpush.msra.mxu0 %v3334
        %3359 = vmatpush.msra.mxu0 %v3333
        %3360 = vmatpush.msra.mxu0 %v3332
        %3361 = vmatpush.msra.mxu0 %v3331
        %3362 = vmatpush.msra.mxu0 %v3330
        %3363 = vmatpush.msra.mxu0 %v3329
        %3364 = vmatpush.msra.mxu0 %v3328
        %3365 = vmatpush.msra.mxu0 %v3327
        %3366 = vmatpush.msra.mxu0 %v3326
        %3367 = vmatpush.msra.mxu0 %v3325
        %3368 = vmatpush.msra.mxu0 %v3324
        %3369 = vmatpush.msra.mxu0 %v3323
        %3370 = vmatpush.msra.mxu0 %v3322
        %3371 = vmatpush.msra.mxu0 %v3321
        %3372 = vmatpush.msra.mxu0 %v3320
        %3373 = vmatpush.msra.mxu0 %v3319
        %3374 = vmatmul.f32.gmra.mxu0 %v3299
        %v3375 = vpop.f32.mrf.mxu0
        %v3376 = vadd.f32 %v3353, %v3375
        %3377 = vmatmul.f32.gmra.mxu0 %v3301
        %v3378 = vpop.f32.mrf.mxu0
        %v3379 = vadd.f32 %v3356, %v3378
        %3380 = vdwg.mxu0
        %v3382 = vperm.slane %v3302, 0
        %v3384 = vadd.f32 %v3382, %v3376
        %v3385 = vadd.f32 %v3382, %v3379
        %v3386 = vxor.u32 %v3384, 2147483648
        %v3387 = vxor.u32 %v3385, 2147483648
        %v3388 = vmul.f32 %v3386, 1.442695
        %v3389 = vpow.pop %v3388
        %v3390 = vmul.f32 %v3387, 1.442695
        %v3391 = vpow.pop %v3390
        %v3392 = vadd.f32 %v3389, 1.0
        %v3393 = vadd.f32 %v3391, 1.0
        %v3394 = vrcp.pop %v3392
        %v3395 = vmul.f32 %v3392, %v3394
        %v3396 = vsub.f32 1.0, %v3395
        %v3397 = vmul.f32 %v3394, %v3396
        %v3398 = vadd.f32 %v3394, %v3397
        %vm3399 = vweird.f32 %v3392
        %vm3400 = vweird.f32 %v3394
        %vm3401 = vmor %vm3399, %vm3400
        %v3402 = vsel %vm3401, %v3394, %v3398
        %v3403 = vand.u32 2147483647, %v3392
        %vm3404 = vcmp.eq.f32.partialorder %v3403, 8.507059e+37
        %v3405 = vand.u32 %v3392, 2147483648
        %v3406 = vor.u32 1.1754944e-38, %v3405
        %v3407 = vsel %vm3404, %v3406, %v3402
        %v3408 = vmul.f32 1.0, %v3407
        %v3409 = vrcp.pop %v3393
        %v3410 = vmul.f32 %v3393, %v3409
        %v3411 = vsub.f32 1.0, %v3410
        %v3412 = vmul.f32 %v3409, %v3411
        %v3413 = vadd.f32 %v3409, %v3412
        %vm3414 = vweird.f32 %v3393
        %vm3415 = vweird.f32 %v3409
        %vm3416 = vmor %vm3414, %vm3415
        %v3417 = vsel %vm3416, %v3409, %v3413
        %v3418 = vand.u32 2147483647, %v3393
        %vm3419 = vcmp.eq.f32.partialorder %v3418, 8.507059e+37
        %v3420 = vand.u32 %v3393, 2147483648
        %v3421 = vor.u32 1.1754944e-38, %v3420
        %v3422 = vsel %vm3419, %v3421, %v3417
        %v3423 = vmul.f32 1.0, %v3422
        %v3424 = vmul.f32 %v3384, %v3408
        %v3425 = vmul.f32 %v3385, %v3423
        %v3426 = vld [vmem:[#allocation35] sm:$0x1]
        %v3427 = vld [vmem:[#allocation41] sm:$0xff]
        %v3428 = vld [vmem:[#allocation41 + $0x8] sm:$0xff]
        %v3430 = vsel %vm2414, %v3427, 0
        %v3433 = vsel %vm2414, %v3428, 0
        %3435 = vmatpush.msra.mxu0 0.0
        %3436 = vmatpush.msra.mxu0 0.0
        %3437 = vmatpush.msra.mxu0 0.0
        %3438 = vmatpush.msra.mxu0 0.0
        %3439 = vmatpush.msra.mxu0 0.0
        %3440 = vmatpush.msra.mxu0 0.0
        %3441 = vmatpush.msra.mxu0 0.0
        %3442 = vmatpush.msra.mxu0 0.0
        %3443 = vmatpush.msra.mxu0 0.0
        %3444 = vmatpush.msra.mxu0 0.0
        %3445 = vmatpush.msra.mxu0 0.0
        %3446 = vmatpush.msra.mxu0 0.0
        %3447 = vmatpush.msra.mxu0 0.0
        %3448 = vmatpush.msra.mxu0 0.0
        %3449 = vmatpush.msra.mxu0 %v3425
        %3450 = vmatpush.msra.mxu0 %v3424
        %3451 = vmatmul.f32.gmra.mxu0 %v3430
        %v3452 = vpop.f32.mrf.mxu0
        %v3453 = vadd.f32 0.0, %v3452
        %3454 = vmatmul.f32.gmra.mxu0 %v3433
        %v3455 = vpop.f32.mrf.mxu0
        %v3456 = vadd.f32 0.0, %v3455
        %3457 = vdwg.mxu0
        %v3458 = vld [vmem:[#allocation37] sm:$0xff]
        %v3459 = vld [vmem:[#allocation37 + $0x8] sm:$0xff]
        %v3460 = vld [vmem:[#allocation37 + $0x10] sm:$0xff]
        %v3461 = vld [vmem:[#allocation37 + $0x18] sm:$0xff]
        %v3462 = vld [vmem:[#allocation37 + $0x20] sm:$0xff]
        %v3463 = vld [vmem:[#allocation37 + $0x28] sm:$0xff]
        %v3464 = vld [vmem:[#allocation37 + $0x30] sm:$0xff]
        %v3465 = vld [vmem:[#allocation37 + $0x38] sm:$0xff]
        %v3466 = vld [vmem:[#allocation37 + $0x40] sm:$0xff]
        %v3467 = vld [vmem:[#allocation37 + $0x48] sm:$0xff]
        %v3468 = vld [vmem:[#allocation37 + $0x50] sm:$0xff]
        %v3469 = vld [vmem:[#allocation37 + $0x58] sm:$0xff]
        %v3470 = vld [vmem:[#allocation37 + $0x60] sm:$0xff]
        %v3471 = vld [vmem:[#allocation37 + $0x68] sm:$0xff]
        %v3472 = vld [vmem:[#allocation37 + $0x70] sm:$0xff]
        %v3473 = vld [vmem:[#allocation37 + $0x78] sm:$0xff]
        %3474 = vmatpush.msra.mxu0 %v3473
        %3475 = vmatpush.msra.mxu0 %v3472
        %3476 = vmatpush.msra.mxu0 %v3471
        %3477 = vmatpush.msra.mxu0 %v3470
        %3478 = vmatpush.msra.mxu0 %v3469
        %3479 = vmatpush.msra.mxu0 %v3468
        %3480 = vmatpush.msra.mxu0 %v3467
        %3481 = vmatpush.msra.mxu0 %v3466
        %3482 = vmatpush.msra.mxu0 %v3465
        %3483 = vmatpush.msra.mxu0 %v3464
        %3484 = vmatpush.msra.mxu0 %v3463
        %3485 = vmatpush.msra.mxu0 %v3462
        %3486 = vmatpush.msra.mxu0 %v3461
        %3487 = vmatpush.msra.mxu0 %v3460
        %3488 = vmatpush.msra.mxu0 %v3459
        %3489 = vmatpush.msra.mxu0 %v3458
        %3490 = vmatmul.f32.gmra.mxu0 %v3453
        %v3491 = vpop.f32.mrf.mxu0
        %v3492 = vadd.f32 0.0, %v3491
        %3493 = vmatmul.f32.gmra.mxu0 %v3456
        %v3494 = vpop.f32.mrf.mxu0
        %v3495 = vadd.f32 0.0, %v3494
        %3496 = vdwg.mxu0
        %v3498 = vperm.slane %v3426, 0
        %v3500 = vadd.f32 %v3498, %v3492
        %v3501 = vadd.f32 %v3498, %v3495
        %v3502 = vld [vmem:[#allocation38] sm:$0xff]
        %v3503 = vld [vmem:[#allocation38 + $0x8] sm:$0xff]
        %v3504 = vld [vmem:[#allocation38 + $0x10] sm:$0xff]
        %v3505 = vld [vmem:[#allocation38 + $0x18] sm:$0xff]
        %v3506 = vld [vmem:[#allocation38 + $0x20] sm:$0xff]
        %v3507 = vld [vmem:[#allocation38 + $0x28] sm:$0xff]
        %v3508 = vld [vmem:[#allocation38 + $0x30] sm:$0xff]
        %v3509 = vld [vmem:[#allocation38 + $0x38] sm:$0xff]
        %v3510 = vld [vmem:[#allocation38 + $0x40] sm:$0xff]
        %v3511 = vld [vmem:[#allocation38 + $0x48] sm:$0xff]
        %v3512 = vld [vmem:[#allocation38 + $0x50] sm:$0xff]
        %v3513 = vld [vmem:[#allocation38 + $0x58] sm:$0xff]
        %v3514 = vld [vmem:[#allocation38 + $0x60] sm:$0xff]
        %v3515 = vld [vmem:[#allocation38 + $0x68] sm:$0xff]
        %v3516 = vld [vmem:[#allocation38 + $0x70] sm:$0xff]
        %v3517 = vld [vmem:[#allocation38 + $0x78] sm:$0xff]
        %3518 = vmatpush.msra.mxu0 %v3517
        %3519 = vmatpush.msra.mxu0 %v3516
        %3520 = vmatpush.msra.mxu0 %v3515
        %3521 = vmatpush.msra.mxu0 %v3514
        %3522 = vmatpush.msra.mxu0 %v3513
        %3523 = vmatpush.msra.mxu0 %v3512
        %3524 = vmatpush.msra.mxu0 %v3511
        %3525 = vmatpush.msra.mxu0 %v3510
        %3526 = vmatpush.msra.mxu0 %v3509
        %3527 = vmatpush.msra.mxu0 %v3508
        %3528 = vmatpush.msra.mxu0 %v3507
        %3529 = vmatpush.msra.mxu0 %v3506
        %3530 = vmatpush.msra.mxu0 %v3505
        %3531 = vmatpush.msra.mxu0 %v3504
        %3532 = vmatpush.msra.mxu0 %v3503
        %3533 = vmatpush.msra.mxu0 %v3502
        %3534 = vmatmul.f32.gmra.mxu0 %v3424
        %v3535 = vpop.f32.mrf.mxu0
        %v3536 = vadd.f32 0.0, %v3535
        %3537 = vmatmul.f32.gmra.mxu0 %v3425
        %v3538 = vpop.f32.mrf.mxu0
        %v3539 = vadd.f32 0.0, %v3538
        %3540 = vdwg.mxu0
        %v3541 = vadd.f32 %v3500, %v3536
        %v3542 = vadd.f32 %v3501, %v3539
        %v3543 = vld [vmem:[#allocation43] sm:$0xff]
        %v3544 = vld [vmem:[#allocation43 + $0x8] sm:$0xff]
        %v3546 = vsel %vm2414, %v3543, 0
        %v3549 = vsel %vm2414, %v3544, 0
        %3551 = vmatpush.msra.mxu0 0.0
        %3552 = vmatpush.msra.mxu0 0.0
        %3553 = vmatpush.msra.mxu0 0.0
        %3554 = vmatpush.msra.mxu0 0.0
        %3555 = vmatpush.msra.mxu0 0.0
        %3556 = vmatpush.msra.mxu0 0.0
        %3557 = vmatpush.msra.mxu0 0.0
        %3558 = vmatpush.msra.mxu0 0.0
        %3559 = vmatpush.msra.mxu0 0.0
        %3560 = vmatpush.msra.mxu0 0.0
        %3561 = vmatpush.msra.mxu0 0.0
        %3562 = vmatpush.msra.mxu0 0.0
        %3563 = vmatpush.msra.mxu0 0.0
        %3564 = vmatpush.msra.mxu0 0.0
        %3565 = vmatpush.msra.mxu0 %v3425
        %3566 = vmatpush.msra.mxu0 %v3424
        %3567 = vmatmul.f32.gmra.mxu0 %v3546
        %v3568 = vpop.f32.mrf.mxu0
        %v3569 = vadd.f32 0.0, %v3568
        %3570 = vmatmul.f32.gmra.mxu0 %v3549
        %v3571 = vpop.f32.mrf.mxu0
        %v3572 = vadd.f32 0.0, %v3571
        %3573 = vdwg.mxu0
        %v3574 = vld [vmem:[#allocation40] sm:$0xff]
        %v3575 = vld [vmem:[#allocation40 + $0x8] sm:$0xff]
        %v3576 = vld [vmem:[#allocation40 + $0x10] sm:$0xff]
        %v3577 = vld [vmem:[#allocation40 + $0x18] sm:$0xff]
        %v3578 = vld [vmem:[#allocation40 + $0x20] sm:$0xff]
        %v3579 = vld [vmem:[#allocation40 + $0x28] sm:$0xff]
        %v3580 = vld [vmem:[#allocation40 + $0x30] sm:$0xff]
        %v3581 = vld [vmem:[#allocation40 + $0x38] sm:$0xff]
        %v3582 = vld [vmem:[#allocation40 + $0x40] sm:$0xff]
        %v3583 = vld [vmem:[#allocation40 + $0x48] sm:$0xff]
        %v3584 = vld [vmem:[#allocation40 + $0x50] sm:$0xff]
        %v3585 = vld [vmem:[#allocation40 + $0x58] sm:$0xff]
        %v3586 = vld [vmem:[#allocation40 + $0x60] sm:$0xff]
        %v3587 = vld [vmem:[#allocation40 + $0x68] sm:$0xff]
        %v3588 = vld [vmem:[#allocation40 + $0x70] sm:$0xff]
        %v3589 = vld [vmem:[#allocation40 + $0x78] sm:$0xff]
        %3590 = vmatpush.msra.mxu0 %v3589
        %3591 = vmatpush.msra.mxu0 %v3588
        %3592 = vmatpush.msra.mxu0 %v3587
        %3593 = vmatpush.msra.mxu0 %v3586
        %3594 = vmatpush.msra.mxu0 %v3585
        %3595 = vmatpush.msra.mxu0 %v3584
        %3596 = vmatpush.msra.mxu0 %v3583
        %3597 = vmatpush.msra.mxu0 %v3582
        %3598 = vmatpush.msra.mxu0 %v3581
        %3599 = vmatpush.msra.mxu0 %v3580
        %3600 = vmatpush.msra.mxu0 %v3579
        %3601 = vmatpush.msra.mxu0 %v3578
        %3602 = vmatpush.msra.mxu0 %v3577
        %3603 = vmatpush.msra.mxu0 %v3576
        %3604 = vmatpush.msra.mxu0 %v3575
        %3605 = vmatpush.msra.mxu0 %v3574
        %3606 = vmatmul.f32.gmra.mxu0 %v3569
        %v3607 = vpop.f32.mrf.mxu0
        %v3608 = vadd.f32 0.0, %v3607
        %3609 = vmatmul.f32.gmra.mxu0 %v3572
        %v3610 = vpop.f32.mrf.mxu0
        %v3611 = vadd.f32 0.0, %v3610
        %3612 = vdwg.mxu0
        %v3613 = vadd.f32 %v3541, %v3608
        %v3614 = vadd.f32 %v3542, %v3611
        %v3615 = vxor.u32 %v3613, 2147483648
        %v3616 = vxor.u32 %v3614, 2147483648
        %v3617 = vmul.f32 %v3615, 1.442695
        %v3618 = vpow.pop %v3617
        %v3619 = vmul.f32 %v3616, 1.442695
        %v3620 = vpow.pop %v3619
        %v3621 = vadd.f32 %v3618, 1.0
        %v3622 = vadd.f32 %v3620, 1.0
        %v3623 = vrcp.pop %v3621
        %v3624 = vmul.f32 %v3621, %v3623
        %v3625 = vsub.f32 1.0, %v3624
        %v3626 = vmul.f32 %v3623, %v3625
        %v3627 = vadd.f32 %v3623, %v3626
        %vm3628 = vweird.f32 %v3621
        %vm3629 = vweird.f32 %v3623
        %vm3630 = vmor %vm3628, %vm3629
        %v3631 = vsel %vm3630, %v3623, %v3627
        %v3632 = vand.u32 2147483647, %v3621
        %vm3633 = vcmp.eq.f32.partialorder %v3632, 8.507059e+37
        %v3634 = vand.u32 %v3621, 2147483648
        %v3635 = vor.u32 1.1754944e-38, %v3634
        %v3636 = vsel %vm3633, %v3635, %v3631
        %v3637 = vmul.f32 1.0, %v3636
        %v3638 = vrcp.pop %v3622
        %v3639 = vmul.f32 %v3622, %v3638
        %v3640 = vsub.f32 1.0, %v3639
        %v3641 = vmul.f32 %v3638, %v3640
        %v3642 = vadd.f32 %v3638, %v3641
        %vm3643 = vweird.f32 %v3622
        %vm3644 = vweird.f32 %v3638
        %vm3645 = vmor %vm3643, %vm3644
        %v3646 = vsel %vm3645, %v3638, %v3642
        %v3647 = vand.u32 2147483647, %v3622
        %vm3648 = vcmp.eq.f32.partialorder %v3647, 8.507059e+37
        %v3649 = vand.u32 %v3622, 2147483648
        %v3650 = vor.u32 1.1754944e-38, %v3649
        %v3651 = vsel %vm3648, %v3650, %v3646
        %v3652 = vmul.f32 1.0, %v3651
        %v3653 = vmul.f32 %v3613, %v3637
        %v3654 = vmul.f32 %v3614, %v3652
        %v3655 = vld [vmem:[#allocation50] sm:$0xff]
        %v3657 = vsel %vm2414, %v3655, 0
        %3659 = vmatpush.msra.mxu0 0.0
        %3660 = vmatpush.msra.mxu0 0.0
        %3661 = vmatpush.msra.mxu0 0.0
        %3662 = vmatpush.msra.mxu0 0.0
        %3663 = vmatpush.msra.mxu0 0.0
        %3664 = vmatpush.msra.mxu0 0.0
        %3665 = vmatpush.msra.mxu0 0.0
        %3666 = vmatpush.msra.mxu0 0.0
        %3667 = vmatpush.msra.mxu0 0.0
        %3668 = vmatpush.msra.mxu0 0.0
        %3669 = vmatpush.msra.mxu0 0.0
        %3670 = vmatpush.msra.mxu0 0.0
        %3671 = vmatpush.msra.mxu0 0.0
        %3672 = vmatpush.msra.mxu0 0.0
        %3673 = vmatpush.msra.mxu0 %v3654
        %3674 = vmatpush.msra.mxu0 %v3653
        %3675 = vmatmul.f32.gmra.mxu0 %v3657
        %v3676 = vpop.f32.mrf.mxu0
        %v3677 = vadd.f32 0.0, %v3676
        %3678 = vdwg.mxu0
        %v3679 = vld [vmem:[#allocation44] sm:$0x1]
        %v3680 = vld [vmem:[#allocation46] sm:$0xff]
        %v3681 = vld [vmem:[#allocation46 + $0x8] sm:$0xff]
        %v3682 = vld [vmem:[#allocation46 + $0x10] sm:$0xff]
        %v3683 = vld [vmem:[#allocation46 + $0x18] sm:$0xff]
        %v3684 = vld [vmem:[#allocation46 + $0x20] sm:$0xff]
        %v3685 = vld [vmem:[#allocation46 + $0x28] sm:$0xff]
        %v3686 = vld [vmem:[#allocation46 + $0x30] sm:$0xff]
        %v3687 = vld [vmem:[#allocation46 + $0x38] sm:$0xff]
        %v3688 = vld [vmem:[#allocation46 + $0x40] sm:$0xff]
        %v3689 = vld [vmem:[#allocation46 + $0x48] sm:$0xff]
        %v3690 = vld [vmem:[#allocation46 + $0x50] sm:$0xff]
        %v3691 = vld [vmem:[#allocation46 + $0x58] sm:$0xff]
        %v3692 = vld [vmem:[#allocation46 + $0x60] sm:$0xff]
        %v3693 = vld [vmem:[#allocation46 + $0x68] sm:$0xff]
        %v3694 = vld [vmem:[#allocation46 + $0x70] sm:$0xff]
        %v3695 = vld [vmem:[#allocation46 + $0x78] sm:$0xff]
        %3696 = vmatpush.msra.mxu0 %v3695
        %3697 = vmatpush.msra.mxu0 %v3694
        %3698 = vmatpush.msra.mxu0 %v3693
        %3699 = vmatpush.msra.mxu0 %v3692
        %3700 = vmatpush.msra.mxu0 %v3691
        %3701 = vmatpush.msra.mxu0 %v3690
        %3702 = vmatpush.msra.mxu0 %v3689
        %3703 = vmatpush.msra.mxu0 %v3688
        %3704 = vmatpush.msra.mxu0 %v3687
        %3705 = vmatpush.msra.mxu0 %v3686
        %3706 = vmatpush.msra.mxu0 %v3685
        %3707 = vmatpush.msra.mxu0 %v3684
        %3708 = vmatpush.msra.mxu0 %v3683
        %3709 = vmatpush.msra.mxu0 %v3682
        %3710 = vmatpush.msra.mxu0 %v3681
        %3711 = vmatpush.msra.mxu0 %v3680
        %3712 = vmatmul.f32.gmra.mxu0 %v3677
        %v3713 = vpop.f32.mrf.mxu0
        %v3714 = vadd.f32 0.0, %v3713
        %3715 = vdwg.mxu0
        %v3717 = vperm.slane %v3679, 0
        %v3719 = vadd.f32 %v3717, %v3714
        %v3720 = vld [vmem:[#allocation49] sm:$0xff]
        %v3721 = vld [vmem:[#allocation47] sm:$0xff]
        %v3722 = vld [vmem:[#allocation47 + $0x8] sm:$0xff]
        %v3723 = vld [vmem:[#allocation47 + $0x10] sm:$0xff]
        %v3724 = vld [vmem:[#allocation47 + $0x18] sm:$0xff]
        %v3725 = vld [vmem:[#allocation47 + $0x20] sm:$0xff]
        %v3726 = vld [vmem:[#allocation47 + $0x28] sm:$0xff]
        %v3727 = vld [vmem:[#allocation47 + $0x30] sm:$0xff]
        %v3728 = vld [vmem:[#allocation47 + $0x38] sm:$0xff]
        %v3729 = vld [vmem:[#allocation47 + $0x40] sm:$0xff]
        %v3730 = vld [vmem:[#allocation47 + $0x48] sm:$0xff]
        %v3731 = vld [vmem:[#allocation47 + $0x50] sm:$0xff]
        %v3732 = vld [vmem:[#allocation47 + $0x58] sm:$0xff]
        %v3733 = vld [vmem:[#allocation47 + $0x60] sm:$0xff]
        %v3734 = vld [vmem:[#allocation47 + $0x68] sm:$0xff]
        %v3735 = vld [vmem:[#allocation47 + $0x70] sm:$0xff]
        %v3736 = vld [vmem:[#allocation47 + $0x78] sm:$0xff]
        %v3737 = vld [vmem:[#allocation47 + $0x80] sm:$0xff]
        %v3738 = vld [vmem:[#allocation47 + $0x88] sm:$0xff]
        %v3739 = vld [vmem:[#allocation47 + $0x90] sm:$0xff]
        %v3740 = vld [vmem:[#allocation47 + $0x98] sm:$0xff]
        %v3741 = vld [vmem:[#allocation47 + $0xa0] sm:$0xff]
        %v3742 = vld [vmem:[#allocation47 + $0xa8] sm:$0xff]
        %v3743 = vld [vmem:[#allocation47 + $0xb0] sm:$0xff]
        %v3744 = vld [vmem:[#allocation47 + $0xb8] sm:$0xff]
        %v3745 = vld [vmem:[#allocation47 + $0xc0] sm:$0xff]
        %v3746 = vld [vmem:[#allocation47 + $0xc8] sm:$0xff]
        %v3747 = vld [vmem:[#allocation47 + $0xd0] sm:$0xff]
        %v3748 = vld [vmem:[#allocation47 + $0xd8] sm:$0xff]
        %v3749 = vld [vmem:[#allocation47 + $0xe0] sm:$0xff]
        %v3750 = vld [vmem:[#allocation47 + $0xe8] sm:$0xff]
        %v3751 = vld [vmem:[#allocation47 + $0xf0] sm:$0xff]
        %v3752 = vld [vmem:[#allocation47 + $0xf8] sm:$0xff]
        %3753 = vmatpush.msra.mxu0 %v3736
        %3754 = vmatpush.msra.mxu0 %v3735
        %3755 = vmatpush.msra.mxu0 %v3734
        %3756 = vmatpush.msra.mxu0 %v3733
        %3757 = vmatpush.msra.mxu0 %v3732
        %3758 = vmatpush.msra.mxu0 %v3731
        %3759 = vmatpush.msra.mxu0 %v3730
        %3760 = vmatpush.msra.mxu0 %v3729
        %3761 = vmatpush.msra.mxu0 %v3728
        %3762 = vmatpush.msra.mxu0 %v3727
        %3763 = vmatpush.msra.mxu0 %v3726
        %3764 = vmatpush.msra.mxu0 %v3725
        %3765 = vmatpush.msra.mxu0 %v3724
        %3766 = vmatpush.msra.mxu0 %v3723
        %3767 = vmatpush.msra.mxu0 %v3722
        %3768 = vmatpush.msra.mxu0 %v3721
        %3769 = vmatmul.f32.gmra.mxu0 %v3218
        %v3770 = vpop.f32.mrf.mxu0
        %v3771 = vadd.f32 0.0, %v3770
        %3772 = vmatmul.f32.gmra.mxu0 %v3220
        %v3773 = vpop.f32.mrf.mxu0
        %v3774 = vadd.f32 0.0, %v3773
        %3775 = vdwg.mxu0
        %3776 = vmatpush.msra.mxu0 %v3752
        %3777 = vmatpush.msra.mxu0 %v3751
        %3778 = vmatpush.msra.mxu0 %v3750
        %3779 = vmatpush.msra.mxu0 %v3749
        %3780 = vmatpush.msra.mxu0 %v3748
        %3781 = vmatpush.msra.mxu0 %v3747
        %3782 = vmatpush.msra.mxu0 %v3746
        %3783 = vmatpush.msra.mxu0 %v3745
        %3784 = vmatpush.msra.mxu0 %v3744
        %3785 = vmatpush.msra.mxu0 %v3743
        %3786 = vmatpush.msra.mxu0 %v3742
        %3787 = vmatpush.msra.mxu0 %v3741
        %3788 = vmatpush.msra.mxu0 %v3740
        %3789 = vmatpush.msra.mxu0 %v3739
        %3790 = vmatpush.msra.mxu0 %v3738
        %3791 = vmatpush.msra.mxu0 %v3737
        %3792 = vmatmul.f32.gmra.mxu0 %v3219
        %v3793 = vpop.f32.mrf.mxu0
        %v3794 = vadd.f32 %v3771, %v3793
        %3795 = vmatmul.f32.gmra.mxu0 %v3221
        %v3796 = vpop.f32.mrf.mxu0
        %v3797 = vadd.f32 %v3774, %v3796
        %3798 = vdwg.mxu0
        %v3800 = vsel %vm2414, %v3720, 0
        %3802 = vmatpush.msra.mxu0 0.0
        %3803 = vmatpush.msra.mxu0 0.0
        %3804 = vmatpush.msra.mxu0 0.0
        %3805 = vmatpush.msra.mxu0 0.0
        %3806 = vmatpush.msra.mxu0 0.0
        %3807 = vmatpush.msra.mxu0 0.0
        %3808 = vmatpush.msra.mxu0 0.0
        %3809 = vmatpush.msra.mxu0 0.0
        %3810 = vmatpush.msra.mxu0 0.0
        %3811 = vmatpush.msra.mxu0 0.0
        %3812 = vmatpush.msra.mxu0 0.0
        %3813 = vmatpush.msra.mxu0 0.0
        %3814 = vmatpush.msra.mxu0 0.0
        %3815 = vmatpush.msra.mxu0 0.0
        %3816 = vmatpush.msra.mxu0 %v3797
        %3817 = vmatpush.msra.mxu0 %v3794
        %3818 = vmatmul.f32.gmra.mxu0 %v3800
        %v3819 = vpop.f32.mrf.mxu0
        %v3820 = vadd.f32 0.0, %v3819
        %3821 = vdwg.mxu0
        %v3822 = vadd.f32 %v3719, %v3820
        %v3823 = vld [vmem:[#allocation52] sm:$0x1]
        %v3824 = vld [vmem:[%s83] sm:$0xff]
        %v3825 = vld [vmem:[%s83 + $0x8] sm:$0xff]
        %v3826 = vld [vmem:[%s83 + $0x10] sm:$0xff]
        %v3827 = vld [vmem:[%s83 + $0x18] sm:$0xff]
        %v3828 = vld [vmem:[%s83 + $0x20] sm:$0xff]
        %v3829 = vld [vmem:[%s83 + $0x28] sm:$0xff]
        %v3830 = vld [vmem:[%s83 + $0x30] sm:$0xff]
        %v3831 = vld [vmem:[%s83 + $0x38] sm:$0xff]
        %v3832 = vld [vmem:[%s83 + $0x40] sm:$0xff]
        %v3833 = vld [vmem:[%s83 + $0x48] sm:$0xff]
        %v3834 = vld [vmem:[%s83 + $0x50] sm:$0xff]
        %v3835 = vld [vmem:[%s83 + $0x58] sm:$0xff]
        %v3836 = vld [vmem:[%s83 + $0x60] sm:$0xff]
        %v3837 = vld [vmem:[%s83 + $0x68] sm:$0xff]
        %v3838 = vld [vmem:[%s83 + $0x70] sm:$0xff]
        %v3839 = vld [vmem:[%s83 + $0x78] sm:$0xff]
        %3840 = vmatpush.msra.mxu0 %v3839
        %3841 = vmatpush.msra.mxu0 %v3838
        %3842 = vmatpush.msra.mxu0 %v3837
        %3843 = vmatpush.msra.mxu0 %v3836
        %3844 = vmatpush.msra.mxu0 %v3835
        %3845 = vmatpush.msra.mxu0 %v3834
        %3846 = vmatpush.msra.mxu0 %v3833
        %3847 = vmatpush.msra.mxu0 %v3832
        %3848 = vmatpush.msra.mxu0 %v3831
        %3849 = vmatpush.msra.mxu0 %v3830
        %3850 = vmatpush.msra.mxu0 %v3829
        %3851 = vmatpush.msra.mxu0 %v3828
        %3852 = vmatpush.msra.mxu0 %v3827
        %3853 = vmatpush.msra.mxu0 %v3826
        %3854 = vmatpush.msra.mxu0 %v3825
        %3855 = vmatpush.msra.mxu0 %v3824
        %3856 = vmatmul.f32.gmra.mxu0 %v3822
        %v3857 = vpop.f32.mrf.mxu0
        %v3858 = vadd.f32 0.0, %v3857
        %3859 = vdwg.mxu0
        %v3861 = vperm.slane %v3823, 0
        %v3863 = vadd.f32 %v3861, %v3858
        %3864 = vst.msk [vmem:[%s2396] sm:$0xff] %vm2460, %v3863
        %v3865 = vxor.u32 %v3822, 2147483648
        %v3866 = vmul.f32 %v3865, 1.442695
        %v3867 = vpow.pop %v3866
        %v3868 = vadd.f32 %v3867, 1.0
        %v3869 = vrcp.pop %v3868
        %v3870 = vmul.f32 %v3868, %v3869
        %v3871 = vsub.f32 1.0, %v3870
        %v3872 = vmul.f32 %v3869, %v3871
        %v3873 = vadd.f32 %v3869, %v3872
        %vm3874 = vweird.f32 %v3868
        %vm3875 = vweird.f32 %v3869
        %vm3876 = vmor %vm3874, %vm3875
        %v3877 = vsel %vm3876, %v3869, %v3873
        %v3878 = vand.u32 2147483647, %v3868
        %vm3879 = vcmp.eq.f32.partialorder %v3878, 8.507059e+37
        %v3880 = vand.u32 %v3868, 2147483648
        %v3881 = vor.u32 1.1754944e-38, %v3880
        %v3882 = vsel %vm3879, %v3881, %v3877
        %v3883 = vmul.f32 1.0, %v3882
        %v3884 = vmul.f32 %v3822, %v3883
        %v3885 = vld [vmem:[#allocation20] sm:$0x1]
        %v3886 = vld [vmem:[%s37] sm:$0xff]
        %v3887 = vld [vmem:[%s37 + $0x8] sm:$0xff]
        %v3888 = vld [vmem:[%s37 + $0x10] sm:$0xff]
        %v3889 = vld [vmem:[%s37 + $0x18] sm:$0xff]
        %v3890 = vld [vmem:[%s37 + $0x20] sm:$0xff]
        %v3891 = vld [vmem:[%s37 + $0x28] sm:$0xff]
        %v3892 = vld [vmem:[%s37 + $0x30] sm:$0xff]
        %v3893 = vld [vmem:[%s37 + $0x38] sm:$0xff]
        %v3894 = vld [vmem:[%s37 + $0x40] sm:$0xff]
        %v3895 = vld [vmem:[%s37 + $0x48] sm:$0xff]
        %v3896 = vld [vmem:[%s37 + $0x50] sm:$0xff]
        %v3897 = vld [vmem:[%s37 + $0x58] sm:$0xff]
        %v3898 = vld [vmem:[%s37 + $0x60] sm:$0xff]
        %v3899 = vld [vmem:[%s37 + $0x68] sm:$0xff]
        %v3900 = vld [vmem:[%s37 + $0x70] sm:$0xff]
        %v3901 = vld [vmem:[%s37 + $0x78] sm:$0xff]
        %3902 = vmatpush.msra.mxu0 %v3901
        %3903 = vmatpush.msra.mxu0 %v3900
        %3904 = vmatpush.msra.mxu0 %v3899
        %3905 = vmatpush.msra.mxu0 %v3898
        %3906 = vmatpush.msra.mxu0 %v3897
        %3907 = vmatpush.msra.mxu0 %v3896
        %3908 = vmatpush.msra.mxu0 %v3895
        %3909 = vmatpush.msra.mxu0 %v3894
        %3910 = vmatpush.msra.mxu0 %v3893
        %3911 = vmatpush.msra.mxu0 %v3892
        %3912 = vmatpush.msra.mxu0 %v3891
        %3913 = vmatpush.msra.mxu0 %v3890
        %3914 = vmatpush.msra.mxu0 %v3889
        %3915 = vmatpush.msra.mxu0 %v3888
        %3916 = vmatpush.msra.mxu0 %v3887
        %3917 = vmatpush.msra.mxu0 %v3886
        %3918 = vmatmul.f32.gmra.mxu0 %v3884
        %v3919 = vpop.f32.mrf.mxu0
        %v3920 = vadd.f32 0.0, %v3919
        %3921 = vdwg.mxu0
        %v3923 = vperm.slane %v3885, 0
        %v3925 = vadd.f32 %v3923, %v3920
        %v3926 = vxor.u32 %v3925, 2147483648
        %v3927 = vmul.f32 %v3926, 1.442695
        %v3928 = vpow.pop %v3927
        %v3929 = vadd.f32 %v3928, 1.0
        %v3930 = vrcp.pop %v3929
        %v3931 = vmul.f32 %v3929, %v3930
        %v3932 = vsub.f32 1.0, %v3931
        %v3933 = vmul.f32 %v3930, %v3932
        %v3934 = vadd.f32 %v3930, %v3933
        %vm3935 = vweird.f32 %v3929
        %vm3936 = vweird.f32 %v3930
        %vm3937 = vmor %vm3935, %vm3936
        %v3938 = vsel %vm3937, %v3930, %v3934
        %v3939 = vand.u32 2147483647, %v3929
        %vm3940 = vcmp.eq.f32.partialorder %v3939, 8.507059e+37
        %v3941 = vand.u32 %v3929, 2147483648
        %v3942 = vor.u32 1.1754944e-38, %v3941
        %v3943 = vsel %vm3940, %v3942, %v3938
        %v3944 = vmul.f32 1.0, %v3943
        %v3945 = vmul.f32 %v3925, %v3944
        %v3946 = vld [vmem:[#allocation22] sm:$0x1]
        %v3947 = vld [vmem:[#allocation26] sm:$0xff]
        %vm3948 = vcmask 64512
        %v3950 = vsel %vm3948, %v3947, 0
        %3952 = vmatpush.msra.mxu0 0.0
        %3953 = vmatpush.msra.mxu0 0.0
        %3954 = vmatpush.msra.mxu0 0.0
        %3955 = vmatpush.msra.mxu0 0.0
        %3956 = vmatpush.msra.mxu0 0.0
        %3957 = vmatpush.msra.mxu0 0.0
        %3958 = vmatpush.msra.mxu0 0.0
        %3959 = vmatpush.msra.mxu0 0.0
        %3960 = vmatpush.msra.mxu0 0.0
        %3961 = vmatpush.msra.mxu0 0.0
        %3962 = vmatpush.msra.mxu0 0.0
        %3963 = vmatpush.msra.mxu0 0.0
        %3964 = vmatpush.msra.mxu0 0.0
        %3965 = vmatpush.msra.mxu0 0.0
        %3966 = vmatpush.msra.mxu0 0.0
        %3967 = vmatpush.msra.mxu0 %v3945
        %3968 = vmatmul.f32.gmra.mxu0 %v3950
        %v3969 = vpop.f32.mrf.mxu0
        %v3970 = vadd.f32 0.0, %v3969
        %3971 = vdwg.mxu0
        %v3972 = vld [vmem:[%s41] sm:$0xff]
        %v3973 = vld [vmem:[%s41 + $0x8] sm:$0xff]
        %v3974 = vld [vmem:[%s41 + $0x10] sm:$0xff]
        %v3975 = vld [vmem:[%s41 + $0x18] sm:$0xff]
        %v3976 = vld [vmem:[%s41 + $0x20] sm:$0xff]
        %v3977 = vld [vmem:[%s41 + $0x28] sm:$0xff]
        %v3978 = vld [vmem:[%s41 + $0x30] sm:$0xff]
        %v3979 = vld [vmem:[%s41 + $0x38] sm:$0xff]
        %v3981 = vsel %vm2460, %v3970, 0
        %3983 = vmatpush.msra.mxu0 0.0
        %3984 = vmatpush.msra.mxu0 0.0
        %3985 = vmatpush.msra.mxu0 0.0
        %3986 = vmatpush.msra.mxu0 0.0
        %3987 = vmatpush.msra.mxu0 0.0
        %3988 = vmatpush.msra.mxu0 0.0
        %3989 = vmatpush.msra.mxu0 0.0
        %3990 = vmatpush.msra.mxu0 0.0
        %3991 = vmatpush.msra.mxu0 %v3979
        %3992 = vmatpush.msra.mxu0 %v3978
        %3993 = vmatpush.msra.mxu0 %v3977
        %3994 = vmatpush.msra.mxu0 %v3976
        %3995 = vmatpush.msra.mxu0 %v3975
        %3996 = vmatpush.msra.mxu0 %v3974
        %3997 = vmatpush.msra.mxu0 %v3973
        %3998 = vmatpush.msra.mxu0 %v3972
        %3999 = vmatmul.f32.gmra.mxu0 %v3981
        %v4000 = vpop.f32.mrf.mxu0
        %v4001 = vadd.f32 0.0, %v4000
        %4002 = vdwg.mxu0
        %v4004 = vperm.slane %v3946, 0
        %v4006 = vadd.f32 %v4004, %v4001
        %v4007 = vld [vmem:[#allocation23] sm:$0xff]
        %v4008 = vld [vmem:[#allocation23 + $0x8] sm:$0xff]
        %v4009 = vld [vmem:[#allocation23 + $0x10] sm:$0xff]
        %v4010 = vld [vmem:[#allocation23 + $0x18] sm:$0xff]
        %v4011 = vld [vmem:[#allocation23 + $0x20] sm:$0xff]
        %v4012 = vld [vmem:[#allocation23 + $0x28] sm:$0xff]
        %v4013 = vld [vmem:[#allocation23 + $0x30] sm:$0xff]
        %v4014 = vld [vmem:[#allocation23 + $0x38] sm:$0xff]
        %v4016 = vsel %vm2460, %v3945, 0
        %4018 = vmatpush.msra.mxu0 0.0
        %4019 = vmatpush.msra.mxu0 0.0
        %4020 = vmatpush.msra.mxu0 0.0
        %4021 = vmatpush.msra.mxu0 0.0
        %4022 = vmatpush.msra.mxu0 0.0
        %4023 = vmatpush.msra.mxu0 0.0
        %4024 = vmatpush.msra.mxu0 0.0
        %4025 = vmatpush.msra.mxu0 0.0
        %4026 = vmatpush.msra.mxu0 %v4014
        %4027 = vmatpush.msra.mxu0 %v4013
        %4028 = vmatpush.msra.mxu0 %v4012
        %4029 = vmatpush.msra.mxu0 %v4011
        %4030 = vmatpush.msra.mxu0 %v4010
        %4031 = vmatpush.msra.mxu0 %v4009
        %4032 = vmatpush.msra.mxu0 %v4008
        %4033 = vmatpush.msra.mxu0 %v4007
        %4034 = vmatmul.f32.gmra.mxu0 %v4016
        %v4035 = vpop.f32.mrf.mxu0
        %v4036 = vadd.f32 0.0, %v4035
        %4037 = vdwg.mxu0
        %v4038 = vadd.f32 %v4006, %v4036
        %v4039 = vld [vmem:[#allocation28] sm:$0xff]
        %v4041 = vsel %vm3948, %v4039, 0
        %4043 = vmatpush.msra.mxu0 0.0
        %4044 = vmatpush.msra.mxu0 0.0
        %4045 = vmatpush.msra.mxu0 0.0
        %4046 = vmatpush.msra.mxu0 0.0
        %4047 = vmatpush.msra.mxu0 0.0
        %4048 = vmatpush.msra.mxu0 0.0
        %4049 = vmatpush.msra.mxu0 0.0
        %4050 = vmatpush.msra.mxu0 0.0
        %4051 = vmatpush.msra.mxu0 0.0
        %4052 = vmatpush.msra.mxu0 0.0
        %4053 = vmatpush.msra.mxu0 0.0
        %4054 = vmatpush.msra.mxu0 0.0
        %4055 = vmatpush.msra.mxu0 0.0
        %4056 = vmatpush.msra.mxu0 0.0
        %4057 = vmatpush.msra.mxu0 0.0
        %4058 = vmatpush.msra.mxu0 %v3945
        %4059 = vmatmul.f32.gmra.mxu0 %v4041
        %v4060 = vpop.f32.mrf.mxu0
        %v4061 = vadd.f32 0.0, %v4060
        %4062 = vdwg.mxu0
        %v4063 = vld [vmem:[#allocation25] sm:$0xff]
        %v4064 = vld [vmem:[#allocation25 + $0x8] sm:$0xff]
        %v4065 = vld [vmem:[#allocation25 + $0x10] sm:$0xff]
        %v4066 = vld [vmem:[#allocation25 + $0x18] sm:$0xff]
        %v4067 = vld [vmem:[#allocation25 + $0x20] sm:$0xff]
        %v4068 = vld [vmem:[#allocation25 + $0x28] sm:$0xff]
        %v4069 = vld [vmem:[#allocation25 + $0x30] sm:$0xff]
        %v4070 = vld [vmem:[#allocation25 + $0x38] sm:$0xff]
        %v4072 = vsel %vm2460, %v4061, 0
        %4074 = vmatpush.msra.mxu0 0.0
        %4075 = vmatpush.msra.mxu0 0.0
        %4076 = vmatpush.msra.mxu0 0.0
        %4077 = vmatpush.msra.mxu0 0.0
        %4078 = vmatpush.msra.mxu0 0.0
        %4079 = vmatpush.msra.mxu0 0.0
        %4080 = vmatpush.msra.mxu0 0.0
        %4081 = vmatpush.msra.mxu0 0.0
        %4082 = vmatpush.msra.mxu0 %v4070
        %4083 = vmatpush.msra.mxu0 %v4069
        %4084 = vmatpush.msra.mxu0 %v4068
        %4085 = vmatpush.msra.mxu0 %v4067
        %4086 = vmatpush.msra.mxu0 %v4066
        %4087 = vmatpush.msra.mxu0 %v4065
        %4088 = vmatpush.msra.mxu0 %v4064
        %4089 = vmatpush.msra.mxu0 %v4063
        %4090 = vmatmul.f32.gmra.mxu0 %v4072
        %v4091 = vpop.f32.mrf.mxu0
        %v4092 = vadd.f32 0.0, %v4091
        %4093 = vdwg.mxu0
        %v4094 = vadd.f32 %v4038, %v4092
        %v4095 = vxor.u32 %v4094, 2147483648
        %v4096 = vmul.f32 %v4095, 1.442695
        %v4097 = vpow.pop %v4096
        %v4098 = vadd.f32 %v4097, 1.0
        %v4099 = vrcp.pop %v4098
        %v4100 = vmul.f32 %v4098, %v4099
        %v4101 = vsub.f32 1.0, %v4100
        %v4102 = vmul.f32 %v4099, %v4101
        %v4103 = vadd.f32 %v4099, %v4102
        %vm4104 = vweird.f32 %v4098
        %vm4105 = vweird.f32 %v4099
        %vm4106 = vmor %vm4104, %vm4105
        %v4107 = vsel %vm4106, %v4099, %v4103
        %v4108 = vand.u32 2147483647, %v4098
        %vm4109 = vcmp.eq.f32.partialorder %v4108, 8.507059e+37
        %v4110 = vand.u32 %v4098, 2147483648
        %v4111 = vor.u32 1.1754944e-38, %v4110
        %v4112 = vsel %vm4109, %v4111, %v4107
        %v4113 = vmul.f32 1.0, %v4112
        %v4114 = vmul.f32 %v4094, %v4113
        %v4115 = vld [vmem:[#allocation29] sm:$0x1]
        %v4116 = vld [vmem:[#allocation31] sm:$0xff]
        %v4117 = vld [vmem:[#allocation31 + $0x8] sm:$0xff]
        %v4118 = vld [vmem:[#allocation31 + $0x10] sm:$0xff]
        %v4119 = vld [vmem:[#allocation31 + $0x18] sm:$0xff]
        %v4120 = vld [vmem:[#allocation31 + $0x20] sm:$0xff]
        %v4121 = vld [vmem:[#allocation31 + $0x28] sm:$0xff]
        %v4122 = vld [vmem:[#allocation31 + $0x30] sm:$0xff]
        %v4123 = vld [vmem:[#allocation31 + $0x38] sm:$0xff]
        %v4125 = vsel %vm2460, %v4114, 0
        %4127 = vmatpush.msra.mxu0 0.0
        %4128 = vmatpush.msra.mxu0 0.0
        %4129 = vmatpush.msra.mxu0 0.0
        %4130 = vmatpush.msra.mxu0 0.0
        %4131 = vmatpush.msra.mxu0 0.0
        %4132 = vmatpush.msra.mxu0 0.0
        %4133 = vmatpush.msra.mxu0 0.0
        %4134 = vmatpush.msra.mxu0 0.0
        %4135 = vmatpush.msra.mxu0 %v4123
        %4136 = vmatpush.msra.mxu0 %v4122
        %4137 = vmatpush.msra.mxu0 %v4121
        %4138 = vmatpush.msra.mxu0 %v4120
        %4139 = vmatpush.msra.mxu0 %v4119
        %4140 = vmatpush.msra.mxu0 %v4118
        %4141 = vmatpush.msra.mxu0 %v4117
        %4142 = vmatpush.msra.mxu0 %v4116
        %4143 = vmatmul.f32.gmra.mxu0 %v4125
        %v4144 = vpop.f32.mrf.mxu0
        %v4145 = vadd.f32 0.0, %v4144
        %4146 = vdwg.mxu0
        %v4148 = vperm.slane %v4115, 0
        %v4150 = vadd.f32 %v4148, %v4145
        %v4151 = vadd.f32 %v3822, %v4150
        %v4152 = vxor.u32 %v4151, 2147483648
        %v4153 = vmul.f32 %v4152, 1.442695
        %v4154 = vpow.pop %v4153
        %v4155 = vadd.f32 %v4154, 1.0
        %v4156 = vrcp.pop %v4155
        %v4157 = vmul.f32 %v4155, %v4156
        %v4158 = vsub.f32 1.0, %v4157
        %v4159 = vmul.f32 %v4156, %v4158
        %v4160 = vadd.f32 %v4156, %v4159
        %vm4161 = vweird.f32 %v4155
        %vm4162 = vweird.f32 %v4156
        %vm4163 = vmor %vm4161, %vm4162
        %v4164 = vsel %vm4163, %v4156, %v4160
        %v4165 = vand.u32 2147483647, %v4155
        %vm4166 = vcmp.eq.f32.partialorder %v4165, 8.507059e+37
        %v4167 = vand.u32 %v4155, 2147483648
        %v4168 = vor.u32 1.1754944e-38, %v4167
        %v4169 = vsel %vm4166, %v4168, %v4164
        %v4170 = vmul.f32 1.0, %v4169
        %v4171 = vmul.f32 %v4151, %v4170
        %v4172 = vld [vmem:[#allocation53] sm:$0x1]
        %v4173 = vld [vmem:[%s87] sm:$0xff]
        %v4174 = vld [vmem:[%s87 + $0x8] sm:$0xff]
        %v4175 = vld [vmem:[%s87 + $0x10] sm:$0xff]
        %v4176 = vld [vmem:[%s87 + $0x18] sm:$0xff]
        %v4177 = vld [vmem:[%s87 + $0x20] sm:$0xff]
        %v4178 = vld [vmem:[%s87 + $0x28] sm:$0xff]
        %v4179 = vld [vmem:[%s87 + $0x30] sm:$0xff]
        %v4180 = vld [vmem:[%s87 + $0x38] sm:$0xff]
        %v4181 = vld [vmem:[%s87 + $0x40] sm:$0xff]
        %v4182 = vld [vmem:[%s87 + $0x48] sm:$0xff]
        %v4183 = vld [vmem:[%s87 + $0x50] sm:$0xff]
        %v4184 = vld [vmem:[%s87 + $0x58] sm:$0xff]
        %v4185 = vld [vmem:[%s87 + $0x60] sm:$0xff]
        %v4186 = vld [vmem:[%s87 + $0x68] sm:$0xff]
        %v4187 = vld [vmem:[%s87 + $0x70] sm:$0xff]
        %v4188 = vld [vmem:[%s87 + $0x78] sm:$0xff]
        %4189 = vmatpush.msra.mxu0 %v4188
        %4190 = vmatpush.msra.mxu0 %v4187
        %4191 = vmatpush.msra.mxu0 %v4186
        %4192 = vmatpush.msra.mxu0 %v4185
        %4193 = vmatpush.msra.mxu0 %v4184
        %4194 = vmatpush.msra.mxu0 %v4183
        %4195 = vmatpush.msra.mxu0 %v4182
        %4196 = vmatpush.msra.mxu0 %v4181
        %4197 = vmatpush.msra.mxu0 %v4180
        %4198 = vmatpush.msra.mxu0 %v4179
        %4199 = vmatpush.msra.mxu0 %v4178
        %4200 = vmatpush.msra.mxu0 %v4177
        %4201 = vmatpush.msra.mxu0 %v4176
        %4202 = vmatpush.msra.mxu0 %v4175
        %4203 = vmatpush.msra.mxu0 %v4174
        %4204 = vmatpush.msra.mxu0 %v4173
        %4205 = vmatmul.f32.gmra.mxu0 %v4171
        %v4206 = vpop.f32.mrf.mxu0
        %v4207 = vadd.f32 0.0, %v4206
        %4208 = vdwg.mxu0
        %v4210 = vperm.slane %v4172, 0
        %v4212 = vadd.f32 %v4210, %v4207
        %v4213 = vxor.u32 %v4212, 2147483648
        %v4214 = vmul.f32 %v4213, 1.442695
        %v4215 = vpow.pop %v4214
        %v4216 = vadd.f32 %v4215, 1.0
        %v4217 = vrcp.pop %v4216
        %v4218 = vmul.f32 %v4216, %v4217
        %v4219 = vsub.f32 1.0, %v4218
        %v4220 = vmul.f32 %v4217, %v4219
        %v4221 = vadd.f32 %v4217, %v4220
        %vm4222 = vweird.f32 %v4216
        %vm4223 = vweird.f32 %v4217
        %vm4224 = vmor %vm4222, %vm4223
        %v4225 = vsel %vm4224, %v4217, %v4221
        %v4226 = vand.u32 2147483647, %v4216
        %vm4227 = vcmp.eq.f32.partialorder %v4226, 8.507059e+37
        %v4228 = vand.u32 %v4216, 2147483648
        %v4229 = vor.u32 1.1754944e-38, %v4228
        %v4230 = vsel %vm4227, %v4229, %v4225
        %v4231 = vmul.f32 1.0, %v4230
        %v4232 = vmul.f32 %v4212, %v4231
        %v4233 = vld [vmem:[#allocation55] sm:$0x1]
        %v4234 = vld [vmem:[#allocation61] sm:$0xff]
        %v4236 = vsel %vm3948, %v4234, 0
        %4238 = vmatpush.msra.mxu0 0.0
        %4239 = vmatpush.msra.mxu0 0.0
        %4240 = vmatpush.msra.mxu0 0.0
        %4241 = vmatpush.msra.mxu0 0.0
        %4242 = vmatpush.msra.mxu0 0.0
        %4243 = vmatpush.msra.mxu0 0.0
        %4244 = vmatpush.msra.mxu0 0.0
        %4245 = vmatpush.msra.mxu0 0.0
        %4246 = vmatpush.msra.mxu0 0.0
        %4247 = vmatpush.msra.mxu0 0.0
        %4248 = vmatpush.msra.mxu0 0.0
        %4249 = vmatpush.msra.mxu0 0.0
        %4250 = vmatpush.msra.mxu0 0.0
        %4251 = vmatpush.msra.mxu0 0.0
        %4252 = vmatpush.msra.mxu0 0.0
        %4253 = vmatpush.msra.mxu0 %v4232
        %4254 = vmatmul.f32.gmra.mxu0 %v4236
        %v4255 = vpop.f32.mrf.mxu0
        %v4256 = vadd.f32 0.0, %v4255
        %4257 = vdwg.mxu0
        %v4258 = vld [vmem:[#allocation56] sm:$0xff]
        %v4259 = vld [vmem:[#allocation56 + $0x8] sm:$0xff]
        %v4260 = vld [vmem:[#allocation56 + $0x10] sm:$0xff]
        %v4261 = vld [vmem:[#allocation56 + $0x18] sm:$0xff]
        %v4262 = vld [vmem:[#allocation56 + $0x20] sm:$0xff]
        %v4263 = vld [vmem:[#allocation56 + $0x28] sm:$0xff]
        %v4264 = vld [vmem:[#allocation56 + $0x30] sm:$0xff]
        %v4265 = vld [vmem:[#allocation56 + $0x38] sm:$0xff]
        %v4267 = vsel %vm2460, %v4256, 0
        %4269 = vmatpush.msra.mxu0 0.0
        %4270 = vmatpush.msra.mxu0 0.0
        %4271 = vmatpush.msra.mxu0 0.0
        %4272 = vmatpush.msra.mxu0 0.0
        %4273 = vmatpush.msra.mxu0 0.0
        %4274 = vmatpush.msra.mxu0 0.0
        %4275 = vmatpush.msra.mxu0 0.0
        %4276 = vmatpush.msra.mxu0 0.0
        %4277 = vmatpush.msra.mxu0 %v4265
        %4278 = vmatpush.msra.mxu0 %v4264
        %4279 = vmatpush.msra.mxu0 %v4263
        %4280 = vmatpush.msra.mxu0 %v4262
        %4281 = vmatpush.msra.mxu0 %v4261
        %4282 = vmatpush.msra.mxu0 %v4260
        %4283 = vmatpush.msra.mxu0 %v4259
        %4284 = vmatpush.msra.mxu0 %v4258
        %4285 = vmatmul.f32.gmra.mxu0 %v4267
        %v4286 = vpop.f32.mrf.mxu0
        %v4287 = vadd.f32 0.0, %v4286
        %4288 = vdwg.mxu0
        %v4290 = vperm.slane %v4233, 0
        %v4292 = vadd.f32 %v4290, %v4287
        %v4293 = vld [vmem:[#allocation58] sm:$0xff]
        %v4294 = vld [vmem:[#allocation58 + $0x8] sm:$0xff]
        %v4295 = vld [vmem:[#allocation58 + $0x10] sm:$0xff]
        %v4296 = vld [vmem:[#allocation58 + $0x18] sm:$0xff]
        %v4297 = vld [vmem:[#allocation58 + $0x20] sm:$0xff]
        %v4298 = vld [vmem:[#allocation58 + $0x28] sm:$0xff]
        %v4299 = vld [vmem:[#allocation58 + $0x30] sm:$0xff]
        %v4300 = vld [vmem:[#allocation58 + $0x38] sm:$0xff]
        %v4302 = vsel %vm2460, %v4232, 0
        %4304 = vmatpush.msra.mxu0 0.0
        %4305 = vmatpush.msra.mxu0 0.0
        %4306 = vmatpush.msra.mxu0 0.0
        %4307 = vmatpush.msra.mxu0 0.0
        %4308 = vmatpush.msra.mxu0 0.0
        %4309 = vmatpush.msra.mxu0 0.0
        %4310 = vmatpush.msra.mxu0 0.0
        %4311 = vmatpush.msra.mxu0 0.0
        %4312 = vmatpush.msra.mxu0 %v4300
        %4313 = vmatpush.msra.mxu0 %v4299
        %4314 = vmatpush.msra.mxu0 %v4298
        %4315 = vmatpush.msra.mxu0 %v4297
        %4316 = vmatpush.msra.mxu0 %v4296
        %4317 = vmatpush.msra.mxu0 %v4295
        %4318 = vmatpush.msra.mxu0 %v4294
        %4319 = vmatpush.msra.mxu0 %v4293
        %4320 = vmatmul.f32.gmra.mxu0 %v4302
        %v4321 = vpop.f32.mrf.mxu0
        %v4322 = vadd.f32 0.0, %v4321
        %4323 = vdwg.mxu0
        %v4324 = vadd.f32 %v4292, %v4322
        %v4325 = vld [vmem:[#allocation62] sm:$0xff]
        %v4327 = vsel %vm3948, %v4325, 0
        %4329 = vmatpush.msra.mxu0 0.0
        %4330 = vmatpush.msra.mxu0 0.0
        %4331 = vmatpush.msra.mxu0 0.0
        %4332 = vmatpush.msra.mxu0 0.0
        %4333 = vmatpush.msra.mxu0 0.0
        %4334 = vmatpush.msra.mxu0 0.0
        %4335 = vmatpush.msra.mxu0 0.0
        %4336 = vmatpush.msra.mxu0 0.0
        %4337 = vmatpush.msra.mxu0 0.0
        %4338 = vmatpush.msra.mxu0 0.0
        %4339 = vmatpush.msra.mxu0 0.0
        %4340 = vmatpush.msra.mxu0 0.0
        %4341 = vmatpush.msra.mxu0 0.0
        %4342 = vmatpush.msra.mxu0 0.0
        %4343 = vmatpush.msra.mxu0 0.0
        %4344 = vmatpush.msra.mxu0 %v4232
        %4345 = vmatmul.f32.gmra.mxu0 %v4327
        %v4346 = vpop.f32.mrf.mxu0
        %v4347 = vadd.f32 0.0, %v4346
        %4348 = vdwg.mxu0
        %v4349 = vld [vmem:[#allocation59] sm:$0xff]
        %v4350 = vld [vmem:[#allocation59 + $0x8] sm:$0xff]
        %v4351 = vld [vmem:[#allocation59 + $0x10] sm:$0xff]
        %v4352 = vld [vmem:[#allocation59 + $0x18] sm:$0xff]
        %v4353 = vld [vmem:[#allocation59 + $0x20] sm:$0xff]
        %v4354 = vld [vmem:[#allocation59 + $0x28] sm:$0xff]
        %v4355 = vld [vmem:[#allocation59 + $0x30] sm:$0xff]
        %v4356 = vld [vmem:[#allocation59 + $0x38] sm:$0xff]
        %v4358 = vsel %vm2460, %v4347, 0
        %4360 = vmatpush.msra.mxu0 0.0
        %4361 = vmatpush.msra.mxu0 0.0
        %4362 = vmatpush.msra.mxu0 0.0
        %4363 = vmatpush.msra.mxu0 0.0
        %4364 = vmatpush.msra.mxu0 0.0
        %4365 = vmatpush.msra.mxu0 0.0
        %4366 = vmatpush.msra.mxu0 0.0
        %4367 = vmatpush.msra.mxu0 0.0
        %4368 = vmatpush.msra.mxu0 %v4356
        %4369 = vmatpush.msra.mxu0 %v4355
        %4370 = vmatpush.msra.mxu0 %v4354
        %4371 = vmatpush.msra.mxu0 %v4353
        %4372 = vmatpush.msra.mxu0 %v4352
        %4373 = vmatpush.msra.mxu0 %v4351
        %4374 = vmatpush.msra.mxu0 %v4350
        %4375 = vmatpush.msra.mxu0 %v4349
        %4376 = vmatmul.f32.gmra.mxu0 %v4358
        %v4377 = vpop.f32.mrf.mxu0
        %v4378 = vadd.f32 0.0, %v4377
        %4379 = vdwg.mxu0
        %v4380 = vadd.f32 %v4324, %v4378
        %v4381 = vxor.u32 %v4380, 2147483648
        %v4382 = vmul.f32 %v4381, 1.442695
        %v4383 = vpow.pop %v4382
        %v4384 = vadd.f32 %v4383, 1.0
        %v4385 = vrcp.pop %v4384
        %v4386 = vmul.f32 %v4384, %v4385
        %v4387 = vsub.f32 1.0, %v4386
        %v4388 = vmul.f32 %v4385, %v4387
        %v4389 = vadd.f32 %v4385, %v4388
        %vm4390 = vweird.f32 %v4384
        %vm4391 = vweird.f32 %v4385
        %vm4392 = vmor %vm4390, %vm4391
        %v4393 = vsel %vm4392, %v4385, %v4389
        %v4394 = vand.u32 2147483647, %v4384
        %vm4395 = vcmp.eq.f32.partialorder %v4394, 8.507059e+37
        %v4396 = vand.u32 %v4384, 2147483648
        %v4397 = vor.u32 1.1754944e-38, %v4396
        %v4398 = vsel %vm4395, %v4397, %v4393
        %v4399 = vmul.f32 1.0, %v4398
        %v4400 = vmul.f32 %v4380, %v4399
        %v4401 = vld [vmem:[#allocation67] sm:$0xf]
        %v4403 = vsel %vm3948, %v4401, 0
        %4405 = vmatpush.msra.mxu0 0.0
        %4406 = vmatpush.msra.mxu0 0.0
        %4407 = vmatpush.msra.mxu0 0.0
        %4408 = vmatpush.msra.mxu0 0.0
        %4409 = vmatpush.msra.mxu0 0.0
        %4410 = vmatpush.msra.mxu0 0.0
        %4411 = vmatpush.msra.mxu0 0.0
        %4412 = vmatpush.msra.mxu0 0.0
        %4413 = vmatpush.msra.mxu0 0.0
        %4414 = vmatpush.msra.mxu0 0.0
        %4415 = vmatpush.msra.mxu0 0.0
        %4416 = vmatpush.msra.mxu0 0.0
        %4417 = vmatpush.msra.mxu0 0.0
        %4418 = vmatpush.msra.mxu0 0.0
        %4419 = vmatpush.msra.mxu0 0.0
        %4420 = vmatpush.msra.mxu0 %v4400
        %4421 = vmatmul.f32.gmra.mxu0 %v4403
        %v4422 = vpop.f32.mrf.mxu0
        %v4423 = vadd.f32 0.0, %v4422
        %4424 = vdwg.mxu0
        %v4425 = vld [vmem:[#allocation64] sm:$0x1]
        %v4426 = vld [vmem:[#allocation65] sm:$0xff]
        %v4427 = vld [vmem:[#allocation65 + $0x8] sm:$0xff]
        %v4428 = vld [vmem:[#allocation65 + $0x10] sm:$0xff]
        %v4429 = vld [vmem:[#allocation65 + $0x18] sm:$0xff]
        %v4430 = vld [vmem:[#allocation65 + $0x20] sm:$0xff]
        %v4431 = vld [vmem:[#allocation65 + $0x28] sm:$0xff]
        %v4432 = vld [vmem:[#allocation65 + $0x30] sm:$0xff]
        %v4433 = vld [vmem:[#allocation65 + $0x38] sm:$0xff]
        %v4435 = vsel %vm2460, %v4423, 0
        %4437 = vmatpush.msra.mxu0 0.0
        %4438 = vmatpush.msra.mxu0 0.0
        %4439 = vmatpush.msra.mxu0 0.0
        %4440 = vmatpush.msra.mxu0 0.0
        %4441 = vmatpush.msra.mxu0 0.0
        %4442 = vmatpush.msra.mxu0 0.0
        %4443 = vmatpush.msra.mxu0 0.0
        %4444 = vmatpush.msra.mxu0 0.0
        %4445 = vmatpush.msra.mxu0 %v4433
        %4446 = vmatpush.msra.mxu0 %v4432
        %4447 = vmatpush.msra.mxu0 %v4431
        %4448 = vmatpush.msra.mxu0 %v4430
        %4449 = vmatpush.msra.mxu0 %v4429
        %4450 = vmatpush.msra.mxu0 %v4428
        %4451 = vmatpush.msra.mxu0 %v4427
        %4452 = vmatpush.msra.mxu0 %v4426
        %4453 = vmatmul.f32.gmra.mxu0 %v4435
        %v4454 = vpop.f32.mrf.mxu0
        %v4455 = vadd.f32 0.0, %v4454
        %4456 = vdwg.mxu0
        %v4458 = vperm.slane %v4425, 0
        %v4460 = vadd.f32 %v4458, %v4455
        %v4461 = vld [vmem:[%s107] sm:$0xf]
        %v4462 = vld [vmem:[%s105] sm:$0xff]
        %v4463 = vld [vmem:[%s105 + $0x8] sm:$0xff]
        %v4464 = vld [vmem:[%s105 + $0x10] sm:$0xff]
        %v4465 = vld [vmem:[%s105 + $0x18] sm:$0xff]
        %v4466 = vld [vmem:[%s105 + $0x20] sm:$0xff]
        %v4467 = vld [vmem:[%s105 + $0x28] sm:$0xff]
        %v4468 = vld [vmem:[%s105 + $0x30] sm:$0xff]
        %v4469 = vld [vmem:[%s105 + $0x38] sm:$0xff]
        %v4470 = vld [vmem:[%s105 + $0x40] sm:$0xff]
        %v4471 = vld [vmem:[%s105 + $0x48] sm:$0xff]
        %v4472 = vld [vmem:[%s105 + $0x50] sm:$0xff]
        %v4473 = vld [vmem:[%s105 + $0x58] sm:$0xff]
        %v4474 = vld [vmem:[%s105 + $0x60] sm:$0xff]
        %v4475 = vld [vmem:[%s105 + $0x68] sm:$0xff]
        %v4476 = vld [vmem:[%s105 + $0x70] sm:$0xff]
        %v4477 = vld [vmem:[%s105 + $0x78] sm:$0xff]
        %4478 = vmatpush.msra.mxu0 %v4477
        %4479 = vmatpush.msra.mxu0 %v4476
        %4480 = vmatpush.msra.mxu0 %v4475
        %4481 = vmatpush.msra.mxu0 %v4474
        %4482 = vmatpush.msra.mxu0 %v4473
        %4483 = vmatpush.msra.mxu0 %v4472
        %4484 = vmatpush.msra.mxu0 %v4471
        %4485 = vmatpush.msra.mxu0 %v4470
        %4486 = vmatpush.msra.mxu0 %v4469
        %4487 = vmatpush.msra.mxu0 %v4468
        %4488 = vmatpush.msra.mxu0 %v4467
        %4489 = vmatpush.msra.mxu0 %v4466
        %4490 = vmatpush.msra.mxu0 %v4465
        %4491 = vmatpush.msra.mxu0 %v4464
        %4492 = vmatpush.msra.mxu0 %v4463
        %4493 = vmatpush.msra.mxu0 %v4462
        %4494 = vmatmul.f32.gmra.mxu0 %v4151
        %v4495 = vpop.f32.mrf.mxu0
        %v4496 = vadd.f32 0.0, %v4495
        %4497 = vdwg.mxu0
        %v4499 = vsel %vm3948, %v4461, 0
        %4501 = vmatpush.msra.mxu0 0.0
        %4502 = vmatpush.msra.mxu0 0.0
        %4503 = vmatpush.msra.mxu0 0.0
        %4504 = vmatpush.msra.mxu0 0.0
        %4505 = vmatpush.msra.mxu0 0.0
        %4506 = vmatpush.msra.mxu0 0.0
        %4507 = vmatpush.msra.mxu0 0.0
        %4508 = vmatpush.msra.mxu0 0.0
        %4509 = vmatpush.msra.mxu0 0.0
        %4510 = vmatpush.msra.mxu0 0.0
        %4511 = vmatpush.msra.mxu0 0.0
        %4512 = vmatpush.msra.mxu0 0.0
        %4513 = vmatpush.msra.mxu0 0.0
        %4514 = vmatpush.msra.mxu0 0.0
        %4515 = vmatpush.msra.mxu0 0.0
        %4516 = vmatpush.msra.mxu0 %v4496
        %4517 = vmatmul.f32.gmra.mxu0 %v4499
        %v4518 = vpop.f32.mrf.mxu0
        %v4519 = vadd.f32 0.0, %v4518
        %4520 = vdwg.mxu0
        %v4521 = vadd.f32 %v4460, %v4519
        %v4522 = vld [vmem:[#allocation68] sm:$0x1]
        %v4523 = vld [vmem:[%s113] sm:$0xff]
        %v4524 = vld [vmem:[%s113 + $0x8] sm:$0xff]
        %v4525 = vld [vmem:[%s113 + $0x10] sm:$0xff]
        %v4526 = vld [vmem:[%s113 + $0x18] sm:$0xff]
        %v4527 = vld [vmem:[%s113 + $0x20] sm:$0xff]
        %v4528 = vld [vmem:[%s113 + $0x28] sm:$0xff]
        %v4529 = vld [vmem:[%s113 + $0x30] sm:$0xff]
        %v4530 = vld [vmem:[%s113 + $0x38] sm:$0xff]
        %v4532 = vsel %vm2460, %v4521, 0
        %4534 = vmatpush.msra.mxu0 0.0
        %4535 = vmatpush.msra.mxu0 0.0
        %4536 = vmatpush.msra.mxu0 0.0
        %4537 = vmatpush.msra.mxu0 0.0
        %4538 = vmatpush.msra.mxu0 0.0
        %4539 = vmatpush.msra.mxu0 0.0
        %4540 = vmatpush.msra.mxu0 0.0
        %4541 = vmatpush.msra.mxu0 0.0
        %4542 = vmatpush.msra.mxu0 %v4530
        %4543 = vmatpush.msra.mxu0 %v4529
        %4544 = vmatpush.msra.mxu0 %v4528
        %4545 = vmatpush.msra.mxu0 %v4527
        %4546 = vmatpush.msra.mxu0 %v4526
        %4547 = vmatpush.msra.mxu0 %v4525
        %4548 = vmatpush.msra.mxu0 %v4524
        %4549 = vmatpush.msra.mxu0 %v4523
        %4550 = vmatmul.f32.gmra.mxu0 %v4532
        %v4551 = vpop.f32.mrf.mxu0
        %v4552 = vadd.f32 0.0, %v4551
        %4553 = vdwg.mxu0
        %v4555 = vperm.slane %v4522, 0
        %v4557 = vadd.f32 %v4555, %v4552
        %vm4558 = vcmask 257024
        %4559 = vst.msk [vmem:[%s2403] sm:$0xf] %vm4558, %v4557
        %s4560 = sand.u32 %s1368, 1
        %s4561 = scalar_lea.sflag [#allocation4], %s4560
        %s4562 = sand.u32 %s1368, 1
        %s4563 = smul.addr %s4562, 8
        %s4564 = scalar_lea.vmem [#allocation70], %s4563
        %s4565 = sand.u32 %s1394, 1
        %s4566 = scalar_lea.sflag [#allocation72], %s4565
        %s4567 = sand.u32 %s1394, 1
        %s4568 = smul.addr %s4567, 4
        %s4569 = scalar_lea.vmem [#allocation71], %s4568
        // Predicated region
        $region425: #{tpu_custom_call.1} parent=247 // pred_check
          %p4570 = pneg %p1378
        $region426: #{tpu_custom_call.1} parent=247 // pred_check_branch
          %4572 = sbr.rel (%p4570) target = $region428
        $region427: #{tpu_custom_call.1} parent=247 // pred_region
          %4574 = vsyncadd %s4561, 0
          %s4575 = smul.addr %s158, 8
          %s4576 = scalar_lea.hbm %s115, %s4575
          %s4578 = sshll.u32 %s4564, 4
          %s4579 = int_to_ptr.vmem [resolvable:$true] %s4578
          %s4580 = sshll.u32 %s4576, 4
          %s4581 = int_to_ptr.hbm [resolvable:$true] %s4580
          %4583 = dma.vmem_to_hbm [thread:$0]  %s4579, 128, %s4581, %s4561
        $region428: #{tpu_custom_call.1} parent=247 // pred_fallthru
          _
        // Predicated region
        $region429: #{tpu_custom_call.1} parent=247 // pred_check
          %p4584 = pneg %p1404
        $region430: #{tpu_custom_call.1} parent=247 // pred_check_branch
          %4586 = sbr.rel (%p4584) target = $region432
        $region431: #{tpu_custom_call.1} parent=247 // pred_region
          %4588 = vsyncadd %s4566, 0
          %s4589 = smul.addr %s158, 4
          %s4590 = scalar_lea.hbm %s117, %s4589
          %s4592 = sshll.u32 %s4569, 4
          %s4593 = int_to_ptr.vmem [resolvable:$true] %s4592
          %s4594 = sshll.u32 %s4590, 4
          %s4595 = int_to_ptr.hbm [resolvable:$true] %s4594
          %4597 = dma.vmem_to_hbm [thread:$0]  %s4593, 64, %s4595, %s4566
        $region432: #{tpu_custom_call.1} parent=247 // pred_fallthru
          _
      $region248: #{tpu_custom_call.1} parent=5 // pred_fallthru
        _
      %p4598 = scmp.le.s32.totalorder 2, %s153
      // Predicated region
      $region433: #{tpu_custom_call.1} parent=5 // pred_check
        %p4599 = pneg %p4598
      $region434: #{tpu_custom_call.1} parent=5 // pred_check_branch
        %4601 = sbr.rel (%p4599) target = $region436
      $region435: #{tpu_custom_call.1} parent=5 // pred_region
        %s4602 = ssub.s32 %s153, 2
        // Predicated region
        $region437: #{tpu_custom_call.1} parent=435 // pred_check
          %p4603 = pneg %p1384
        $region438: #{tpu_custom_call.1} parent=435 // pred_check_branch
          %4605 = sbr.rel (%p4603) target = $region440
        $region439: #{tpu_custom_call.1} parent=435 // pred_region
          %s4606 = sand.u32 %s1369, 1
          %s4607 = scalar_lea.sflag [#allocation4], %s4606
          %s4608 = sand.u32 %s1369, 1
          %s4609 = smul.addr %s4608, 8
          %s4610 = scalar_lea.vmem [#allocation70], %s4609
          %4612 = dma.done %s4607, 128
        $region440: #{tpu_custom_call.1} parent=435 // pred_fallthru
          _
        // Predicated region
        $region441: #{tpu_custom_call.1} parent=435 // pred_check
          %p4613 = pneg %p1410
        $region442: #{tpu_custom_call.1} parent=435 // pred_check_branch
          %4615 = sbr.rel (%p4613) target = $region444
        $region443: #{tpu_custom_call.1} parent=435 // pred_region
          %s4616 = sand.u32 %s1395, 1
          %s4617 = scalar_lea.sflag [#allocation72], %s4616
          %s4618 = sand.u32 %s1395, 1
          %s4619 = smul.addr %s4618, 4
          %s4620 = scalar_lea.vmem [#allocation71], %s4619
          %4622 = dma.done %s4617, 64
        $region444: #{tpu_custom_call.1} parent=435 // pred_fallthru
          _
      $region436: #{tpu_custom_call.1} parent=5 // pred_fallthru
        _
    $region6: #{tpu_custom_call.1} parent=1 // loop_footer
      %s157 = sadd.s32 1, %s153
    $region7: #{tpu_custom_call.1} parent=1 // loop_footer_branch
      %152 = sbr.rel target = $region3
    $region8: #{tpu_custom_call.1} parent=1 // loop_exit
      _
    %4623 = vsyncpa [#allocation3], 1
    %s4624 = scalar_lea.sflag [#allocation3], 1
    %4625 = vsyncpa %s4624, 1
    %4626 = vsyncpa [#allocation6], 1
    %4627 = vsyncpa [#allocation9], 1
    %4628 = vsyncpa [#allocation12], 1
    %4629 = vsyncpa [#allocation15], 1
    %4630 = vsyncpa [#allocation18], 1
    %4631 = vsyncpa [#allocation21], 1
    %4632 = vsyncpa [#allocation24], 1
    %4633 = vsyncpa [#allocation27], 1
    %4634 = vsyncpa [#allocation30], 1
    %4635 = vsyncpa [#allocation33], 1
    %4636 = vsyncpa [#allocation36], 1
    %4637 = vsyncpa [#allocation39], 1
    %4638 = vsyncpa [#allocation42], 1
    %4639 = vsyncpa [#allocation45], 1
    %4640 = vsyncpa [#allocation48], 1
    %4641 = vsyncpa [#allocation51], 1
    %4642 = vsyncpa [#allocation54], 1
    %4643 = vsyncpa [#allocation57], 1
    %4644 = vsyncpa [#allocation60], 1
    %4645 = vsyncpa [#allocation63], 1
    %4646 = vsyncpa [#allocation66], 1
    %4647 = vsyncpa [#allocation69], 1
    %4648 = vsyncpa [#allocation4], 1
    %s4649 = scalar_lea.sflag [#allocation4], 1
    %4650 = vsyncpa %s4649, 1
    %4651 = vsyncpa [#allocation72], 1
    %s4652 = scalar_lea.sflag [#allocation72], 1
    %4653 = vsyncpa %s4652, 1

</llo_original>
